<compile_context>
chip_gen: v5e
topology: v5e:2x2
jax: 0.10.0
libtpu: 0.0.40
codegen_flags: <defaults>
</compile_context>

<pallas_src>
import functools

import jax
import jax.numpy as jnp
from jax import lax
from jax.experimental import pallas as pl
from jax.experimental.pallas import tpu as pltpu

EPS = 1e-5
LANE = 128
TARGET_TILE_P = 512                    # rows-per-matmul target (all generations)
VMEM_CAP_BYTES = 40 * 1024 * 1024      # safe within v7x's 64 MiB; fine on v5e/v6e


def _round_up(x, m):
    return (x + m - 1) // m * m


def _pick_tile_rows(h_out, w_out):
    """How many output rows one grid step computes (tile_p = tile_rows * w_out)."""
    cap = max(1, min(h_out, TARGET_TILE_P // max(w_out, 1)))
    div = 1
    for tr in range(cap, 0, -1):
        if h_out % tr == 0:
            div = tr
            break
    # Prefer a divisor of h_out (no row masking needed); else use cap + masking.
    return div if 2 * div >= cap else cap


# ------------------------------ Pallas kernels -------------------------------
def _make_conv_stats_kernel(*, tile_rows, w_out, stride, k_dim, c_out_pad, h_out):
    """conv3x3 tile (in-kernel im2col, single MXU matmul) + per-tile BN partials."""
    needs_mask = (h_out % tile_rows) != 0

    def kernel(x_ref, w_ref, conv_ref, sum_ref, ssq_ref):
        # x_ref:    (rows_alloc, cols_alloc, cin_pad)  bf16, resident per batch item
        # w_ref:    (9*cin_pad, c_out_pad)             bf16, resident across the grid
        # conv_ref: (tile_rows, w_out, c_out_pad)      bf16
        # sum_ref / ssq_ref: (1, 1, c_out_pad)         f32 per-tile partial stats
        ri = pl.program_id(1)
        row0 = ri * (tile_rows * stride)

        taps = []
        for kh in range(3):
            for kw in range(3):
                if stride == 1:
                    t = x_ref[pl.ds(row0 + kh, tile_rows), pl.ds(kw, w_out), :]
                else:
                    t = x_ref[pl.ds(row0 + kh, tile_rows, stride),
                              pl.ds(kw, w_out, stride), :]
                taps.append(t)
        patches = jnp.concatenate(taps, axis=-1)              # (tile_rows, w_out, k)
        patches = patches.reshape(tile_rows * w_out, k_dim)   # (tile_p, k)

        acc = jnp.dot(patches, w_ref[...],
                      preferred_element_type=jnp.float32)     # (tile_p, c_out_pad)

        if needs_mask:  # zero rows past h_out so they don't perturb the statistics
            rid = lax.broadcasted_iota(jnp.int32, (tile_rows, w_out), 0)
            rid = rid.reshape(tile_rows * w_out, 1)
            acc = jnp.where(rid < (h_out - ri * tile_rows), acc, 0.0)

        conv_ref[...] = acc.astype(conv_ref.dtype).reshape(
            tile_rows, w_out, c_out_pad)
        sum_ref[...] = jnp.sum(acc, axis=0).reshape(1, 1, c_out_pad)
        ssq_ref[...] = jnp.sum(acc * acc, axis=0).reshape(1, 1, c_out_pad)

    return kernel


def _make_bn_relu_kernel(*, pad_spatial, h_valid, w_valid):
    """y = conv * scale + shift, ReLU; optionally writes a zero-halo'd slab."""
    def kernel(conv_ref, scale_ref, shift_ref, out_ref):
        y = conv_ref[...].astype(jnp.float32) * scale_ref[...] + shift_ref[...]
        y = jnp.maximum(y, 0.0).astype(out_ref.dtype)
        if pad_spatial:
            out_ref[...] = jnp.zeros_like(out_ref)
            out_ref[pl.ds(1, h_valid), pl.ds(1, w_valid), :] = y
        else:
            out_ref[...] = y
    return kernel


# ------------------------------ pallas_call glue ------------------------------
def _conv_stats_pass(x_alloc, w_slab, *, stride, h_out, w_out, tile_rows,
                     c_out_pad, interm_dtype):
    n, rows_alloc, cols_alloc, cin_pad = x_alloc.shape
    k_dim = 9 * cin_pad
    n_rt = pl.cdiv(h_out, tile_rows)
    h_out_pad = n_rt * tile_rows
    grid = (n, n_rt)

    kernel = _make_conv_stats_kernel(
        tile_rows=tile_rows, w_out=w_out, stride=stride, k_dim=k_dim,
        c_out_pad=c_out_pad, h_out=h_out)

    bpe = jnp.dtype(interm_dtype).itemsize
    img_b = rows_alloc * cols_alloc * cin_pad * bpe
    w_b = k_dim * c_out_pad * bpe
    conv_b = tile_rows * w_out * c_out_pad * bpe
    patch_b = tile_rows * w_out * k_dim * bpe
    acc_b = tile_rows * w_out * c_out_pad * 4
    need = 2 * img_b + 2 * w_b + 2 * conv_b + 3 * patch_b + 2 * acc_b
    vmem_limit = int(min(max(2 * need, 16 * 1024 * 1024), VMEM_CAP_BYTES))

    conv_out, psum, pssq = pl.pallas_call(
        kernel,
        grid=grid,
        in_specs=[
            # Whole padded image, resident across the row-tile axis (ri ignored).
            pl.BlockSpec((None, rows_alloc, cols_alloc, cin_pad),
                         lambda ni, ri: (ni, 0, 0, 0)),
            # Weight slab, resident across the whole grid.
            pl.BlockSpec((k_dim, c_out_pad), lambda ni, ri: (0, 0)),
        ],
        out_specs=(
            pl.BlockSpec((None, tile_rows, w_out, c_out_pad),
                         lambda ni, ri: (ni, ri, 0, 0)),
            pl.BlockSpec((1, 1, c_out_pad),
                         lambda ni, ri, R=n_rt: (ni * R + ri, 0, 0)),
            pl.BlockSpec((1, 1, c_out_pad),
                         lambda ni, ri, R=n_rt: (ni * R + ri, 0, 0)),
        ),
        out_shape=(
            jax.ShapeDtypeStruct((n, h_out_pad, w_out, c_out_pad), interm_dtype),
            jax.ShapeDtypeStruct((n * n_rt, 1, c_out_pad), jnp.float32),
            jax.ShapeDtypeStruct((n * n_rt, 1, c_out_pad), jnp.float32),
        ),
        compiler_params=pltpu.CompilerParams(
            dimension_semantics=("parallel", "parallel"),
            vmem_limit_bytes=vmem_limit),
        cost_estimate=pl.CostEstimate(
            flops=2 * n * h_out_pad * w_out * k_dim * c_out_pad,
            transcendentals=0,
            bytes_accessed=(n * img_b + w_b
                            + n * n_rt * (conv_b + 2 * c_out_pad * 4))),
    )(x_alloc, w_slab)
    return conv_out, psum, pssq


def _bn_scale_shift(psum, pssq, gamma, beta, *, count, c_out, c_out_pad):
    """Whole-batch BN stats (training-mode forward) -> per-channel scale/shift."""
    ch_sum = jnp.sum(psum, axis=(0, 1))            # (c_out_pad,)
    ch_ssq = jnp.sum(pssq, axis=(0, 1))
    inv_n = 1.0 / float(count)
    mean = ch_sum * inv_n
    # TODO(synk): E[x^2]-E[x]^2 can cancel for |mean| >> std at very large counts;
    #             switch to per-tile centered partials if BN-stat drift is observed.
    var = jnp.maximum(ch_ssq * inv_n - mean * mean, 0.0)
    inv_std = lax.rsqrt(var + EPS)
    gamma_p = jnp.pad(gamma.astype(jnp.float32), (0, c_out_pad - c_out))
    beta_p = jnp.pad(beta.astype(jnp.float32), (0, c_out_pad - c_out))
    scale = gamma_p * inv_std
    shift = beta_p - mean * scale
    return scale.reshape(1, 1, c_out_pad), shift.reshape(1, 1, c_out_pad)


def _bn_relu_pass(conv_out, scale, shift, *, h_valid, w_valid, c_pad, out_dtype,
                  pad_spatial=False, out_rows=None, out_cols=None):
    n = conv_out.shape[0]
    out_hw = (out_rows, out_cols) if pad_spatial else (h_valid, w_valid)
    out_shape = (n,) + out_hw + (c_pad,)

    kernel = _make_bn_relu_kernel(pad_spatial=pad_spatial,
                                  h_valid=h_valid, w_valid=w_valid)

    in_b = h_valid * w_valid * c_pad * conv_out.dtype.itemsize
    out_b = out_hw[0] * out_hw[1] * c_pad * jnp.dtype(out_dtype).itemsize
    vmem_limit = int(min(max(4 * (in_b + out_b), 16 * 1024 * 1024),
                         VMEM_CAP_BYTES))

    return pl.pallas_call(
        kernel,
        grid=(n,),
        in_specs=[
            pl.BlockSpec((None, h_valid, w_valid, c_pad), lambda ni: (ni, 0, 0, 0)),
            pl.BlockSpec((1, 1, c_pad), lambda ni: (0, 0, 0)),
            pl.BlockSpec((1, 1, c_pad), lambda ni: (0, 0, 0)),
        ],
        out_specs=pl.BlockSpec((None,) + out_hw + (c_pad,),
                               lambda ni: (ni, 0, 0, 0)),
        out_shape=jax.ShapeDtypeStruct(out_shape, out_dtype),
        compiler_params=pltpu.CompilerParams(
            dimension_semantics=("parallel",),
            vmem_limit_bytes=vmem_limit),
    )(conv_out, scale, shift)


def _weight_slab(w_oihw, cin_pad, c_out_pad, dtype):
    """(Cout, Cin, 3, 3) -> tap-major (9*Cin_pad, Cout_pad) bf16 slab."""
    c_out, c_in = int(w_oihw.shape[0]), int(w_oihw.shape[1])
    w = jnp.transpose(w_oihw, (2, 3, 1, 0))                     # (3, 3, cin, cout)
    w = jnp.pad(w, ((0, 0), (0, 0), (0, cin_pad - c_in), (0, c_out_pad - c_out)))
    return w.reshape(9 * cin_pad, c_out_pad).astype(dtype)


# ------------------------------ BasicBlock forward ----------------------------
def basic_block_forward(x_nchw, params, *, stride=1, compute_dtype=jnp.bfloat16):
    """conv3x3 -> BN -> ReLU -> conv3x3 -> BN -> ReLU (batch-stat BN, no shortcut,
    exactly as in the given PyTorch module).  Layout: NCHW in / NCHW out."""
    x = jnp.transpose(x_nchw, (0, 2, 3, 1))                     # NCHW -> NHWC
    n, h, w, c_in = x.shape
    c_out1 = int(params["conv1_w"].shape[0])
    c_out2 = int(params["conv2_w"].shape[0])
    cin_pad = _round_up(c_in, LANE)
    c1_pad = _round_up(c_out1, LANE)
    c2_pad = _round_up(c_out2, LANE)

    # ---------------- stage 1: conv1 (stride) + bn1 + relu ----------------
    h1 = (h + 2 - 3) // stride + 1
    w1 = (w + 2 - 3) // stride + 1
    tr1 = _pick_tile_rows(h1, w1)
    h1_pad = pl.cdiv(h1, tr1) * tr1
    rows_alloc1 = (h1_pad - 1) * stride + 3
    cols_alloc1 = (w1 - 1) * stride + 3

    # zero-pad channels to a lane multiple and the spatial dims to the halo'd slab
    x_alloc = jnp.pad(x.astype(compute_dtype),
                      ((0, 0), (1, rows_alloc1 - 1 - h), (1, cols_alloc1 - 1 - w),
                       (0, cin_pad - c_in)))
    w1_slab = _weight_slab(params["conv1_w"], cin_pad, c1_pad, compute_dtype)

    conv1, psum1, pssq1 = _conv_stats_pass(
        x_alloc, w1_slab, stride=stride, h_out=h1, w_out=w1, tile_rows=tr1,
        c_out_pad=c1_pad, interm_dtype=compute_dtype)
    scale1, shift1 = _bn_scale_shift(
        psum1, pssq1, params["bn1_gamma"], params["bn1_beta"],
        count=n * h1 * w1, c_out=c_out1, c_out_pad=c1_pad)

    # ---------------- stage 2 geometry (stride 1) ----------------
    h2, w2 = h1, w1
    tr2 = _pick_tile_rows(h2, w2)
    h2_pad = pl.cdiv(h2, tr2) * tr2
    rows_alloc2 = h2_pad + 2
    cols_alloc2 = w2 + 2

    # bn1 + relu fused with building stage-2's zero-halo'd, channel-padded input slab
    act1_alloc = _bn_relu_pass(
        conv1, scale1, shift1, h_valid=h1, w_valid=w1, c_pad=c1_pad,
        out_dtype=compute_dtype, pad_spatial=True,
        out_rows=rows_alloc2, out_cols=cols_alloc2)

    w2_slab = _weight_slab(params["conv2_w"], c1_pad, c2_pad, compute_dtype)
    conv2, psum2, pssq2 = _conv_stats_pass(
        act1_alloc, w2_slab, stride=1, h_out=h2, w_out=w2, tile_rows=tr2,
        c_out_pad=c2_pad, interm_dtype=compute_dtype)
    scale2, shift2 = _bn_scale_shift(
        psum2, pssq2, params["bn2_gamma"], params["bn2_beta"],
        count=n * h2 * w2, c_out=c_out2, c_out_pad=c2_pad)

    out_pad = _bn_relu_pass(
        conv2, scale2, shift2, h_valid=h2, w_valid=w2, c_pad=c2_pad,
        out_dtype=x_nchw.dtype, pad_spatial=False)

    out = out_pad[:, :, :, :c_out2]                              # drop channel pad
    return jnp.transpose(out, (0, 3, 1, 2))                      # NHWC -> NCHW


def init_basic_block_params(key, in_planes, out_planes):
    k1, k2 = jax.random.split(key, 2)
    return {
        "conv1_w": 0.1 * jax.random.normal(
            k1, (out_planes, in_planes, 3, 3), dtype=jnp.float32),
        "bn1_gamma": jnp.ones((out_planes,), jnp.float32),
        "bn1_beta": jnp.zeros((out_planes,), jnp.float32),
        "conv2_w": 0.1 * jax.random.normal(
            k2, (out_planes, out_planes, 3, 3), dtype=jnp.float32),
        "bn2_gamma": jnp.ones((out_planes,), jnp.float32),
        "bn2_beta": jnp.zeros((out_planes,), jnp.float32),
    }


# ---------------- pure-JAX f32 reference (sanity check only) ----------------
def _ref_stage(x_nhwc, w_oihw, gamma, beta, stride):
    y = lax.conv_general_dilated(
        x_nhwc, jnp.transpose(w_oihw, (2, 3, 1, 0)),
        window_strides=(stride, stride), padding=((1, 1), (1, 1)),
        dimension_numbers=("NHWC", "HWIO", "NHWC"))
    mean = jnp.mean(y, axis=(0, 1, 2), keepdims=True)
    var = jnp.mean((y - mean) ** 2, axis=(0, 1, 2), keepdims=True)
    y = (y - mean) * lax.rsqrt(var + EPS) * gamma + beta
    return jnp.maximum(y, 0.0)


def _ref_forward(x_nchw, params, stride):
    x = jnp.transpose(x_nchw, (0, 2, 3, 1))
    x = _ref_stage(x, params["conv1_w"], params["bn1_gamma"],
                   params["bn1_beta"], stride)
    x = _ref_stage(x, params["conv2_w"], params["bn2_gamma"],
                   params["bn2_beta"], 1)
    return jnp.transpose(x, (0, 3, 1, 2))


if __name__ == "__main__":
    key = jax.random.PRNGKey(0)
    k_x, k_p = jax.random.split(key)

    in_planes, out_planes, stride = 4, 8, 1
    x = jax.random.normal(k_x, (2, in_planes, 16, 16), dtype=jnp.float32)  # NCHW
    params = init_basic_block_params(k_p, in_planes, out_planes)

    fwd = jax.jit(functools.partial(basic_block_forward, stride=stride))
    out = jax.block_until_ready(fwd(x, params))

    ref = jax.block_until_ready(_ref_forward(x, params, stride))
    assert out.shape == (2, out_planes, 16, 16)
    # bf16 MXU inputs + bf16 conv/activation intermediates vs an f32 reference:
    # allow a few e-2 of error in BN-normalized output space.
    err = jnp.abs(out.astype(jnp.float32) - ref)
    max_err = float(jnp.max(err))
    mean_err = float(jnp.mean(err))
    assert max_err < 1e-1 and mean_err < 1.5e-2, \
        f"max abs err {max_err}, mean abs err {mean_err}"

    print("KERNEL_OK")
</pallas_src>

<mosaic_0001>
module attributes {stable_mosaic.version = 11 : i64} {
  func.func @kernel(%arg0: i32, %arg1: i32, %arg2: memref<1x18x18x128xbf16, #tpu.memory_space<vmem>>, %arg3: memref<1152x128xbf16, #tpu.memory_space<vmem>>, %arg4: memref<1x16x16x128xbf16, #tpu.memory_space<vmem>>, %arg5: memref<1x1x128xf32, #tpu.memory_space<vmem>>, %arg6: memref<1x1x128xf32, #tpu.memory_space<vmem>>) attributes {dimension_semantics = [#tpu.dimension_semantics<parallel>, #tpu.dimension_semantics<parallel>], iteration_bounds = array<i64: 2, 1>, scalar_prefetch = 0 : i64, scratch_operands = 0 : i64, tpu.core_type = #tpu.core_type<tc>, window_params = [{transform_indices = @transform_0, window_bounds = array<i64: 1, 18, 18, 128>}, {pipeline_mode = #tpu.pipeline_mode<synchronous>, transform_indices = @transform_1, window_bounds = array<i64: 1152, 128>}, {transform_indices = @transform_2, window_bounds = array<i64: 1, 16, 16, 128>}, {transform_indices = @transform_3, window_bounds = array<i64: 1, 1, 128>}, {transform_indices = @transform_4, window_bounds = array<i64: 1, 1, 128>}]} {
    %c16_i32 = arith.constant 16 : i32
    %0 = arith.muli %arg1, %c16_i32 : i32
    %c0_i32 = arith.constant 0 : i32
    %1 = arith.addi %0, %c0_i32 : i32
    %c0 = arith.constant 0 : index
    %2 = arith.index_cast %1 : i32 to index
    %c0_0 = arith.constant 0 : index
    %c0_1 = arith.constant 0 : index
    %3 = vector.load %arg2[%c0, %2, %c0_0, %c0_1] : memref<1x18x18x128xbf16, #tpu.memory_space<vmem>>, vector<1x16x16x128xbf16>
    %4 = vector.shape_cast %3 : vector<1x16x16x128xbf16> to vector<16x16x128xbf16>
    %c0_i32_2 = arith.constant 0 : i32
    %5 = arith.addi %0, %c0_i32_2 : i32
    %c0_3 = arith.constant 0 : index
    %6 = arith.index_cast %5 : i32 to index
    %c1 = arith.constant 1 : index
    %c0_4 = arith.constant 0 : index
    %7 = vector.load %arg2[%c0_3, %6, %c1, %c0_4] : memref<1x18x18x128xbf16, #tpu.memory_space<vmem>>, vector<1x16x16x128xbf16>
    %8 = vector.shape_cast %7 : vector<1x16x16x128xbf16> to vector<16x16x128xbf16>
    %c0_i32_5 = arith.constant 0 : i32
    %9 = arith.addi %0, %c0_i32_5 : i32
    %c0_6 = arith.constant 0 : index
    %10 = arith.index_cast %9 : i32 to index
    %c2 = arith.constant 2 : index
    %c0_7 = arith.constant 0 : index
    %11 = vector.load %arg2[%c0_6, %10, %c2, %c0_7] : memref<1x18x18x128xbf16, #tpu.memory_space<vmem>>, vector<1x16x16x128xbf16>
    %12 = vector.shape_cast %11 : vector<1x16x16x128xbf16> to vector<16x16x128xbf16>
    %c1_i32 = arith.constant 1 : i32
    %13 = arith.addi %0, %c1_i32 : i32
    %c0_8 = arith.constant 0 : index
    %14 = arith.index_cast %13 : i32 to index
    %c0_9 = arith.constant 0 : index
    %c0_10 = arith.constant 0 : index
    %15 = vector.load %arg2[%c0_8, %14, %c0_9, %c0_10] : memref<1x18x18x128xbf16, #tpu.memory_space<vmem>>, vector<1x16x16x128xbf16>
    %16 = vector.shape_cast %15 : vector<1x16x16x128xbf16> to vector<16x16x128xbf16>
    %c1_i32_11 = arith.constant 1 : i32
    %17 = arith.addi %0, %c1_i32_11 : i32
    %c0_12 = arith.constant 0 : index
    %18 = arith.index_cast %17 : i32 to index
    %c1_13 = arith.constant 1 : index
    %c0_14 = arith.constant 0 : index
    %19 = vector.load %arg2[%c0_12, %18, %c1_13, %c0_14] : memref<1x18x18x128xbf16, #tpu.memory_space<vmem>>, vector<1x16x16x128xbf16>
    %20 = vector.shape_cast %19 : vector<1x16x16x128xbf16> to vector<16x16x128xbf16>
    %c1_i32_15 = arith.constant 1 : i32
    %21 = arith.addi %0, %c1_i32_15 : i32
    %c0_16 = arith.constant 0 : index
    %22 = arith.index_cast %21 : i32 to index
    %c2_17 = arith.constant 2 : index
    %c0_18 = arith.constant 0 : index
    %23 = vector.load %arg2[%c0_16, %22, %c2_17, %c0_18] : memref<1x18x18x128xbf16, #tpu.memory_space<vmem>>, vector<1x16x16x128xbf16>
    %24 = vector.shape_cast %23 : vector<1x16x16x128xbf16> to vector<16x16x128xbf16>
    %c2_i32 = arith.constant 2 : i32
    %25 = arith.addi %0, %c2_i32 : i32
    %c0_19 = arith.constant 0 : index
    %26 = arith.index_cast %25 : i32 to index
    %c0_20 = arith.constant 0 : index
    %c0_21 = arith.constant 0 : index
    %27 = vector.load %arg2[%c0_19, %26, %c0_20, %c0_21] : memref<1x18x18x128xbf16, #tpu.memory_space<vmem>>, vector<1x16x16x128xbf16>
    %28 = vector.shape_cast %27 : vector<1x16x16x128xbf16> to vector<16x16x128xbf16>
    %c2_i32_22 = arith.constant 2 : i32
    %29 = arith.addi %0, %c2_i32_22 : i32
    %c0_23 = arith.constant 0 : index
    %30 = arith.index_cast %29 : i32 to index
    %c1_24 = arith.constant 1 : index
    %c0_25 = arith.constant 0 : index
    %31 = vector.load %arg2[%c0_23, %30, %c1_24, %c0_25] : memref<1x18x18x128xbf16, #tpu.memory_space<vmem>>, vector<1x16x16x128xbf16>
    %32 = vector.shape_cast %31 : vector<1x16x16x128xbf16> to vector<16x16x128xbf16>
    %c2_i32_26 = arith.constant 2 : i32
    %33 = arith.addi %0, %c2_i32_26 : i32
    %c0_27 = arith.constant 0 : index
    %34 = arith.index_cast %33 : i32 to index
    %c2_28 = arith.constant 2 : index
    %c0_29 = arith.constant 0 : index
    %35 = vector.load %arg2[%c0_27, %34, %c2_28, %c0_29] : memref<1x18x18x128xbf16, #tpu.memory_space<vmem>>, vector<1x16x16x128xbf16>
    %36 = vector.shape_cast %35 : vector<1x16x16x128xbf16> to vector<16x16x128xbf16>
    %37 = tpu.concatenate %4, %8, %12, %16, %20, %24, %28, %32, %36 in 2 : vector<16x16x128xbf16>, vector<16x16x128xbf16>, vector<16x16x128xbf16>, vector<16x16x128xbf16>, vector<16x16x128xbf16>, vector<16x16x128xbf16>, vector<16x16x128xbf16>, vector<16x16x128xbf16>, vector<16x16x128xbf16> -> vector<16x16x1152xbf16>
    %38 = vector.shape_cast %37 : vector<16x16x1152xbf16> to vector<256x1152xbf16>
    %c0_30 = arith.constant 0 : index
    %c0_31 = arith.constant 0 : index
    %39 = vector.load %arg3[%c0_30, %c0_31] : memref<1152x128xbf16, #tpu.memory_space<vmem>>, vector<1152x128xbf16>
    %cst = arith.constant dense<0.000000e+00> : vector<256x128xf32>
    %40 = tpu.matmul %38, %39, %cst {dimension_numbers = #tpu.dot_dimension_numbers<[1], [0], [0], [1], [0, 0, 1, 1], [], []>} : vector<256x1152xbf16>, vector<1152x128xbf16>, vector<256x128xf32> -> vector<256x128xf32>
    %41 = arith.truncf %40 : vector<256x128xf32> to vector<256x128xbf16>
    %42 = vector.shape_cast %41 : vector<256x128xbf16> to vector<16x16x128xbf16>
    %c0_32 = arith.constant 0 : index
    %c0_33 = arith.constant 0 : index
    %c0_34 = arith.constant 0 : index
    %c0_35 = arith.constant 0 : index
    %43 = vector.load %arg4[%c0_32, %c0_33, %c0_34, %c0_35] : memref<1x16x16x128xbf16, #tpu.memory_space<vmem>>, vector<1x16x16x128xbf16>
    %44 = vector.shape_cast %43 : vector<1x16x16x128xbf16> to vector<16x16x128xbf16>
    %45 = vector.shape_cast %42 : vector<16x16x128xbf16> to vector<1x16x16x128xbf16>
    tpu.vector_store %arg4[%c0_32, %c0_33, %c0_34, %c0_35], %45 {strides = array<i32>} : memref<1x16x16x128xbf16, #tpu.memory_space<vmem>>, vector<1x16x16x128xbf16>,
    %cst_36 = arith.constant dense<0.000000e+00> : vector<128xf32>
    %46 = vector.multi_reduction <add>, %40, %cst_36 [0] : vector<256x128xf32> to vector<128xf32>
    %47 = vector.shape_cast %46 : vector<128xf32> to vector<1x1x128xf32>
    %c0_37 = arith.constant 0 : index
    %c0_38 = arith.constant 0 : index
    %c0_39 = arith.constant 0 : index
    %48 = vector.load %arg5[%c0_37, %c0_38, %c0_39] : memref<1x1x128xf32, #tpu.memory_space<vmem>>, vector<1x1x128xf32>
    tpu.vector_store %arg5[%c0_37, %c0_38, %c0_39], %47 {strides = array<i32>} : memref<1x1x128xf32, #tpu.memory_space<vmem>>, vector<1x1x128xf32>,
    %49 = arith.mulf %40, %40 : vector<256x128xf32>
    %cst_40 = arith.constant dense<0.000000e+00> : vector<128xf32>
    %50 = vector.multi_reduction <add>, %49, %cst_40 [0] : vector<256x128xf32> to vector<128xf32>
    %51 = vector.shape_cast %50 : vector<128xf32> to vector<1x1x128xf32>
    %c0_41 = arith.constant 0 : index
    %c0_42 = arith.constant 0 : index
    %c0_43 = arith.constant 0 : index
    %52 = vector.load %arg6[%c0_41, %c0_42, %c0_43] : memref<1x1x128xf32, #tpu.memory_space<vmem>>, vector<1x1x128xf32>
    tpu.vector_store %arg6[%c0_41, %c0_42, %c0_43], %51 {strides = array<i32>} : memref<1x1x128xf32, #tpu.memory_space<vmem>>, vector<1x1x128xf32>,
    return
  }
  func.func @transform_0(%arg0: i32, %arg1: i32) -> (i32, i32, i32, i32) {
    %c0_i32 = arith.constant 0 : i32
    %c0_i32_0 = arith.constant 0 : i32
    %c0_i32_1 = arith.constant 0 : i32
    %c0_i32_2 = arith.constant 0 : i32
    return %arg0, %c0_i32, %c0_i32_0, %c0_i32_1 : i32, i32, i32, i32
  }
  func.func @transform_1(%arg0: i32, %arg1: i32) -> (i32, i32) {
    %c0_i32 = arith.constant 0 : i32
    %c0_i32_0 = arith.constant 0 : i32
    %c0_i32_1 = arith.constant 0 : i32
    return %c0_i32, %c0_i32_0 : i32, i32
  }
  func.func @transform_2(%arg0: i32, %arg1: i32) -> (i32, i32, i32, i32) {
    %c0_i32 = arith.constant 0 : i32
    %c0_i32_0 = arith.constant 0 : i32
    %c0_i32_1 = arith.constant 0 : i32
    return %arg0, %arg1, %c0_i32, %c0_i32_0 : i32, i32, i32, i32
  }
  func.func @transform_3(%arg0: i32, %arg1: i32) -> (i32, i32, i32) {
    %c1_i32 = arith.constant 1 : i32
    %0 = arith.muli %arg0, %c1_i32 : i32
    %1 = arith.addi %0, %arg1 : i32
    %c0_i32 = arith.constant 0 : i32
    %c0_i32_0 = arith.constant 0 : i32
    %c0_i32_1 = arith.constant 0 : i32
    return %1, %c0_i32, %c0_i32_0 : i32, i32, i32
  }
  func.func @transform_4(%arg0: i32, %arg1: i32) -> (i32, i32, i32) {
    %c1_i32 = arith.constant 1 : i32
    %0 = arith.muli %arg0, %c1_i32 : i32
    %1 = arith.addi %0, %arg1 : i32
    %c0_i32 = arith.constant 0 : i32
    %c0_i32_0 = arith.constant 0 : i32
    %c0_i32_1 = arith.constant 0 : i32
    return %1, %c0_i32, %c0_i32_0 : i32, i32, i32
  }
}

module attributes {stable_mosaic.version = 11 : i64} {
  func.func @kernel(%arg0: i32, %arg1: memref<1x16x16x128xbf16, #tpu.memory_space<vmem>>, %arg2: memref<1x1x128xf32, #tpu.memory_space<vmem>>, %arg3: memref<1x1x128xf32, #tpu.memory_space<vmem>>, %arg4: memref<1x18x18x128xbf16, #tpu.memory_space<vmem>>) attributes {dimension_semantics = [#tpu.dimension_semantics<parallel>], iteration_bounds = array<i64: 2>, scalar_prefetch = 0 : i64, scratch_operands = 0 : i64, tpu.core_type = #tpu.core_type<tc>, window_params = [{transform_indices = @transform_0, window_bounds = array<i64: 1, 16, 16, 128>}, {pipeline_mode = #tpu.pipeline_mode<synchronous>, transform_indices = @transform_1, window_bounds = array<i64: 1, 1, 128>}, {pipeline_mode = #tpu.pipeline_mode<synchronous>, transform_indices = @transform_2, window_bounds = array<i64: 1, 1, 128>}, {transform_indices = @transform_3, window_bounds = array<i64: 1, 18, 18, 128>}]} {
    %c0 = arith.constant 0 : index
    %c0_0 = arith.constant 0 : index
    %c0_1 = arith.constant 0 : index
    %c0_2 = arith.constant 0 : index
    %0 = vector.load %arg1[%c0, %c0_0, %c0_1, %c0_2] : memref<1x16x16x128xbf16, #tpu.memory_space<vmem>>, vector<1x16x16x128xbf16>
    %1 = vector.shape_cast %0 : vector<1x16x16x128xbf16> to vector<16x16x128xbf16>
    %2 = arith.extf %1 : vector<16x16x128xbf16> to vector<16x16x128xf32>
    %c0_3 = arith.constant 0 : index
    %c0_4 = arith.constant 0 : index
    %c0_5 = arith.constant 0 : index
    %3 = vector.load %arg2[%c0_3, %c0_4, %c0_5] : memref<1x1x128xf32, #tpu.memory_space<vmem>>, vector<1x1x128xf32>
    %4 = vector.broadcast %3 : vector<1x1x128xf32> to vector<16x16x128xf32>
    %5 = arith.mulf %2, %4 : vector<16x16x128xf32>
    %c0_6 = arith.constant 0 : index
    %c0_7 = arith.constant 0 : index
    %c0_8 = arith.constant 0 : index
    %6 = vector.load %arg3[%c0_6, %c0_7, %c0_8] : memref<1x1x128xf32, #tpu.memory_space<vmem>>, vector<1x1x128xf32>
    %7 = vector.broadcast %6 : vector<1x1x128xf32> to vector<16x16x128xf32>
    %8 = arith.addf %5, %7 : vector<16x16x128xf32>
    %cst = arith.constant 0.000000e+00 : f32
    %9 = vector.broadcast %cst : f32 to vector<16x16x128xf32>
    %10 = arith.maximumf %8, %9 : vector<16x16x128xf32>
    %11 = arith.truncf %10 : vector<16x16x128xf32> to vector<16x16x128xbf16>
    %cst_9 = arith.constant 0.000000e+00 : bf16
    %12 = vector.broadcast %cst_9 : bf16 to vector<18x18x128xbf16>
    %c0_10 = arith.constant 0 : index
    %c0_11 = arith.constant 0 : index
    %c0_12 = arith.constant 0 : index
    %c0_13 = arith.constant 0 : index
    %13 = vector.load %arg4[%c0_10, %c0_11, %c0_12, %c0_13] : memref<1x18x18x128xbf16, #tpu.memory_space<vmem>>, vector<1x18x18x128xbf16>
    %14 = vector.shape_cast %13 : vector<1x18x18x128xbf16> to vector<18x18x128xbf16>
    %15 = vector.shape_cast %12 : vector<18x18x128xbf16> to vector<1x18x18x128xbf16>
    tpu.vector_store %arg4[%c0_10, %c0_11, %c0_12, %c0_13], %15 {strides = array<i32>} : memref<1x18x18x128xbf16, #tpu.memory_space<vmem>>, vector<1x18x18x128xbf16>,
    %c0_14 = arith.constant 0 : index
    %c1 = arith.constant 1 : index
    %c1_15 = arith.constant 1 : index
    %c0_16 = arith.constant 0 : index
    %16 = vector.load %arg4[%c0_14, %c1, %c1_15, %c0_16] : memref<1x18x18x128xbf16, #tpu.memory_space<vmem>>, vector<1x16x16x128xbf16>
    %17 = vector.shape_cast %16 : vector<1x16x16x128xbf16> to vector<16x16x128xbf16>
    %18 = vector.shape_cast %11 : vector<16x16x128xbf16> to vector<1x16x16x128xbf16>
    tpu.vector_store %arg4[%c0_14, %c1, %c1_15, %c0_16], %18 {strides = array<i32>} : memref<1x18x18x128xbf16, #tpu.memory_space<vmem>>, vector<1x16x16x128xbf16>,
    return
  }
  func.func @transform_0(%arg0: i32) -> (i32, i32, i32, i32) {
    %c0_i32 = arith.constant 0 : i32
    %c0_i32_0 = arith.constant 0 : i32
    %c0_i32_1 = arith.constant 0 : i32
    %c0_i32_2 = arith.constant 0 : i32
    return %arg0, %c0_i32, %c0_i32_0, %c0_i32_1 : i32, i32, i32, i32
  }
  func.func @transform_1(%arg0: i32) -> (i32, i32, i32) {
    %c0_i32 = arith.constant 0 : i32
    %c0_i32_0 = arith.constant 0 : i32
    %c0_i32_1 = arith.constant 0 : i32
    %c0_i32_2 = arith.constant 0 : i32
    return %c0_i32, %c0_i32_0, %c0_i32_1 : i32, i32, i32
  }
  func.func @transform_2(%arg0: i32) -> (i32, i32, i32) {
    %c0_i32 = arith.constant 0 : i32
    %c0_i32_0 = arith.constant 0 : i32
    %c0_i32_1 = arith.constant 0 : i32
    %c0_i32_2 = arith.constant 0 : i32
    return %c0_i32, %c0_i32_0, %c0_i32_1 : i32, i32, i32
  }
  func.func @transform_3(%arg0: i32) -> (i32, i32, i32, i32) {
    %c0_i32 = arith.constant 0 : i32
    %c0_i32_0 = arith.constant 0 : i32
    %c0_i32_1 = arith.constant 0 : i32
    %c0_i32_2 = arith.constant 0 : i32
    return %arg0, %c0_i32, %c0_i32_0, %c0_i32_1 : i32, i32, i32, i32
  }
}

module attributes {stable_mosaic.version = 11 : i64} {
  func.func @kernel(%arg0: i32, %arg1: memref<1x16x16x128xbf16, #tpu.memory_space<vmem>>, %arg2: memref<1x1x128xf32, #tpu.memory_space<vmem>>, %arg3: memref<1x1x128xf32, #tpu.memory_space<vmem>>, %arg4: memref<1x16x16x128xf32, #tpu.memory_space<vmem>>) attributes {dimension_semantics = [#tpu.dimension_semantics<parallel>], iteration_bounds = array<i64: 2>, scalar_prefetch = 0 : i64, scratch_operands = 0 : i64, tpu.core_type = #tpu.core_type<tc>, window_params = [{transform_indices = @transform_0, window_bounds = array<i64: 1, 16, 16, 128>}, {pipeline_mode = #tpu.pipeline_mode<synchronous>, transform_indices = @transform_1, window_bounds = array<i64: 1, 1, 128>}, {pipeline_mode = #tpu.pipeline_mode<synchronous>, transform_indices = @transform_2, window_bounds = array<i64: 1, 1, 128>}, {transform_indices = @transform_3, window_bounds = array<i64: 1, 16, 16, 128>}]} {
    %c0 = arith.constant 0 : index
    %c0_0 = arith.constant 0 : index
    %c0_1 = arith.constant 0 : index
    %c0_2 = arith.constant 0 : index
    %0 = vector.load %arg1[%c0, %c0_0, %c0_1, %c0_2] : memref<1x16x16x128xbf16, #tpu.memory_space<vmem>>, vector<1x16x16x128xbf16>
    %1 = vector.shape_cast %0 : vector<1x16x16x128xbf16> to vector<16x16x128xbf16>
    %2 = arith.extf %1 : vector<16x16x128xbf16> to vector<16x16x128xf32>
    %c0_3 = arith.constant 0 : index
    %c0_4 = arith.constant 0 : index
    %c0_5 = arith.constant 0 : index
    %3 = vector.load %arg2[%c0_3, %c0_4, %c0_5] : memref<1x1x128xf32, #tpu.memory_space<vmem>>, vector<1x1x128xf32>
    %4 = vector.broadcast %3 : vector<1x1x128xf32> to vector<16x16x128xf32>
    %5 = arith.mulf %2, %4 : vector<16x16x128xf32>
    %c0_6 = arith.constant 0 : index
    %c0_7 = arith.constant 0 : index
    %c0_8 = arith.constant 0 : index
    %6 = vector.load %arg3[%c0_6, %c0_7, %c0_8] : memref<1x1x128xf32, #tpu.memory_space<vmem>>, vector<1x1x128xf32>
    %7 = vector.broadcast %6 : vector<1x1x128xf32> to vector<16x16x128xf32>
    %8 = arith.addf %5, %7 : vector<16x16x128xf32>
    %cst = arith.constant 0.000000e+00 : f32
    %9 = vector.broadcast %cst : f32 to vector<16x16x128xf32>
    %10 = arith.maximumf %8, %9 : vector<16x16x128xf32>
    %c0_9 = arith.constant 0 : index
    %c0_10 = arith.constant 0 : index
    %c0_11 = arith.constant 0 : index
    %c0_12 = arith.constant 0 : index
    %11 = vector.load %arg4[%c0_9, %c0_10, %c0_11, %c0_12] : memref<1x16x16x128xf32, #tpu.memory_space<vmem>>, vector<1x16x16x128xf32>
    %12 = vector.shape_cast %11 : vector<1x16x16x128xf32> to vector<16x16x128xf32>
    %13 = vector.shape_cast %10 : vector<16x16x128xf32> to vector<1x16x16x128xf32>
    tpu.vector_store %arg4[%c0_9, %c0_10, %c0_11, %c0_12], %13 {strides = array<i32>} : memref<1x16x16x128xf32, #tpu.memory_space<vmem>>, vector<1x16x16x128xf32>,
    return
  }
  func.func @transform_0(%arg0: i32) -> (i32, i32, i32, i32) {
    %c0_i32 = arith.constant 0 : i32
    %c0_i32_0 = arith.constant 0 : i32
    %c0_i32_1 = arith.constant 0 : i32
    %c0_i32_2 = arith.constant 0 : i32
    return %arg0, %c0_i32, %c0_i32_0, %c0_i32_1 : i32, i32, i32, i32
  }
  func.func @transform_1(%arg0: i32) -> (i32, i32, i32) {
    %c0_i32 = arith.constant 0 : i32
    %c0_i32_0 = arith.constant 0 : i32
    %c0_i32_1 = arith.constant 0 : i32
    %c0_i32_2 = arith.constant 0 : i32
    return %c0_i32, %c0_i32_0, %c0_i32_1 : i32, i32, i32
  }
  func.func @transform_2(%arg0: i32) -> (i32, i32, i32) {
    %c0_i32 = arith.constant 0 : i32
    %c0_i32_0 = arith.constant 0 : i32
    %c0_i32_1 = arith.constant 0 : i32
    %c0_i32_2 = arith.constant 0 : i32
    return %c0_i32, %c0_i32_0, %c0_i32_1 : i32, i32, i32
  }
  func.func @transform_3(%arg0: i32) -> (i32, i32, i32, i32) {
    %c0_i32 = arith.constant 0 : i32
    %c0_i32_0 = arith.constant 0 : i32
    %c0_i32_1 = arith.constant 0 : i32
    %c0_i32_2 = arith.constant 0 : i32
    return %arg0, %c0_i32, %c0_i32_0, %c0_i32_1 : i32, i32, i32, i32
  }
}

</mosaic_0001>

<llo_original>
// kernel: basic_block_forward.7
$region0: #{basic_block_forward.7}
  #allocation0 [shape = 'u32[]', space=smem, size = 0x4, offset = 0x4, fixed_abs, tag = 'smem constant byte address 0x4 - core index']
  #allocation1 [shape = 'u32[72,128]{1,0:T(1,128)}', space=vmem, size = 0x9000, scoped, tag = 'internal scratch']
  %s0 = inlined_call_operand.vmem [shape: bf16[2,16,16,128], index: 0, kind: input, shape index: {}]
  %s1 = inlined_call_operand.vmem [shape: f32[1,1,128], index: 1, kind: input, shape index: {}]
  %s2 = inlined_call_operand.vmem [shape: f32[1,1,128], index: 2, kind: input, shape index: {}]
  %s3 = inlined_call_operand.vmem [shape: f32[2,16,16,128], index: 3, kind: output, shape index: {}]
  %s4 = sld [smem:[#allocation0]]
  $region45: #{basic_block_forward.7} parent=0
    _
  %s6 = ssub.s32 1, %s4
  %s7 = scalar_select 0, %s6, %s4
  loop: start=0, step=1, limit=4
  $region2: #{basic_block_forward.7} parent=0 // loop_pre_header
    _
  $region3: #{basic_block_forward.7} parent=0 // loop_header
    %s9 = sphi 0, %s13
    %p10 = scmp.ge.s32.totalorder %s9, 4
    %s19 = sphi 0, %s21
    %s22 = sphi 0, %s19
    %s23 = sphi 0, %s22
    %s39 = sphi 0, %s23
    %s43 = sphi 0, %s43
    %s45 = sphi 0, %s43
    %s46 = sphi 0, %s45
    %s60 = sphi 0, %s46
    %s64 = sphi 0, %s64
    %s66 = sphi 0, %s64
    %s67 = sphi 0, %s66
    %s81 = sphi 0, %s67
    %s87 = sphi 0, %s89
    %s90 = sphi 0, %s87
    %s91 = sphi 0, %s90
    %s107 = sphi 0, %s91
  $region4: #{basic_block_forward.7} parent=0 // loop_header_branch
    %12 = sbr.rel (%p10) target = $region8
  $region5: #{basic_block_forward.7} parent=0 // loop_body
    %s14 = ssub.s32 %s9, 1
    %s15 = ssub.s32 %s9, 2
    %s16 = sadd.s32 %s9, 1
    %s17 = ssub.s32 %s9, %s16
    %p18 = scmp.eq.s32.totalorder %s17, 0
    %s20 = sadd.s32 %s19, 1
    %s21 = scalar_select %p18, %s19, %s20
    %p24 = pneg %p18
    %p25 = scmp.eq.s32.totalorder %s9, 1
    %p26 = por %p24, %p25
    %p27 = scmp.ne.s32.totalorder %s19, %s22
    %p28 = scmp.eq.s32.totalorder %s9, 0
    %p29 = por %p27, %p28
    %p30 = scmp.ne.s32.totalorder %s19, %s22
    %p31 = scmp.eq.s32.totalorder %s14, 1
    %p32 = por %p30, %p31
    %p33 = scmp.ne.s32.totalorder %s22, %s23
    %p34 = scmp.eq.s32.totalorder %s14, 0
    %p35 = por %p33, %p34
    %p36 = scmp.ne.s32.totalorder %s22, %s23
    %p37 = scmp.eq.s32.totalorder %s15, 1
    %p38 = por %p36, %p37
    %p40 = scmp.ne.s32.totalorder %s23, %s39
    %p41 = scmp.eq.s32.totalorder %s15, 0
    %p42 = por %p40, %p41
    %s44 = sadd.s32 %s43, 1
    %p47 = scmp.eq.s32.totalorder %s9, 1
    %p48 = scmp.ne.s32.totalorder %s43, %s45
    %p49 = scmp.eq.s32.totalorder %s9, 0
    %p50 = por %p48, %p49
    %p51 = scmp.ne.s32.totalorder %s43, %s45
    %p52 = scmp.eq.s32.totalorder %s14, 1
    %p53 = por %p51, %p52
    %p54 = scmp.ne.s32.totalorder %s45, %s46
    %p55 = scmp.eq.s32.totalorder %s14, 0
    %p56 = por %p54, %p55
    %p57 = scmp.ne.s32.totalorder %s45, %s46
    %p58 = scmp.eq.s32.totalorder %s15, 1
    %p59 = por %p57, %p58
    %p61 = scmp.ne.s32.totalorder %s46, %s60
    %p62 = scmp.eq.s32.totalorder %s15, 0
    %p63 = por %p61, %p62
    %s65 = sadd.s32 %s64, 1
    %p68 = scmp.eq.s32.totalorder %s9, 1
    %p69 = scmp.ne.s32.totalorder %s64, %s66
    %p70 = scmp.eq.s32.totalorder %s9, 0
    %p71 = por %p69, %p70
    %p72 = scmp.ne.s32.totalorder %s64, %s66
    %p73 = scmp.eq.s32.totalorder %s14, 1
    %p74 = por %p72, %p73
    %p75 = scmp.ne.s32.totalorder %s66, %s67
    %p76 = scmp.eq.s32.totalorder %s14, 0
    %p77 = por %p75, %p76
    %p78 = scmp.ne.s32.totalorder %s66, %s67
    %p79 = scmp.eq.s32.totalorder %s15, 1
    %p80 = por %p78, %p79
    %p82 = scmp.ne.s32.totalorder %s67, %s81
    %p83 = scmp.eq.s32.totalorder %s15, 0
    %p84 = por %p82, %p83
    %s85 = ssub.s32 %s9, %s16
    %p86 = scmp.eq.s32.totalorder %s85, 0
    %s88 = sadd.s32 %s87, 1
    %s89 = scalar_select %p86, %s87, %s88
    %p92 = pneg %p86
    %p93 = scmp.eq.s32.totalorder %s9, 1
    %p94 = por %p92, %p93
    %p95 = scmp.ne.s32.totalorder %s87, %s90
    %p96 = scmp.eq.s32.totalorder %s9, 0
    %p97 = por %p95, %p96
    %p98 = scmp.ne.s32.totalorder %s87, %s90
    %p99 = scmp.eq.s32.totalorder %s14, 1
    %p100 = por %p98, %p99
    %p101 = scmp.ne.s32.totalorder %s90, %s91
    %p102 = scmp.eq.s32.totalorder %s14, 0
    %p103 = por %p101, %p102
    %p104 = scmp.ne.s32.totalorder %s90, %s91
    %p105 = scmp.eq.s32.totalorder %s15, 1
    %p106 = por %p104, %p105
    %p108 = scmp.ne.s32.totalorder %s91, %s107
    %p109 = scmp.eq.s32.totalorder %s15, 0
    %p110 = por %p108, %p109
    %p111 = scmp.le.s32.totalorder 1, %s9
    %p112 = scmp.lt.s32.totalorder %s9, 3
    %p113 = pnand %p111, %p112
    %p114 = pneg %p113
    // Predicated region
    $region9: #{basic_block_forward.7} parent=5 // pred_check
      _
    $region10: #{basic_block_forward.7} parent=5 // pred_check_branch
      %116 = sbr.rel (%p113) target = $region12
    $region11: #{basic_block_forward.7} parent=5 // pred_region
      %s117 = ssub.s32 %s9, 1
      // Predicated region
      $region13: #{basic_block_forward.7} parent=11 // pred_check
        %p118 = pneg %p56
      $region14: #{basic_block_forward.7} parent=11 // pred_check_branch
        %120 = sbr.rel (%p118) target = $region16
      $region15: #{basic_block_forward.7} parent=11 // pred_region
        _
      $region16: #{basic_block_forward.7} parent=11 // pred_fallthru
        _
      // Predicated region
      $region17: #{basic_block_forward.7} parent=11 // pred_check
        %p121 = pneg %p77
      $region18: #{basic_block_forward.7} parent=11 // pred_check_branch
        %123 = sbr.rel (%p121) target = $region20
      $region19: #{basic_block_forward.7} parent=11 // pred_region
        _
      $region20: #{basic_block_forward.7} parent=11 // pred_fallthru
        _
    $region12: #{basic_block_forward.7} parent=5 // pred_fallthru
      _
    %p124 = scmp.lt.s32.totalorder %s9, 2
    // Predicated region
    $region21: #{basic_block_forward.7} parent=5 // pred_check
      %p125 = pneg %p124
    $region22: #{basic_block_forward.7} parent=5 // pred_check_branch
      %127 = sbr.rel (%p125) target = $region24
    $region23: #{basic_block_forward.7} parent=5 // pred_region
      // Predicated region
      $region25: #{basic_block_forward.7} parent=23 // pred_check
        %p128 = pneg %p29
      $region26: #{basic_block_forward.7} parent=23 // pred_check_branch
        %130 = sbr.rel (%p128) target = $region28
      $region27: #{basic_block_forward.7} parent=23 // pred_region
        %p131 = scmp.lt.s32.totalorder %s9, 1
        %s132 = scalar_select %p131, %s9, 1
        %s133 = smul.addr %s132, 32
        %s134 = smul.addr %s133, 4
        %s135 = scalar_lea.vmem %s0, %s134
      $region28: #{basic_block_forward.7} parent=23 // pred_fallthru
        _
    $region24: #{basic_block_forward.7} parent=5 // pred_fallthru
      _
    %p136 = scmp.le.s32.totalorder 1, %s9
    %p137 = scmp.lt.s32.totalorder %s9, 3
    %p138 = pnand %p136, %p137
    %p139 = pneg %p138
    // Predicated region
    $region29: #{basic_block_forward.7} parent=5 // pred_check
      _
    $region30: #{basic_block_forward.7} parent=5 // pred_check_branch
      %141 = sbr.rel (%p138) target = $region32
    $region31: #{basic_block_forward.7} parent=5 // pred_region
      %s142 = ssub.s32 %s9, 1
      %p143 = scmp.lt.s32.totalorder %s14, 1
      %s144 = scalar_select %p143, %s14, 1
      %s145 = smul.addr %s144, 32
      %s146 = smul.addr %s145, 4
      %s147 = scalar_lea.vmem %s0, %s146
      %p148 = pneg %p35
      %p149 = pneg %p32
      %p150 = pneg %p56
      %p151 = pneg %p53
      %p152 = pneg %p77
      %p153 = pneg %p74
      %p154 = pneg %p103
      %p155 = pneg %p100
      %p156 = scmp.lt.s32.totalorder %s14, 1
      %s157 = scalar_select %p156, %s14, 1
      %s158 = smul.addr %s157, 32
      %s159 = smul.addr %s158, 8
      %s160 = scalar_lea.vmem %s3, %s159
      %p161 = scmp.lt.s32.totalorder %s14, 1
      %s162 = scalar_select %p161, %s14, 1
      %s163 = smul.addr %s162, 32
      %s164 = smul.addr %s163, 4
      %s165 = scalar_lea.vmem %s0, %s164
      %p166 = scmp.lt.s32.totalorder %s14, 1
      %s167 = scalar_select %p166, %s14, 1
      %s168 = smul.addr %s167, 32
      %s169 = smul.addr %s168, 8
      %s170 = scalar_lea.vmem %s3, %s169
      %v171 = vld [vmem:[%s165] sm:$0xf]
      %v172 = vld [vmem:[%s165 + $0x4] sm:$0xf]
      %v173 = vld [vmem:[%s165 + $0x8] sm:$0xf]
      %v174 = vld [vmem:[%s165 + $0xc] sm:$0xf]
      %v175 = vld [vmem:[%s165 + $0x10] sm:$0xf]
      %v176 = vld [vmem:[%s165 + $0x14] sm:$0xf]
      %v177 = vld [vmem:[%s165 + $0x18] sm:$0xf]
      %v178 = vld [vmem:[%s165 + $0x1c] sm:$0xf]
      %v179 = vld [vmem:[%s165 + $0x20] sm:$0xf]
      %v180 = vld [vmem:[%s165 + $0x24] sm:$0xf]
      %v181 = vld [vmem:[%s165 + $0x28] sm:$0xf]
      %v182 = vld [vmem:[%s165 + $0x2c] sm:$0xf]
      %v183 = vld [vmem:[%s165 + $0x30] sm:$0xf]
      %v184 = vld [vmem:[%s165 + $0x34] sm:$0xf]
      %v185 = vld [vmem:[%s165 + $0x38] sm:$0xf]
      %v186 = vld [vmem:[%s165 + $0x3c] sm:$0xf]
      %v187 = vld [vmem:[%s165 + $0x40] sm:$0xf]
      %v188 = vld [vmem:[%s165 + $0x44] sm:$0xf]
      %v189 = vld [vmem:[%s165 + $0x48] sm:$0xf]
      %v190 = vld [vmem:[%s165 + $0x4c] sm:$0xf]
      %v191 = vld [vmem:[%s165 + $0x50] sm:$0xf]
      %v192 = vld [vmem:[%s165 + $0x54] sm:$0xf]
      %v193 = vld [vmem:[%s165 + $0x58] sm:$0xf]
      %v194 = vld [vmem:[%s165 + $0x5c] sm:$0xf]
      %v195 = vld [vmem:[%s165 + $0x60] sm:$0xf]
      %v196 = vld [vmem:[%s165 + $0x64] sm:$0xf]
      %v197 = vld [vmem:[%s165 + $0x68] sm:$0xf]
      %v198 = vld [vmem:[%s165 + $0x6c] sm:$0xf]
      %v199 = vld [vmem:[%s165 + $0x70] sm:$0xf]
      %v200 = vld [vmem:[%s165 + $0x74] sm:$0xf]
      %v201 = vld [vmem:[%s165 + $0x78] sm:$0xf]
      %v202 = vld [vmem:[%s165 + $0x7c] sm:$0xf]
      %v203 = vunpack.c.l.bf16 %v171
      %v204 = vunpack.c.l.bf16 %v172
      %v205 = vunpack.c.l.bf16 %v173
      %v206 = vunpack.c.l.bf16 %v174
      %v207 = vunpack.c.l.bf16 %v175
      %v208 = vunpack.c.l.bf16 %v176
      %v209 = vunpack.c.l.bf16 %v177
      %v210 = vunpack.c.l.bf16 %v178
      %v211 = vunpack.c.l.bf16 %v179
      %v212 = vunpack.c.l.bf16 %v180
      %v213 = vunpack.c.l.bf16 %v181
      %v214 = vunpack.c.l.bf16 %v182
      %v215 = vunpack.c.l.bf16 %v183
      %v216 = vunpack.c.l.bf16 %v184
      %v217 = vunpack.c.l.bf16 %v185
      %v218 = vunpack.c.l.bf16 %v186
      %v219 = vunpack.c.l.bf16 %v187
      %v220 = vunpack.c.l.bf16 %v188
      %v221 = vunpack.c.l.bf16 %v189
      %v222 = vunpack.c.l.bf16 %v190
      %v223 = vunpack.c.l.bf16 %v191
      %v224 = vunpack.c.l.bf16 %v192
      %v225 = vunpack.c.l.bf16 %v193
      %v226 = vunpack.c.l.bf16 %v194
      %v227 = vunpack.c.l.bf16 %v195
      %v228 = vunpack.c.l.bf16 %v196
      %v229 = vunpack.c.l.bf16 %v197
      %v230 = vunpack.c.l.bf16 %v198
      %v231 = vunpack.c.l.bf16 %v199
      %v232 = vunpack.c.l.bf16 %v200
      %v233 = vunpack.c.l.bf16 %v201
      %v234 = vunpack.c.l.bf16 %v202
      %v235 = vld [vmem:[%s1] sm:$0x1]
      %v237 = vperm.slane %v235, 0
      %v239 = vmul.f32 %v203, %v237
      %v240 = vmul.f32 %v204, %v237
      %v241 = vmul.f32 %v205, %v237
      %v242 = vmul.f32 %v206, %v237
      %v243 = vmul.f32 %v207, %v237
      %v244 = vmul.f32 %v208, %v237
      %v245 = vmul.f32 %v209, %v237
      %v246 = vmul.f32 %v210, %v237
      %v247 = vmul.f32 %v211, %v237
      %v248 = vmul.f32 %v212, %v237
      %v249 = vmul.f32 %v213, %v237
      %v250 = vmul.f32 %v214, %v237
      %v251 = vmul.f32 %v215, %v237
      %v252 = vmul.f32 %v216, %v237
      %v253 = vmul.f32 %v217, %v237
      %v254 = vmul.f32 %v218, %v237
      %v255 = vmul.f32 %v219, %v237
      %v256 = vmul.f32 %v220, %v237
      %v257 = vmul.f32 %v221, %v237
      %v258 = vmul.f32 %v222, %v237
      %v259 = vmul.f32 %v223, %v237
      %v260 = vmul.f32 %v224, %v237
      %v261 = vmul.f32 %v225, %v237
      %v262 = vmul.f32 %v226, %v237
      %v263 = vmul.f32 %v227, %v237
      %v264 = vmul.f32 %v228, %v237
      %v265 = vmul.f32 %v229, %v237
      %v266 = vmul.f32 %v230, %v237
      %v267 = vmul.f32 %v231, %v237
      %v268 = vmul.f32 %v232, %v237
      %v269 = vmul.f32 %v233, %v237
      %v270 = vmul.f32 %v234, %v237
      %v271 = vld [vmem:[%s2] sm:$0x1]
      %v273 = vperm.slane %v271, 0
      %v275 = vadd.f32 %v239, %v273
      %v276 = vadd.f32 %v240, %v273
      %v277 = vadd.f32 %v241, %v273
      %v278 = vadd.f32 %v242, %v273
      %v279 = vadd.f32 %v243, %v273
      %v280 = vadd.f32 %v244, %v273
      %v281 = vadd.f32 %v245, %v273
      %v282 = vadd.f32 %v246, %v273
      %v283 = vadd.f32 %v247, %v273
      %v284 = vadd.f32 %v248, %v273
      %v285 = vadd.f32 %v249, %v273
      %v286 = vadd.f32 %v250, %v273
      %v287 = vadd.f32 %v251, %v273
      %v288 = vadd.f32 %v252, %v273
      %v289 = vadd.f32 %v253, %v273
      %v290 = vadd.f32 %v254, %v273
      %v291 = vadd.f32 %v255, %v273
      %v292 = vadd.f32 %v256, %v273
      %v293 = vadd.f32 %v257, %v273
      %v294 = vadd.f32 %v258, %v273
      %v295 = vadd.f32 %v259, %v273
      %v296 = vadd.f32 %v260, %v273
      %v297 = vadd.f32 %v261, %v273
      %v298 = vadd.f32 %v262, %v273
      %v299 = vadd.f32 %v263, %v273
      %v300 = vadd.f32 %v264, %v273
      %v301 = vadd.f32 %v265, %v273
      %v302 = vadd.f32 %v266, %v273
      %v303 = vadd.f32 %v267, %v273
      %v304 = vadd.f32 %v268, %v273
      %v305 = vadd.f32 %v269, %v273
      %v306 = vadd.f32 %v270, %v273
      %v307 = vmax.f32 %v275, 0.0
      %v308 = vmax.f32 %v276, 0.0
      %v309 = vmax.f32 %v277, 0.0
      %v310 = vmax.f32 %v278, 0.0
      %v311 = vmax.f32 %v279, 0.0
      %v312 = vmax.f32 %v280, 0.0
      %v313 = vmax.f32 %v281, 0.0
      %v314 = vmax.f32 %v282, 0.0
      %v315 = vmax.f32 %v283, 0.0
      %v316 = vmax.f32 %v284, 0.0
      %v317 = vmax.f32 %v285, 0.0
      %v318 = vmax.f32 %v286, 0.0
      %v319 = vmax.f32 %v287, 0.0
      %v320 = vmax.f32 %v288, 0.0
      %v321 = vmax.f32 %v289, 0.0
      %v322 = vmax.f32 %v290, 0.0
      %v323 = vmax.f32 %v291, 0.0
      %v324 = vmax.f32 %v292, 0.0
      %v325 = vmax.f32 %v293, 0.0
      %v326 = vmax.f32 %v294, 0.0
      %v327 = vmax.f32 %v295, 0.0
      %v328 = vmax.f32 %v296, 0.0
      %v329 = vmax.f32 %v297, 0.0
      %v330 = vmax.f32 %v298, 0.0
      %v331 = vmax.f32 %v299, 0.0
      %v332 = vmax.f32 %v300, 0.0
      %v333 = vmax.f32 %v301, 0.0
      %v334 = vmax.f32 %v302, 0.0
      %v335 = vmax.f32 %v303, 0.0
      %v336 = vmax.f32 %v304, 0.0
      %v337 = vmax.f32 %v305, 0.0
      %v338 = vmax.f32 %v306, 0.0
      %339 = vst [vmem:[%s170] sm:$0xff] %v307
      %340 = vst [vmem:[%s170 + $0x8] sm:$0xff] %v308
      %341 = vst [vmem:[%s170 + $0x10] sm:$0xff] %v309
      %342 = vst [vmem:[%s170 + $0x18] sm:$0xff] %v310
      %343 = vst [vmem:[%s170 + $0x20] sm:$0xff] %v311
      %344 = vst [vmem:[%s170 + $0x28] sm:$0xff] %v312
      %345 = vst [vmem:[%s170 + $0x30] sm:$0xff] %v313
      %346 = vst [vmem:[%s170 + $0x38] sm:$0xff] %v314
      %347 = vst [vmem:[%s170 + $0x40] sm:$0xff] %v315
      %348 = vst [vmem:[%s170 + $0x48] sm:$0xff] %v316
      %349 = vst [vmem:[%s170 + $0x50] sm:$0xff] %v317
      %350 = vst [vmem:[%s170 + $0x58] sm:$0xff] %v318
      %351 = vst [vmem:[%s170 + $0x60] sm:$0xff] %v319
      %352 = vst [vmem:[%s170 + $0x68] sm:$0xff] %v320
      %353 = vst [vmem:[%s170 + $0x70] sm:$0xff] %v321
      %354 = vst [vmem:[%s170 + $0x78] sm:$0xff] %v322
      %355 = vst [vmem:[%s170 + $0x80] sm:$0xff] %v323
      %356 = vst [vmem:[%s170 + $0x88] sm:$0xff] %v324
      %357 = vst [vmem:[%s170 + $0x90] sm:$0xff] %v325
      %358 = vst [vmem:[%s170 + $0x98] sm:$0xff] %v326
      %359 = vst [vmem:[%s170 + $0xa0] sm:$0xff] %v327
      %360 = vst [vmem:[%s170 + $0xa8] sm:$0xff] %v328
      %361 = vst [vmem:[%s170 + $0xb0] sm:$0xff] %v329
      %362 = vst [vmem:[%s170 + $0xb8] sm:$0xff] %v330
      %363 = vst [vmem:[%s170 + $0xc0] sm:$0xff] %v331
      %364 = vst [vmem:[%s170 + $0xc8] sm:$0xff] %v332
      %365 = vst [vmem:[%s170 + $0xd0] sm:$0xff] %v333
      %366 = vst [vmem:[%s170 + $0xd8] sm:$0xff] %v334
      %367 = vst [vmem:[%s170 + $0xe0] sm:$0xff] %v335
      %368 = vst [vmem:[%s170 + $0xe8] sm:$0xff] %v336
      %369 = vst [vmem:[%s170 + $0xf0] sm:$0xff] %v337
      %370 = vst [vmem:[%s170 + $0xf8] sm:$0xff] %v338
      %p371 = scmp.lt.s32.totalorder %s14, 1
      %s372 = scalar_select %p371, %s14, 1
      %s373 = smul.addr %s372, 32
      %s374 = smul.addr %s373, 8
      %s375 = scalar_lea.vmem %s3, %s374
      // Predicated region
      $region33: #{basic_block_forward.7} parent=31 // pred_check
        %p376 = pneg %p100
      $region34: #{basic_block_forward.7} parent=31 // pred_check_branch
        %378 = sbr.rel (%p376) target = $region36
      $region35: #{basic_block_forward.7} parent=31 // pred_region
        _
      $region36: #{basic_block_forward.7} parent=31 // pred_fallthru
        _
    $region32: #{basic_block_forward.7} parent=5 // pred_fallthru
      _
    %p379 = scmp.le.s32.totalorder 2, %s9
    // Predicated region
    $region37: #{basic_block_forward.7} parent=5 // pred_check
      %p380 = pneg %p379
    $region38: #{basic_block_forward.7} parent=5 // pred_check_branch
      %382 = sbr.rel (%p380) target = $region40
    $region39: #{basic_block_forward.7} parent=5 // pred_region
      %s383 = ssub.s32 %s9, 2
      // Predicated region
      $region41: #{basic_block_forward.7} parent=39 // pred_check
        %p384 = pneg %p106
      $region42: #{basic_block_forward.7} parent=39 // pred_check_branch
        %386 = sbr.rel (%p384) target = $region44
      $region43: #{basic_block_forward.7} parent=39 // pred_region
        %p387 = scmp.lt.s32.totalorder %s15, 1
        %s388 = scalar_select %p387, %s15, 1
        %s389 = smul.addr %s388, 32
        %s390 = smul.addr %s389, 8
        %s391 = scalar_lea.vmem %s3, %s390
      $region44: #{basic_block_forward.7} parent=39 // pred_fallthru
        _
    $region40: #{basic_block_forward.7} parent=5 // pred_fallthru
      _
  $region6: #{basic_block_forward.7} parent=0 // loop_footer
    %s13 = sadd.s32 1, %s9
  $region7: #{basic_block_forward.7} parent=0 // loop_footer_branch
    %8 = sbr.rel target = $region3
  $region8: #{basic_block_forward.7} parent=0 // loop_exit
    _

// kernel: basic_block_forward.5
$region0: #{basic_block_forward.5}
  #allocation0 [shape = 'u32[]', space=smem, size = 0x4, offset = 0x4, fixed_abs, tag = 'smem constant byte address 0x4 - core index']
  #allocation1 [shape = 'u32[72,128]{1,0:T(1,128)}', space=vmem, size = 0x9000, scoped, tag = 'internal scratch']
  %s0 = inlined_call_operand.vmem [shape: bf16[2,16,16,128], index: 0, kind: input, shape index: {}]
  %s1 = inlined_call_operand.vmem [shape: f32[1,1,128], index: 1, kind: input, shape index: {}]
  %s2 = inlined_call_operand.vmem [shape: f32[1,1,128], index: 2, kind: input, shape index: {}]
  %s3 = inlined_call_operand.vmem [shape: bf16[2,18,18,128], index: 3, kind: output, shape index: {}]
  %s4 = sld [smem:[#allocation0]]
  $region45: #{basic_block_forward.5} parent=0
    _
  %s6 = ssub.s32 1, %s4
  %s7 = scalar_select 0, %s6, %s4
  loop: start=0, step=1, limit=4
  $region2: #{basic_block_forward.5} parent=0 // loop_pre_header
    _
  $region3: #{basic_block_forward.5} parent=0 // loop_header
    %s9 = sphi 0, %s13
    %p10 = scmp.ge.s32.totalorder %s9, 4
    %s19 = sphi 0, %s21
    %s22 = sphi 0, %s19
    %s23 = sphi 0, %s22
    %s39 = sphi 0, %s23
    %s43 = sphi 0, %s43
    %s45 = sphi 0, %s43
    %s46 = sphi 0, %s45
    %s60 = sphi 0, %s46
    %s64 = sphi 0, %s64
    %s66 = sphi 0, %s64
    %s67 = sphi 0, %s66
    %s81 = sphi 0, %s67
    %s87 = sphi 0, %s89
    %s90 = sphi 0, %s87
    %s91 = sphi 0, %s90
    %s107 = sphi 0, %s91
  $region4: #{basic_block_forward.5} parent=0 // loop_header_branch
    %12 = sbr.rel (%p10) target = $region8
  $region5: #{basic_block_forward.5} parent=0 // loop_body
    %s14 = ssub.s32 %s9, 1
    %s15 = ssub.s32 %s9, 2
    %s16 = sadd.s32 %s9, 1
    %s17 = ssub.s32 %s9, %s16
    %p18 = scmp.eq.s32.totalorder %s17, 0
    %s20 = sadd.s32 %s19, 1
    %s21 = scalar_select %p18, %s19, %s20
    %p24 = pneg %p18
    %p25 = scmp.eq.s32.totalorder %s9, 1
    %p26 = por %p24, %p25
    %p27 = scmp.ne.s32.totalorder %s19, %s22
    %p28 = scmp.eq.s32.totalorder %s9, 0
    %p29 = por %p27, %p28
    %p30 = scmp.ne.s32.totalorder %s19, %s22
    %p31 = scmp.eq.s32.totalorder %s14, 1
    %p32 = por %p30, %p31
    %p33 = scmp.ne.s32.totalorder %s22, %s23
    %p34 = scmp.eq.s32.totalorder %s14, 0
    %p35 = por %p33, %p34
    %p36 = scmp.ne.s32.totalorder %s22, %s23
    %p37 = scmp.eq.s32.totalorder %s15, 1
    %p38 = por %p36, %p37
    %p40 = scmp.ne.s32.totalorder %s23, %s39
    %p41 = scmp.eq.s32.totalorder %s15, 0
    %p42 = por %p40, %p41
    %s44 = sadd.s32 %s43, 1
    %p47 = scmp.eq.s32.totalorder %s9, 1
    %p48 = scmp.ne.s32.totalorder %s43, %s45
    %p49 = scmp.eq.s32.totalorder %s9, 0
    %p50 = por %p48, %p49
    %p51 = scmp.ne.s32.totalorder %s43, %s45
    %p52 = scmp.eq.s32.totalorder %s14, 1
    %p53 = por %p51, %p52
    %p54 = scmp.ne.s32.totalorder %s45, %s46
    %p55 = scmp.eq.s32.totalorder %s14, 0
    %p56 = por %p54, %p55
    %p57 = scmp.ne.s32.totalorder %s45, %s46
    %p58 = scmp.eq.s32.totalorder %s15, 1
    %p59 = por %p57, %p58
    %p61 = scmp.ne.s32.totalorder %s46, %s60
    %p62 = scmp.eq.s32.totalorder %s15, 0
    %p63 = por %p61, %p62
    %s65 = sadd.s32 %s64, 1
    %p68 = scmp.eq.s32.totalorder %s9, 1
    %p69 = scmp.ne.s32.totalorder %s64, %s66
    %p70 = scmp.eq.s32.totalorder %s9, 0
    %p71 = por %p69, %p70
    %p72 = scmp.ne.s32.totalorder %s64, %s66
    %p73 = scmp.eq.s32.totalorder %s14, 1
    %p74 = por %p72, %p73
    %p75 = scmp.ne.s32.totalorder %s66, %s67
    %p76 = scmp.eq.s32.totalorder %s14, 0
    %p77 = por %p75, %p76
    %p78 = scmp.ne.s32.totalorder %s66, %s67
    %p79 = scmp.eq.s32.totalorder %s15, 1
    %p80 = por %p78, %p79
    %p82 = scmp.ne.s32.totalorder %s67, %s81
    %p83 = scmp.eq.s32.totalorder %s15, 0
    %p84 = por %p82, %p83
    %s85 = ssub.s32 %s9, %s16
    %p86 = scmp.eq.s32.totalorder %s85, 0
    %s88 = sadd.s32 %s87, 1
    %s89 = scalar_select %p86, %s87, %s88
    %p92 = pneg %p86
    %p93 = scmp.eq.s32.totalorder %s9, 1
    %p94 = por %p92, %p93
    %p95 = scmp.ne.s32.totalorder %s87, %s90
    %p96 = scmp.eq.s32.totalorder %s9, 0
    %p97 = por %p95, %p96
    %p98 = scmp.ne.s32.totalorder %s87, %s90
    %p99 = scmp.eq.s32.totalorder %s14, 1
    %p100 = por %p98, %p99
    %p101 = scmp.ne.s32.totalorder %s90, %s91
    %p102 = scmp.eq.s32.totalorder %s14, 0
    %p103 = por %p101, %p102
    %p104 = scmp.ne.s32.totalorder %s90, %s91
    %p105 = scmp.eq.s32.totalorder %s15, 1
    %p106 = por %p104, %p105
    %p108 = scmp.ne.s32.totalorder %s91, %s107
    %p109 = scmp.eq.s32.totalorder %s15, 0
    %p110 = por %p108, %p109
    %p111 = scmp.le.s32.totalorder 1, %s9
    %p112 = scmp.lt.s32.totalorder %s9, 3
    %p113 = pnand %p111, %p112
    %p114 = pneg %p113
    // Predicated region
    $region9: #{basic_block_forward.5} parent=5 // pred_check
      _
    $region10: #{basic_block_forward.5} parent=5 // pred_check_branch
      %116 = sbr.rel (%p113) target = $region12
    $region11: #{basic_block_forward.5} parent=5 // pred_region
      %s117 = ssub.s32 %s9, 1
      // Predicated region
      $region13: #{basic_block_forward.5} parent=11 // pred_check
        %p118 = pneg %p56
      $region14: #{basic_block_forward.5} parent=11 // pred_check_branch
        %120 = sbr.rel (%p118) target = $region16
      $region15: #{basic_block_forward.5} parent=11 // pred_region
        _
      $region16: #{basic_block_forward.5} parent=11 // pred_fallthru
        _
      // Predicated region
      $region17: #{basic_block_forward.5} parent=11 // pred_check
        %p121 = pneg %p77
      $region18: #{basic_block_forward.5} parent=11 // pred_check_branch
        %123 = sbr.rel (%p121) target = $region20
      $region19: #{basic_block_forward.5} parent=11 // pred_region
        _
      $region20: #{basic_block_forward.5} parent=11 // pred_fallthru
        _
    $region12: #{basic_block_forward.5} parent=5 // pred_fallthru
      _
    %p124 = scmp.lt.s32.totalorder %s9, 2
    // Predicated region
    $region21: #{basic_block_forward.5} parent=5 // pred_check
      %p125 = pneg %p124
    $region22: #{basic_block_forward.5} parent=5 // pred_check_branch
      %127 = sbr.rel (%p125) target = $region24
    $region23: #{basic_block_forward.5} parent=5 // pred_region
      // Predicated region
      $region25: #{basic_block_forward.5} parent=23 // pred_check
        %p128 = pneg %p29
      $region26: #{basic_block_forward.5} parent=23 // pred_check_branch
        %130 = sbr.rel (%p128) target = $region28
      $region27: #{basic_block_forward.5} parent=23 // pred_region
        %p131 = scmp.lt.s32.totalorder %s9, 1
        %s132 = scalar_select %p131, %s9, 1
        %s133 = smul.addr %s132, 32
        %s134 = smul.addr %s133, 4
        %s135 = scalar_lea.vmem %s0, %s134
      $region28: #{basic_block_forward.5} parent=23 // pred_fallthru
        _
    $region24: #{basic_block_forward.5} parent=5 // pred_fallthru
      _
    %p136 = scmp.le.s32.totalorder 1, %s9
    %p137 = scmp.lt.s32.totalorder %s9, 3
    %p138 = pnand %p136, %p137
    %p139 = pneg %p138
    // Predicated region
    $region29: #{basic_block_forward.5} parent=5 // pred_check
      _
    $region30: #{basic_block_forward.5} parent=5 // pred_check_branch
      %141 = sbr.rel (%p138) target = $region32
    $region31: #{basic_block_forward.5} parent=5 // pred_region
      %s142 = ssub.s32 %s9, 1
      %p143 = scmp.lt.s32.totalorder %s14, 1
      %s144 = scalar_select %p143, %s14, 1
      %s145 = smul.addr %s144, 32
      %s146 = smul.addr %s145, 4
      %s147 = scalar_lea.vmem %s0, %s146
      %p148 = pneg %p35
      %p149 = pneg %p32
      %p150 = pneg %p56
      %p151 = pneg %p53
      %p152 = pneg %p77
      %p153 = pneg %p74
      %p154 = pneg %p103
      %p155 = pneg %p100
      %p156 = scmp.lt.s32.totalorder %s14, 1
      %s157 = scalar_select %p156, %s14, 1
      %s158 = smul.addr %s157, 54
      %s159 = smul.addr %s158, 4
      %s160 = scalar_lea.vmem %s3, %s159
      %p161 = scmp.lt.s32.totalorder %s14, 1
      %s162 = scalar_select %p161, %s14, 1
      %s163 = smul.addr %s162, 32
      %s164 = smul.addr %s163, 4
      %s165 = scalar_lea.vmem %s0, %s164
      %p166 = scmp.lt.s32.totalorder %s14, 1
      %s167 = scalar_select %p166, %s14, 1
      %s168 = smul.addr %s167, 54
      %s169 = smul.addr %s168, 4
      %s170 = scalar_lea.vmem %s3, %s169
      %v172 = vld [vmem:[%s165] sm:$0xf]
      %v173 = vld [vmem:[%s165 + $0x4] sm:$0xf]
      %v174 = vld [vmem:[%s165 + $0x8] sm:$0xf]
      %v175 = vld [vmem:[%s165 + $0xc] sm:$0xf]
      %v176 = vld [vmem:[%s165 + $0x10] sm:$0xf]
      %v177 = vld [vmem:[%s165 + $0x14] sm:$0xf]
      %v178 = vld [vmem:[%s165 + $0x18] sm:$0xf]
      %v179 = vld [vmem:[%s165 + $0x1c] sm:$0xf]
      %v180 = vld [vmem:[%s165 + $0x20] sm:$0xf]
      %v181 = vld [vmem:[%s165 + $0x24] sm:$0xf]
      %v182 = vld [vmem:[%s165 + $0x28] sm:$0xf]
      %v183 = vld [vmem:[%s165 + $0x2c] sm:$0xf]
      %v184 = vld [vmem:[%s165 + $0x30] sm:$0xf]
      %v185 = vld [vmem:[%s165 + $0x34] sm:$0xf]
      %v186 = vld [vmem:[%s165 + $0x38] sm:$0xf]
      %v187 = vld [vmem:[%s165 + $0x3c] sm:$0xf]
      %v188 = vld [vmem:[%s165 + $0x40] sm:$0xf]
      %v189 = vld [vmem:[%s165 + $0x44] sm:$0xf]
      %v190 = vld [vmem:[%s165 + $0x48] sm:$0xf]
      %v191 = vld [vmem:[%s165 + $0x4c] sm:$0xf]
      %v192 = vld [vmem:[%s165 + $0x50] sm:$0xf]
      %v193 = vld [vmem:[%s165 + $0x54] sm:$0xf]
      %v194 = vld [vmem:[%s165 + $0x58] sm:$0xf]
      %v195 = vld [vmem:[%s165 + $0x5c] sm:$0xf]
      %v196 = vld [vmem:[%s165 + $0x60] sm:$0xf]
      %v197 = vld [vmem:[%s165 + $0x64] sm:$0xf]
      %v198 = vld [vmem:[%s165 + $0x68] sm:$0xf]
      %v199 = vld [vmem:[%s165 + $0x6c] sm:$0xf]
      %v200 = vld [vmem:[%s165 + $0x70] sm:$0xf]
      %v201 = vld [vmem:[%s165 + $0x74] sm:$0xf]
      %v202 = vld [vmem:[%s165 + $0x78] sm:$0xf]
      %v203 = vld [vmem:[%s165 + $0x7c] sm:$0xf]
      %v204 = vunpack.c.l.bf16 %v172
      %v205 = vunpack.c.l.bf16 %v173
      %v206 = vunpack.c.l.bf16 %v174
      %v207 = vunpack.c.l.bf16 %v175
      %v208 = vunpack.c.l.bf16 %v176
      %v209 = vunpack.c.l.bf16 %v177
      %v210 = vunpack.c.l.bf16 %v178
      %v211 = vunpack.c.l.bf16 %v179
      %v212 = vunpack.c.l.bf16 %v180
      %v213 = vunpack.c.l.bf16 %v181
      %v214 = vunpack.c.l.bf16 %v182
      %v215 = vunpack.c.l.bf16 %v183
      %v216 = vunpack.c.l.bf16 %v184
      %v217 = vunpack.c.l.bf16 %v185
      %v218 = vunpack.c.l.bf16 %v186
      %v219 = vunpack.c.l.bf16 %v187
      %v220 = vunpack.c.l.bf16 %v188
      %v221 = vunpack.c.l.bf16 %v189
      %v222 = vunpack.c.l.bf16 %v190
      %v223 = vunpack.c.l.bf16 %v191
      %v224 = vunpack.c.l.bf16 %v192
      %v225 = vunpack.c.l.bf16 %v193
      %v226 = vunpack.c.l.bf16 %v194
      %v227 = vunpack.c.l.bf16 %v195
      %v228 = vunpack.c.l.bf16 %v196
      %v229 = vunpack.c.l.bf16 %v197
      %v230 = vunpack.c.l.bf16 %v198
      %v231 = vunpack.c.l.bf16 %v199
      %v232 = vunpack.c.l.bf16 %v200
      %v233 = vunpack.c.l.bf16 %v201
      %v234 = vunpack.c.l.bf16 %v202
      %v235 = vunpack.c.l.bf16 %v203
      %v236 = vld [vmem:[%s1] sm:$0x1]
      %v238 = vperm.slane %v236, 0
      %v240 = vmul.f32 %v204, %v238
      %v241 = vmul.f32 %v205, %v238
      %v242 = vmul.f32 %v206, %v238
      %v243 = vmul.f32 %v207, %v238
      %v244 = vmul.f32 %v208, %v238
      %v245 = vmul.f32 %v209, %v238
      %v246 = vmul.f32 %v210, %v238
      %v247 = vmul.f32 %v211, %v238
      %v248 = vmul.f32 %v212, %v238
      %v249 = vmul.f32 %v213, %v238
      %v250 = vmul.f32 %v214, %v238
      %v251 = vmul.f32 %v215, %v238
      %v252 = vmul.f32 %v216, %v238
      %v253 = vmul.f32 %v217, %v238
      %v254 = vmul.f32 %v218, %v238
      %v255 = vmul.f32 %v219, %v238
      %v256 = vmul.f32 %v220, %v238
      %v257 = vmul.f32 %v221, %v238
      %v258 = vmul.f32 %v222, %v238
      %v259 = vmul.f32 %v223, %v238
      %v260 = vmul.f32 %v224, %v238
      %v261 = vmul.f32 %v225, %v238
      %v262 = vmul.f32 %v226, %v238
      %v263 = vmul.f32 %v227, %v238
      %v264 = vmul.f32 %v228, %v238
      %v265 = vmul.f32 %v229, %v238
      %v266 = vmul.f32 %v230, %v238
      %v267 = vmul.f32 %v231, %v238
      %v268 = vmul.f32 %v232, %v238
      %v269 = vmul.f32 %v233, %v238
      %v270 = vmul.f32 %v234, %v238
      %v271 = vmul.f32 %v235, %v238
      %v272 = vld [vmem:[%s2] sm:$0x1]
      %v274 = vperm.slane %v272, 0
      %v276 = vadd.f32 %v240, %v274
      %v277 = vadd.f32 %v241, %v274
      %v278 = vadd.f32 %v242, %v274
      %v279 = vadd.f32 %v243, %v274
      %v280 = vadd.f32 %v244, %v274
      %v281 = vadd.f32 %v245, %v274
      %v282 = vadd.f32 %v246, %v274
      %v283 = vadd.f32 %v247, %v274
      %v284 = vadd.f32 %v248, %v274
      %v285 = vadd.f32 %v249, %v274
      %v286 = vadd.f32 %v250, %v274
      %v287 = vadd.f32 %v251, %v274
      %v288 = vadd.f32 %v252, %v274
      %v289 = vadd.f32 %v253, %v274
      %v290 = vadd.f32 %v254, %v274
      %v291 = vadd.f32 %v255, %v274
      %v292 = vadd.f32 %v256, %v274
      %v293 = vadd.f32 %v257, %v274
      %v294 = vadd.f32 %v258, %v274
      %v295 = vadd.f32 %v259, %v274
      %v296 = vadd.f32 %v260, %v274
      %v297 = vadd.f32 %v261, %v274
      %v298 = vadd.f32 %v262, %v274
      %v299 = vadd.f32 %v263, %v274
      %v300 = vadd.f32 %v264, %v274
      %v301 = vadd.f32 %v265, %v274
      %v302 = vadd.f32 %v266, %v274
      %v303 = vadd.f32 %v267, %v274
      %v304 = vadd.f32 %v268, %v274
      %v305 = vadd.f32 %v269, %v274
      %v306 = vadd.f32 %v270, %v274
      %v307 = vadd.f32 %v271, %v274
      %v308 = vmax.f32 %v276, 0.0
      %v309 = vmax.f32 %v277, 0.0
      %v310 = vmax.f32 %v278, 0.0
      %v311 = vmax.f32 %v279, 0.0
      %v312 = vmax.f32 %v280, 0.0
      %v313 = vmax.f32 %v281, 0.0
      %v314 = vmax.f32 %v282, 0.0
      %v315 = vmax.f32 %v283, 0.0
      %v316 = vmax.f32 %v284, 0.0
      %v317 = vmax.f32 %v285, 0.0
      %v318 = vmax.f32 %v286, 0.0
      %v319 = vmax.f32 %v287, 0.0
      %v320 = vmax.f32 %v288, 0.0
      %v321 = vmax.f32 %v289, 0.0
      %v322 = vmax.f32 %v290, 0.0
      %v323 = vmax.f32 %v291, 0.0
      %v324 = vmax.f32 %v292, 0.0
      %v325 = vmax.f32 %v293, 0.0
      %v326 = vmax.f32 %v294, 0.0
      %v327 = vmax.f32 %v295, 0.0
      %v328 = vmax.f32 %v296, 0.0
      %v329 = vmax.f32 %v297, 0.0
      %v330 = vmax.f32 %v298, 0.0
      %v331 = vmax.f32 %v299, 0.0
      %v332 = vmax.f32 %v300, 0.0
      %v333 = vmax.f32 %v301, 0.0
      %v334 = vmax.f32 %v302, 0.0
      %v335 = vmax.f32 %v303, 0.0
      %v336 = vmax.f32 %v304, 0.0
      %v337 = vmax.f32 %v305, 0.0
      %v338 = vmax.f32 %v306, 0.0
      %v339 = vmax.f32 %v307, 0.0
      %v340 = vpack.c.bf16 %v308, %v308
      %v341 = vpack.c.bf16 %v309, %v309
      %v342 = vpack.c.bf16 %v310, %v310
      %v343 = vpack.c.bf16 %v311, %v311
      %v344 = vpack.c.bf16 %v312, %v312
      %v345 = vpack.c.bf16 %v313, %v313
      %v346 = vpack.c.bf16 %v314, %v314
      %v347 = vpack.c.bf16 %v315, %v315
      %v348 = vpack.c.bf16 %v316, %v316
      %v349 = vpack.c.bf16 %v317, %v317
      %v350 = vpack.c.bf16 %v318, %v318
      %v351 = vpack.c.bf16 %v319, %v319
      %v352 = vpack.c.bf16 %v320, %v320
      %v353 = vpack.c.bf16 %v321, %v321
      %v354 = vpack.c.bf16 %v322, %v322
      %v355 = vpack.c.bf16 %v323, %v323
      %v356 = vpack.c.bf16 %v324, %v324
      %v357 = vpack.c.bf16 %v325, %v325
      %v358 = vpack.c.bf16 %v326, %v326
      %v359 = vpack.c.bf16 %v327, %v327
      %v360 = vpack.c.bf16 %v328, %v328
      %v361 = vpack.c.bf16 %v329, %v329
      %v362 = vpack.c.bf16 %v330, %v330
      %v363 = vpack.c.bf16 %v331, %v331
      %v364 = vpack.c.bf16 %v332, %v332
      %v365 = vpack.c.bf16 %v333, %v333
      %v366 = vpack.c.bf16 %v334, %v334
      %v367 = vpack.c.bf16 %v335, %v335
      %v368 = vpack.c.bf16 %v336, %v336
      %v369 = vpack.c.bf16 %v337, %v337
      %v370 = vpack.c.bf16 %v338, %v338
      %v371 = vpack.c.bf16 %v339, %v339
      %372 = vst [vmem:[%s170] sm:$0xf] 0
      %373 = vst [vmem:[%s170 + $0x4] sm:$0xf] 0
      %374 = vst [vmem:[%s170 + $0x8] sm:$0x1] 0
      %375 = vst [vmem:[%s170 + $0xc] sm:$0xf] 0
      %376 = vst [vmem:[%s170 + $0x10] sm:$0xf] 0
      %377 = vst [vmem:[%s170 + $0x14] sm:$0x1] 0
      %378 = vst [vmem:[%s170 + $0x18] sm:$0xf] 0
      %379 = vst [vmem:[%s170 + $0x1c] sm:$0xf] 0
      %380 = vst [vmem:[%s170 + $0x20] sm:$0x1] 0
      %381 = vst [vmem:[%s170 + $0x24] sm:$0xf] 0
      %382 = vst [vmem:[%s170 + $0x28] sm:$0xf] 0
      %383 = vst [vmem:[%s170 + $0x2c] sm:$0x1] 0
      %384 = vst [vmem:[%s170 + $0x30] sm:$0xf] 0
      %385 = vst [vmem:[%s170 + $0x34] sm:$0xf] 0
      %386 = vst [vmem:[%s170 + $0x38] sm:$0x1] 0
      %387 = vst [vmem:[%s170 + $0x3c] sm:$0xf] 0
      %388 = vst [vmem:[%s170 + $0x40] sm:$0xf] 0
      %389 = vst [vmem:[%s170 + $0x44] sm:$0x1] 0
      %390 = vst [vmem:[%s170 + $0x48] sm:$0xf] 0
      %391 = vst [vmem:[%s170 + $0x4c] sm:$0xf] 0
      %392 = vst [vmem:[%s170 + $0x50] sm:$0x1] 0
      %393 = vst [vmem:[%s170 + $0x54] sm:$0xf] 0
      %394 = vst [vmem:[%s170 + $0x58] sm:$0xf] 0
      %395 = vst [vmem:[%s170 + $0x5c] sm:$0x1] 0
      %396 = vst [vmem:[%s170 + $0x60] sm:$0xf] 0
      %397 = vst [vmem:[%s170 + $0x64] sm:$0xf] 0
      %398 = vst [vmem:[%s170 + $0x68] sm:$0x1] 0
      %399 = vst [vmem:[%s170 + $0x6c] sm:$0xf] 0
      %400 = vst [vmem:[%s170 + $0x70] sm:$0xf] 0
      %401 = vst [vmem:[%s170 + $0x74] sm:$0x1] 0
      %402 = vst [vmem:[%s170 + $0x78] sm:$0xf] 0
      %403 = vst [vmem:[%s170 + $0x7c] sm:$0xf] 0
      %404 = vst [vmem:[%s170 + $0x80] sm:$0x1] 0
      %405 = vst [vmem:[%s170 + $0x84] sm:$0xf] 0
      %406 = vst [vmem:[%s170 + $0x88] sm:$0xf] 0
      %407 = vst [vmem:[%s170 + $0x8c] sm:$0x1] 0
      %408 = vst [vmem:[%s170 + $0x90] sm:$0xf] 0
      %409 = vst [vmem:[%s170 + $0x94] sm:$0xf] 0
      %410 = vst [vmem:[%s170 + $0x98] sm:$0x1] 0
      %411 = vst [vmem:[%s170 + $0x9c] sm:$0xf] 0
      %412 = vst [vmem:[%s170 + $0xa0] sm:$0xf] 0
      %413 = vst [vmem:[%s170 + $0xa4] sm:$0x1] 0
      %414 = vst [vmem:[%s170 + $0xa8] sm:$0xf] 0
      %415 = vst [vmem:[%s170 + $0xac] sm:$0xf] 0
      %416 = vst [vmem:[%s170 + $0xb0] sm:$0x1] 0
      %417 = vst [vmem:[%s170 + $0xb4] sm:$0xf] 0
      %418 = vst [vmem:[%s170 + $0xb8] sm:$0xf] 0
      %419 = vst [vmem:[%s170 + $0xbc] sm:$0x1] 0
      %420 = vst [vmem:[%s170 + $0xc0] sm:$0xf] 0
      %421 = vst [vmem:[%s170 + $0xc4] sm:$0xf] 0
      %422 = vst [vmem:[%s170 + $0xc8] sm:$0x1] 0
      %423 = vst [vmem:[%s170 + $0xcc] sm:$0xf] 0
      %424 = vst [vmem:[%s170 + $0xd0] sm:$0xf] 0
      %425 = vst [vmem:[%s170 + $0xd4] sm:$0x1] 0
      %vm426 = vsmask.f32 256
      %vm427 = vsmask.f32 4368
      %vm428 = vmor %vm426, %vm427
      %v430 = vshrl.u32 %v340, 16
      %v432 = vrot.slane %v430, 7
      %v433 = vshll.u32 %v340, 16
      %v435 = vor.u32 %v432, %v433
      %v436 = vrot.slane %v432, 4
      %v438 = vshrl.u32 %v341, 16
      %v440 = vrot.slane %v438, 7
      %v441 = vshll.u32 %v341, 16
      %v443 = vor.u32 %v440, %v441
      %v444 = vsel %vm428, %v436, %v443
      %v445 = vrot.slane %v440, 4
      %v447 = vshrl.u32 %v342, 16
      %v449 = vrot.slane %v447, 7
      %v450 = vshll.u32 %v342, 16
      %v452 = vor.u32 %v449, %v450
      %v453 = vrot.slane %v449, 4
      %v455 = vshrl.u32 %v343, 16
      %v457 = vrot.slane %v455, 7
      %v458 = vshll.u32 %v343, 16
      %v460 = vor.u32 %v457, %v458
      %v461 = vsel %vm428, %v453, %v460
      %v462 = vrot.slane %v457, 4
      %v464 = vshrl.u32 %v344, 16
      %v466 = vrot.slane %v464, 7
      %v467 = vshll.u32 %v344, 16
      %v469 = vor.u32 %v466, %v467
      %v470 = vrot.slane %v466, 4
      %v472 = vshrl.u32 %v345, 16
      %v474 = vrot.slane %v472, 7
      %v475 = vshll.u32 %v345, 16
      %v477 = vor.u32 %v474, %v475
      %v478 = vsel %vm428, %v470, %v477
      %v479 = vrot.slane %v474, 4
      %v481 = vshrl.u32 %v346, 16
      %v483 = vrot.slane %v481, 7
      %v484 = vshll.u32 %v346, 16
      %v486 = vor.u32 %v483, %v484
      %v487 = vrot.slane %v483, 4
      %v489 = vshrl.u32 %v347, 16
      %v491 = vrot.slane %v489, 7
      %v492 = vshll.u32 %v347, 16
      %v494 = vor.u32 %v491, %v492
      %v495 = vsel %vm428, %v487, %v494
      %v496 = vrot.slane %v491, 4
      %v498 = vshrl.u32 %v348, 16
      %v500 = vrot.slane %v498, 7
      %v501 = vshll.u32 %v348, 16
      %v503 = vor.u32 %v500, %v501
      %v504 = vrot.slane %v500, 4
      %v506 = vshrl.u32 %v349, 16
      %v508 = vrot.slane %v506, 7
      %v509 = vshll.u32 %v349, 16
      %v511 = vor.u32 %v508, %v509
      %v512 = vsel %vm428, %v504, %v511
      %v513 = vrot.slane %v508, 4
      %v515 = vshrl.u32 %v350, 16
      %v517 = vrot.slane %v515, 7
      %v518 = vshll.u32 %v350, 16
      %v520 = vor.u32 %v517, %v518
      %v521 = vrot.slane %v517, 4
      %v523 = vshrl.u32 %v351, 16
      %v525 = vrot.slane %v523, 7
      %v526 = vshll.u32 %v351, 16
      %v528 = vor.u32 %v525, %v526
      %v529 = vsel %vm428, %v521, %v528
      %v530 = vrot.slane %v525, 4
      %v532 = vshrl.u32 %v352, 16
      %v534 = vrot.slane %v532, 7
      %v535 = vshll.u32 %v352, 16
      %v537 = vor.u32 %v534, %v535
      %v538 = vrot.slane %v534, 4
      %v540 = vshrl.u32 %v353, 16
      %v542 = vrot.slane %v540, 7
      %v543 = vshll.u32 %v353, 16
      %v545 = vor.u32 %v542, %v543
      %v546 = vsel %vm428, %v538, %v545
      %v547 = vrot.slane %v542, 4
      %v549 = vshrl.u32 %v354, 16
      %v551 = vrot.slane %v549, 7
      %v552 = vshll.u32 %v354, 16
      %v554 = vor.u32 %v551, %v552
      %v555 = vrot.slane %v551, 4
      %v557 = vshrl.u32 %v355, 16
      %v559 = vrot.slane %v557, 7
      %v560 = vshll.u32 %v355, 16
      %v562 = vor.u32 %v559, %v560
      %v563 = vsel %vm428, %v555, %v562
      %v564 = vrot.slane %v559, 4
      %v566 = vshrl.u32 %v356, 16
      %v568 = vrot.slane %v566, 7
      %v569 = vshll.u32 %v356, 16
      %v571 = vor.u32 %v568, %v569
      %v572 = vrot.slane %v568, 4
      %v574 = vshrl.u32 %v357, 16
      %v576 = vrot.slane %v574, 7
      %v577 = vshll.u32 %v357, 16
      %v579 = vor.u32 %v576, %v577
      %v580 = vsel %vm428, %v572, %v579
      %v581 = vrot.slane %v576, 4
      %v583 = vshrl.u32 %v358, 16
      %v585 = vrot.slane %v583, 7
      %v586 = vshll.u32 %v358, 16
      %v588 = vor.u32 %v585, %v586
      %v589 = vrot.slane %v585, 4
      %v591 = vshrl.u32 %v359, 16
      %v593 = vrot.slane %v591, 7
      %v594 = vshll.u32 %v359, 16
      %v596 = vor.u32 %v593, %v594
      %v597 = vsel %vm428, %v589, %v596
      %v598 = vrot.slane %v593, 4
      %v600 = vshrl.u32 %v360, 16
      %v602 = vrot.slane %v600, 7
      %v603 = vshll.u32 %v360, 16
      %v605 = vor.u32 %v602, %v603
      %v606 = vrot.slane %v602, 4
      %v608 = vshrl.u32 %v361, 16
      %v610 = vrot.slane %v608, 7
      %v611 = vshll.u32 %v361, 16
      %v613 = vor.u32 %v610, %v611
      %v614 = vsel %vm428, %v606, %v613
      %v615 = vrot.slane %v610, 4
      %v617 = vshrl.u32 %v362, 16
      %v619 = vrot.slane %v617, 7
      %v620 = vshll.u32 %v362, 16
      %v622 = vor.u32 %v619, %v620
      %v623 = vrot.slane %v619, 4
      %v625 = vshrl.u32 %v363, 16
      %v627 = vrot.slane %v625, 7
      %v628 = vshll.u32 %v363, 16
      %v630 = vor.u32 %v627, %v628
      %v631 = vsel %vm428, %v623, %v630
      %v632 = vrot.slane %v627, 4
      %v634 = vshrl.u32 %v364, 16
      %v636 = vrot.slane %v634, 7
      %v637 = vshll.u32 %v364, 16
      %v639 = vor.u32 %v636, %v637
      %v640 = vrot.slane %v636, 4
      %v642 = vshrl.u32 %v365, 16
      %v644 = vrot.slane %v642, 7
      %v645 = vshll.u32 %v365, 16
      %v647 = vor.u32 %v644, %v645
      %v648 = vsel %vm428, %v640, %v647
      %v649 = vrot.slane %v644, 4
      %v651 = vshrl.u32 %v366, 16
      %v653 = vrot.slane %v651, 7
      %v654 = vshll.u32 %v366, 16
      %v656 = vor.u32 %v653, %v654
      %v657 = vrot.slane %v653, 4
      %v659 = vshrl.u32 %v367, 16
      %v661 = vrot.slane %v659, 7
      %v662 = vshll.u32 %v367, 16
      %v664 = vor.u32 %v661, %v662
      %v665 = vsel %vm428, %v657, %v664
      %v666 = vrot.slane %v661, 4
      %v668 = vshrl.u32 %v368, 16
      %v670 = vrot.slane %v668, 7
      %v671 = vshll.u32 %v368, 16
      %v673 = vor.u32 %v670, %v671
      %v674 = vrot.slane %v670, 4
      %v676 = vshrl.u32 %v369, 16
      %v678 = vrot.slane %v676, 7
      %v679 = vshll.u32 %v369, 16
      %v681 = vor.u32 %v678, %v679
      %v682 = vsel %vm428, %v674, %v681
      %v683 = vrot.slane %v678, 4
      %v685 = vshrl.u32 %v370, 16
      %v687 = vrot.slane %v685, 7
      %v688 = vshll.u32 %v370, 16
      %v690 = vor.u32 %v687, %v688
      %v691 = vrot.slane %v687, 4
      %v693 = vshrl.u32 %v371, 16
      %v695 = vrot.slane %v693, 7
      %v696 = vshll.u32 %v371, 16
      %v698 = vor.u32 %v695, %v696
      %v699 = vsel %vm428, %v691, %v698
      %v700 = vrot.slane %v695, 4
      %s749 = scalar_lea.vmem %s170, 12
      %vm750 = vcmask 1043456
      %vm751 = vsmask.f32 7938
      %vm752 = vmand %vm750, %vm751
      %v753 = vld [vmem:[%s749] sm:$0xf]
      %v754 = vsel %vm752, %v435, %v753
      %755 = vst [vmem:[%s749] sm:$0xf] %v754
      %756 = vst [vmem:[%s749 + $0x4] sm:$0xf] %v444
      %vm757 = vcmask 1040384
      %vm758 = vmand %vm757, %vm426
      %v759 = vld [vmem:[%s749 + $0x8] sm:$0x1]
      %v760 = vsel %vm758, %v445, %v759
      %761 = vst [vmem:[%s749 + $0x8] sm:$0x1] %v760
      %v762 = vld [vmem:[%s749 + $0xc] sm:$0xf]
      %v763 = vsel %vm752, %v452, %v762
      %764 = vst [vmem:[%s749 + $0xc] sm:$0xf] %v763
      %765 = vst [vmem:[%s749 + $0x10] sm:$0xf] %v461
      %v766 = vld [vmem:[%s749 + $0x14] sm:$0x1]
      %v767 = vsel %vm758, %v462, %v766
      %768 = vst [vmem:[%s749 + $0x14] sm:$0x1] %v767
      %v769 = vld [vmem:[%s749 + $0x18] sm:$0xf]
      %v770 = vsel %vm752, %v469, %v769
      %771 = vst [vmem:[%s749 + $0x18] sm:$0xf] %v770
      %772 = vst [vmem:[%s749 + $0x1c] sm:$0xf] %v478
      %v773 = vld [vmem:[%s749 + $0x20] sm:$0x1]
      %v774 = vsel %vm758, %v479, %v773
      %775 = vst [vmem:[%s749 + $0x20] sm:$0x1] %v774
      %v776 = vld [vmem:[%s749 + $0x24] sm:$0xf]
      %v777 = vsel %vm752, %v486, %v776
      %778 = vst [vmem:[%s749 + $0x24] sm:$0xf] %v777
      %779 = vst [vmem:[%s749 + $0x28] sm:$0xf] %v495
      %v780 = vld [vmem:[%s749 + $0x2c] sm:$0x1]
      %v781 = vsel %vm758, %v496, %v780
      %782 = vst [vmem:[%s749 + $0x2c] sm:$0x1] %v781
      %v783 = vld [vmem:[%s749 + $0x30] sm:$0xf]
      %v784 = vsel %vm752, %v503, %v783
      %785 = vst [vmem:[%s749 + $0x30] sm:$0xf] %v784
      %786 = vst [vmem:[%s749 + $0x34] sm:$0xf] %v512
      %v787 = vld [vmem:[%s749 + $0x38] sm:$0x1]
      %v788 = vsel %vm758, %v513, %v787
      %789 = vst [vmem:[%s749 + $0x38] sm:$0x1] %v788
      %v790 = vld [vmem:[%s749 + $0x3c] sm:$0xf]
      %v791 = vsel %vm752, %v520, %v790
      %792 = vst [vmem:[%s749 + $0x3c] sm:$0xf] %v791
      %793 = vst [vmem:[%s749 + $0x40] sm:$0xf] %v529
      %v794 = vld [vmem:[%s749 + $0x44] sm:$0x1]
      %v795 = vsel %vm758, %v530, %v794
      %796 = vst [vmem:[%s749 + $0x44] sm:$0x1] %v795
      %v797 = vld [vmem:[%s749 + $0x48] sm:$0xf]
      %v798 = vsel %vm752, %v537, %v797
      %799 = vst [vmem:[%s749 + $0x48] sm:$0xf] %v798
      %800 = vst [vmem:[%s749 + $0x4c] sm:$0xf] %v546
      %v801 = vld [vmem:[%s749 + $0x50] sm:$0x1]
      %v802 = vsel %vm758, %v547, %v801
      %803 = vst [vmem:[%s749 + $0x50] sm:$0x1] %v802
      %v804 = vld [vmem:[%s749 + $0x54] sm:$0xf]
      %v805 = vsel %vm752, %v554, %v804
      %806 = vst [vmem:[%s749 + $0x54] sm:$0xf] %v805
      %807 = vst [vmem:[%s749 + $0x58] sm:$0xf] %v563
      %v808 = vld [vmem:[%s749 + $0x5c] sm:$0x1]
      %v809 = vsel %vm758, %v564, %v808
      %810 = vst [vmem:[%s749 + $0x5c] sm:$0x1] %v809
      %v811 = vld [vmem:[%s749 + $0x60] sm:$0xf]
      %v812 = vsel %vm752, %v571, %v811
      %813 = vst [vmem:[%s749 + $0x60] sm:$0xf] %v812
      %814 = vst [vmem:[%s749 + $0x64] sm:$0xf] %v580
      %v815 = vld [vmem:[%s749 + $0x68] sm:$0x1]
      %v816 = vsel %vm758, %v581, %v815
      %817 = vst [vmem:[%s749 + $0x68] sm:$0x1] %v816
      %v818 = vld [vmem:[%s749 + $0x6c] sm:$0xf]
      %v819 = vsel %vm752, %v588, %v818
      %820 = vst [vmem:[%s749 + $0x6c] sm:$0xf] %v819
      %821 = vst [vmem:[%s749 + $0x70] sm:$0xf] %v597
      %v822 = vld [vmem:[%s749 + $0x74] sm:$0x1]
      %v823 = vsel %vm758, %v598, %v822
      %824 = vst [vmem:[%s749 + $0x74] sm:$0x1] %v823
      %v825 = vld [vmem:[%s749 + $0x78] sm:$0xf]
      %v826 = vsel %vm752, %v605, %v825
      %827 = vst [vmem:[%s749 + $0x78] sm:$0xf] %v826
      %828 = vst [vmem:[%s749 + $0x7c] sm:$0xf] %v614
      %v829 = vld [vmem:[%s749 + $0x80] sm:$0x1]
      %v830 = vsel %vm758, %v615, %v829
      %831 = vst [vmem:[%s749 + $0x80] sm:$0x1] %v830
      %v832 = vld [vmem:[%s749 + $0x84] sm:$0xf]
      %v833 = vsel %vm752, %v622, %v832
      %834 = vst [vmem:[%s749 + $0x84] sm:$0xf] %v833
      %835 = vst [vmem:[%s749 + $0x88] sm:$0xf] %v631
      %v836 = vld [vmem:[%s749 + $0x8c] sm:$0x1]
      %v837 = vsel %vm758, %v632, %v836
      %838 = vst [vmem:[%s749 + $0x8c] sm:$0x1] %v837
      %v839 = vld [vmem:[%s749 + $0x90] sm:$0xf]
      %v840 = vsel %vm752, %v639, %v839
      %841 = vst [vmem:[%s749 + $0x90] sm:$0xf] %v840
      %842 = vst [vmem:[%s749 + $0x94] sm:$0xf] %v648
      %v843 = vld [vmem:[%s749 + $0x98] sm:$0x1]
      %v844 = vsel %vm758, %v649, %v843
      %845 = vst [vmem:[%s749 + $0x98] sm:$0x1] %v844
      %v846 = vld [vmem:[%s749 + $0x9c] sm:$0xf]
      %v847 = vsel %vm752, %v656, %v846
      %848 = vst [vmem:[%s749 + $0x9c] sm:$0xf] %v847
      %849 = vst [vmem:[%s749 + $0xa0] sm:$0xf] %v665
      %v850 = vld [vmem:[%s749 + $0xa4] sm:$0x1]
      %v851 = vsel %vm758, %v666, %v850
      %852 = vst [vmem:[%s749 + $0xa4] sm:$0x1] %v851
      %v853 = vld [vmem:[%s749 + $0xa8] sm:$0xf]
      %v854 = vsel %vm752, %v673, %v853
      %855 = vst [vmem:[%s749 + $0xa8] sm:$0xf] %v854
      %856 = vst [vmem:[%s749 + $0xac] sm:$0xf] %v682
      %v857 = vld [vmem:[%s749 + $0xb0] sm:$0x1]
      %v858 = vsel %vm758, %v683, %v857
      %859 = vst [vmem:[%s749 + $0xb0] sm:$0x1] %v858
      %v860 = vld [vmem:[%s749 + $0xb4] sm:$0xf]
      %v861 = vsel %vm752, %v690, %v860
      %862 = vst [vmem:[%s749 + $0xb4] sm:$0xf] %v861
      %863 = vst [vmem:[%s749 + $0xb8] sm:$0xf] %v699
      %v864 = vld [vmem:[%s749 + $0xbc] sm:$0x1]
      %v865 = vsel %vm758, %v700, %v864
      %866 = vst [vmem:[%s749 + $0xbc] sm:$0x1] %v865
      %p867 = scmp.lt.s32.totalorder %s14, 1
      %s868 = scalar_select %p867, %s14, 1
      %s869 = smul.addr %s868, 54
      %s870 = smul.addr %s869, 4
      %s871 = scalar_lea.vmem %s3, %s870
      // Predicated region
      $region33: #{basic_block_forward.5} parent=31 // pred_check
        %p872 = pneg %p100
      $region34: #{basic_block_forward.5} parent=31 // pred_check_branch
        %874 = sbr.rel (%p872) target = $region36
      $region35: #{basic_block_forward.5} parent=31 // pred_region
        _
      $region36: #{basic_block_forward.5} parent=31 // pred_fallthru
        _
    $region32: #{basic_block_forward.5} parent=5 // pred_fallthru
      _
    %p875 = scmp.le.s32.totalorder 2, %s9
    // Predicated region
    $region37: #{basic_block_forward.5} parent=5 // pred_check
      %p876 = pneg %p875
    $region38: #{basic_block_forward.5} parent=5 // pred_check_branch
      %878 = sbr.rel (%p876) target = $region40
    $region39: #{basic_block_forward.5} parent=5 // pred_region
      %s879 = ssub.s32 %s9, 2
      // Predicated region
      $region41: #{basic_block_forward.5} parent=39 // pred_check
        %p880 = pneg %p106
      $region42: #{basic_block_forward.5} parent=39 // pred_check_branch
        %882 = sbr.rel (%p880) target = $region44
      $region43: #{basic_block_forward.5} parent=39 // pred_region
        %p883 = scmp.lt.s32.totalorder %s15, 1
        %s884 = scalar_select %p883, %s15, 1
        %s885 = smul.addr %s884, 54
        %s886 = smul.addr %s885, 4
        %s887 = scalar_lea.vmem %s3, %s886
      $region44: #{basic_block_forward.5} parent=39 // pred_fallthru
        _
    $region40: #{basic_block_forward.5} parent=5 // pred_fallthru
      _
  $region6: #{basic_block_forward.5} parent=0 // loop_footer
    %s13 = sadd.s32 1, %s9
  $region7: #{basic_block_forward.5} parent=0 // loop_footer_branch
    %8 = sbr.rel target = $region3
  $region8: #{basic_block_forward.5} parent=0 // loop_exit
    _

// kernel: basic_block_forward.4
$region0: #{basic_block_forward.4}
  #allocation0 [shape = 'u32[]', space=smem, size = 0x4, offset = 0x4, fixed_abs, tag = 'smem constant byte address 0x4 - core index']
  #allocation1 [shape = 'u32[72,128]{1,0:T(1,128)}', space=vmem, size = 0x9000, scoped, tag = 'internal scratch']
  %s0 = inlined_call_operand.vmem [shape: bf16[2,18,18,128], index: 0, kind: input, shape index: {}]
  %s1 = inlined_call_operand.vmem [shape: bf16[1152,128], index: 1, kind: input, shape index: {}]
  %s2 = inlined_call_operand.vmem [shape: bf16[2,16,16,128], index: 2, kind: output, shape index: {0}]
  %s3 = inlined_call_operand.vmem [shape: f32[2,1,128], index: 3, kind: output, shape index: {1}]
  %s4 = inlined_call_operand.vmem [shape: f32[2,1,128], index: 4, kind: output, shape index: {2}]
  %5 = xla_tuple %s2, %s3, %s4
  %s6 = sld [smem:[#allocation0]]
  $region57: #{basic_block_forward.4} parent=0
    _
  %s8 = ssub.s32 1, %s6
  %s9 = scalar_select 0, %s8, %s6
  loop: start=0, step=1, limit=4
  $region2: #{basic_block_forward.4} parent=0 // loop_pre_header
    _
  $region3: #{basic_block_forward.4} parent=0 // loop_header
    %s11 = sphi 0, %s15
    %p12 = scmp.ge.s32.totalorder %s11, 4
    %s18 = sphi 0, %s30
    %s19 = sphi 0, %s26
    %s20 = sphi 0, %s18
    %s21 = sphi 0, %s19
    %s22 = sphi 0, %s20
    %s23 = sphi 0, %s21
    %s33 = sphi 0, %s35
    %s36 = sphi 0, %s33
    %s37 = sphi 0, %s36
    %s53 = sphi 0, %s37
    %s57 = sphi 0, %s57
    %s59 = sphi 0, %s57
    %s60 = sphi 0, %s59
    %s74 = sphi 0, %s60
    %s82 = sphi 0, %s84
    %s85 = sphi 0, %s82
    %s86 = sphi 0, %s85
    %s102 = sphi 0, %s86
    %s110 = sphi 0, %s112
    %s113 = sphi 0, %s110
    %s114 = sphi 0, %s113
    %s130 = sphi 0, %s114
    %s138 = sphi 0, %s140
    %s141 = sphi 0, %s138
    %s142 = sphi 0, %s141
    %s158 = sphi 0, %s142
  $region4: #{basic_block_forward.4} parent=0 // loop_header_branch
    %14 = sbr.rel (%p12) target = $region8
  $region5: #{basic_block_forward.4} parent=0 // loop_body
    %s16 = ssub.s32 %s11, 1
    %s17 = ssub.s32 %s11, 2
    %s24 = sadd.s32 1, %s19
    %p25 = scmp.ge.s32.totalorder %s24, 1
    %s26 = scalar_select %p25, 0, %s24
    %s27 = sadd.s32 1, %s18
    %s28 = scalar_select %p25, %s27, %s18
    %p29 = scmp.ge.s32.totalorder %s28, 2
    %s30 = scalar_select %p29, 0, %s28
    %s31 = ssub.s32 %s18, %s30
    %p32 = scmp.eq.s32.totalorder %s31, 0
    %s34 = sadd.s32 %s33, 1
    %s35 = scalar_select %p32, %s33, %s34
    %p38 = pneg %p32
    %p39 = scmp.eq.s32.totalorder %s11, 1
    %p40 = por %p38, %p39
    %p41 = scmp.ne.s32.totalorder %s33, %s36
    %p42 = scmp.eq.s32.totalorder %s11, 0
    %p43 = por %p41, %p42
    %p44 = scmp.ne.s32.totalorder %s33, %s36
    %p45 = scmp.eq.s32.totalorder %s16, 1
    %p46 = por %p44, %p45
    %p47 = scmp.ne.s32.totalorder %s36, %s37
    %p48 = scmp.eq.s32.totalorder %s16, 0
    %p49 = por %p47, %p48
    %p50 = scmp.ne.s32.totalorder %s36, %s37
    %p51 = scmp.eq.s32.totalorder %s17, 1
    %p52 = por %p50, %p51
    %p54 = scmp.ne.s32.totalorder %s37, %s53
    %p55 = scmp.eq.s32.totalorder %s17, 0
    %p56 = por %p54, %p55
    %s58 = sadd.s32 %s57, 1
    %p61 = scmp.eq.s32.totalorder %s11, 1
    %p62 = scmp.ne.s32.totalorder %s57, %s59
    %p63 = scmp.eq.s32.totalorder %s11, 0
    %p64 = por %p62, %p63
    %p65 = scmp.ne.s32.totalorder %s57, %s59
    %p66 = scmp.eq.s32.totalorder %s16, 1
    %p67 = por %p65, %p66
    %p68 = scmp.ne.s32.totalorder %s59, %s60
    %p69 = scmp.eq.s32.totalorder %s16, 0
    %p70 = por %p68, %p69
    %p71 = scmp.ne.s32.totalorder %s59, %s60
    %p72 = scmp.eq.s32.totalorder %s17, 1
    %p73 = por %p71, %p72
    %p75 = scmp.ne.s32.totalorder %s60, %s74
    %p76 = scmp.eq.s32.totalorder %s17, 0
    %p77 = por %p75, %p76
    %s78 = ssub.s32 %s18, %s30
    %s79 = ssub.s32 %s19, %s26
    %s80 = sor.u32 %s78, %s79
    %p81 = scmp.eq.s32.totalorder %s80, 0
    %s83 = sadd.s32 %s82, 1
    %s84 = scalar_select %p81, %s82, %s83
    %p87 = pneg %p81
    %p88 = scmp.eq.s32.totalorder %s11, 1
    %p89 = por %p87, %p88
    %p90 = scmp.ne.s32.totalorder %s82, %s85
    %p91 = scmp.eq.s32.totalorder %s11, 0
    %p92 = por %p90, %p91
    %p93 = scmp.ne.s32.totalorder %s82, %s85
    %p94 = scmp.eq.s32.totalorder %s16, 1
    %p95 = por %p93, %p94
    %p96 = scmp.ne.s32.totalorder %s85, %s86
    %p97 = scmp.eq.s32.totalorder %s16, 0
    %p98 = por %p96, %p97
    %p99 = scmp.ne.s32.totalorder %s85, %s86
    %p100 = scmp.eq.s32.totalorder %s17, 1
    %p101 = por %p99, %p100
    %p103 = scmp.ne.s32.totalorder %s86, %s102
    %p104 = scmp.eq.s32.totalorder %s17, 0
    %p105 = por %p103, %p104
    %s106 = sadd.s32 %s18, %s19
    %s107 = sadd.s32 %s30, %s26
    %s108 = ssub.s32 %s106, %s107
    %p109 = scmp.eq.s32.totalorder %s108, 0
    %s111 = sadd.s32 %s110, 1
    %s112 = scalar_select %p109, %s110, %s111
    %p115 = pneg %p109
    %p116 = scmp.eq.s32.totalorder %s11, 1
    %p117 = por %p115, %p116
    %p118 = scmp.ne.s32.totalorder %s110, %s113
    %p119 = scmp.eq.s32.totalorder %s11, 0
    %p120 = por %p118, %p119
    %p121 = scmp.ne.s32.totalorder %s110, %s113
    %p122 = scmp.eq.s32.totalorder %s16, 1
    %p123 = por %p121, %p122
    %p124 = scmp.ne.s32.totalorder %s113, %s114
    %p125 = scmp.eq.s32.totalorder %s16, 0
    %p126 = por %p124, %p125
    %p127 = scmp.ne.s32.totalorder %s113, %s114
    %p128 = scmp.eq.s32.totalorder %s17, 1
    %p129 = por %p127, %p128
    %p131 = scmp.ne.s32.totalorder %s114, %s130
    %p132 = scmp.eq.s32.totalorder %s17, 0
    %p133 = por %p131, %p132
    %s134 = sadd.s32 %s18, %s19
    %s135 = sadd.s32 %s30, %s26
    %s136 = ssub.s32 %s134, %s135
    %p137 = scmp.eq.s32.totalorder %s136, 0
    %s139 = sadd.s32 %s138, 1
    %s140 = scalar_select %p137, %s138, %s139
    %p143 = pneg %p137
    %p144 = scmp.eq.s32.totalorder %s11, 1
    %p145 = por %p143, %p144
    %p146 = scmp.ne.s32.totalorder %s138, %s141
    %p147 = scmp.eq.s32.totalorder %s11, 0
    %p148 = por %p146, %p147
    %p149 = scmp.ne.s32.totalorder %s138, %s141
    %p150 = scmp.eq.s32.totalorder %s16, 1
    %p151 = por %p149, %p150
    %p152 = scmp.ne.s32.totalorder %s141, %s142
    %p153 = scmp.eq.s32.totalorder %s16, 0
    %p154 = por %p152, %p153
    %p155 = scmp.ne.s32.totalorder %s141, %s142
    %p156 = scmp.eq.s32.totalorder %s17, 1
    %p157 = por %p155, %p156
    %p159 = scmp.ne.s32.totalorder %s142, %s158
    %p160 = scmp.eq.s32.totalorder %s17, 0
    %p161 = por %p159, %p160
    %p162 = scmp.le.s32.totalorder 1, %s11
    %p163 = scmp.lt.s32.totalorder %s11, 3
    %p164 = pnand %p162, %p163
    %p165 = pneg %p164
    // Predicated region
    $region9: #{basic_block_forward.4} parent=5 // pred_check
      _
    $region10: #{basic_block_forward.4} parent=5 // pred_check_branch
      %167 = sbr.rel (%p164) target = $region12
    $region11: #{basic_block_forward.4} parent=5 // pred_region
      %s168 = ssub.s32 %s11, 1
      // Predicated region
      $region13: #{basic_block_forward.4} parent=11 // pred_check
        %p169 = pneg %p70
      $region14: #{basic_block_forward.4} parent=11 // pred_check_branch
        %171 = sbr.rel (%p169) target = $region16
      $region15: #{basic_block_forward.4} parent=11 // pred_region
        _
      $region16: #{basic_block_forward.4} parent=11 // pred_fallthru
        _
    $region12: #{basic_block_forward.4} parent=5 // pred_fallthru
      _
    %p172 = scmp.lt.s32.totalorder %s11, 2
    // Predicated region
    $region17: #{basic_block_forward.4} parent=5 // pred_check
      %p173 = pneg %p172
    $region18: #{basic_block_forward.4} parent=5 // pred_check_branch
      %175 = sbr.rel (%p173) target = $region20
    $region19: #{basic_block_forward.4} parent=5 // pred_region
      // Predicated region
      $region21: #{basic_block_forward.4} parent=19 // pred_check
        %p176 = pneg %p43
      $region22: #{basic_block_forward.4} parent=19 // pred_check_branch
        %178 = sbr.rel (%p176) target = $region24
      $region23: #{basic_block_forward.4} parent=19 // pred_region
        %p179 = scmp.lt.s32.totalorder %s18, 1
        %s180 = scalar_select %p179, %s18, 1
        %s181 = smul.addr %s180, 54
        %s182 = smul.addr %s181, 4
        %s183 = scalar_lea.vmem %s0, %s182
      $region24: #{basic_block_forward.4} parent=19 // pred_fallthru
        _
    $region20: #{basic_block_forward.4} parent=5 // pred_fallthru
      _
    %p184 = scmp.le.s32.totalorder 1, %s11
    %p185 = scmp.lt.s32.totalorder %s11, 3
    %p186 = pnand %p184, %p185
    %p187 = pneg %p186
    // Predicated region
    $region25: #{basic_block_forward.4} parent=5 // pred_check
      _
    $region26: #{basic_block_forward.4} parent=5 // pred_check_branch
      %189 = sbr.rel (%p186) target = $region28
    $region27: #{basic_block_forward.4} parent=5 // pred_region
      %s190 = ssub.s32 %s11, 1
      %p191 = scmp.lt.s32.totalorder %s20, 1
      %s192 = scalar_select %p191, %s20, 1
      %s193 = smul.addr %s192, 54
      %s194 = smul.addr %s193, 4
      %s195 = scalar_lea.vmem %s0, %s194
      %p196 = pneg %p49
      %p197 = pneg %p46
      %p198 = pneg %p70
      %p199 = pneg %p67
      %p200 = pneg %p98
      %p201 = pneg %p95
      %s202 = smul.u32 16, %s21
      %p203 = scmp.lt.s32.totalorder %s20, 1
      %s204 = scalar_select %p203, %s20, 1
      %p205 = scmp.lt.s32.totalorder %s202, 15
      %s206 = scalar_select %p205, %s202, 15
      %s207 = smul.addr %s206, 2
      %s208 = smul.addr %s204, 32
      %s209 = sadd.s32 %s207, %s208
      %s210 = smul.addr %s209, 4
      %s211 = scalar_lea.vmem %s2, %s210
      %p212 = pneg %p126
      %p213 = pneg %p123
      %s214 = sadd.s32 %s20, %s21
      %p215 = scmp.lt.s32.totalorder %s214, 1
      %s216 = scalar_select %p215, %s214, 1
      %s217 = scalar_lea.vmem %s3, %s216
      %p218 = pneg %p154
      %p219 = pneg %p151
      %s220 = sadd.s32 %s20, %s21
      %p221 = scmp.lt.s32.totalorder %s220, 1
      %s222 = scalar_select %p221, %s220, 1
      %s223 = scalar_lea.vmem %s4, %s222
      %p224 = scmp.lt.s32.totalorder %s20, 1
      %s225 = scalar_select %p224, %s20, 1
      %s226 = smul.addr %s225, 54
      %s227 = smul.addr %s226, 4
      %s228 = scalar_lea.vmem %s0, %s227
      %s229 = smul.u32 16, %s21
      %p230 = scmp.lt.s32.totalorder %s20, 1
      %s231 = scalar_select %p230, %s20, 1
      %p232 = scmp.lt.s32.totalorder %s229, 15
      %s233 = scalar_select %p232, %s229, 15
      %s234 = smul.addr %s233, 2
      %s235 = smul.addr %s231, 32
      %s236 = sadd.s32 %s234, %s235
      %s237 = smul.addr %s236, 4
      %s238 = scalar_lea.vmem %s2, %s237
      %s239 = smul.u32 16, %s21
      %s240 = sadd.s32 %s20, %s21
      %p241 = scmp.lt.s32.totalorder %s240, 1
      %s242 = scalar_select %p241, %s240, 1
      %s243 = scalar_lea.vmem %s3, %s242
      %s244 = sadd.s32 %s20, %s21
      %s245 = sadd.s32 %s20, %s21
      %p246 = scmp.lt.s32.totalorder %s245, 1
      %s247 = scalar_select %p246, %s245, 1
      %s248 = scalar_lea.vmem %s4, %s247
      %s249 = sadd.s32 %s20, %s21
      %s250 = smul.u32 %s21, 16
      %s251 = smul.u32 %s250, 3
      %s252 = smul.addr %s251, 4
      %s253 = scalar_lea.vmem %s228, %s252
      %v254 = vld [vmem:[%s253] sm:$0xf]
      %v255 = vld [vmem:[%s253 + $0x4] sm:$0xf]
      %v256 = vld [vmem:[%s253 + $0xc] sm:$0xf]
      %v257 = vld [vmem:[%s253 + $0x10] sm:$0xf]
      %v258 = vld [vmem:[%s253 + $0x18] sm:$0xf]
      %v259 = vld [vmem:[%s253 + $0x1c] sm:$0xf]
      %v260 = vld [vmem:[%s253 + $0x24] sm:$0xf]
      %v261 = vld [vmem:[%s253 + $0x28] sm:$0xf]
      %v262 = vld [vmem:[%s253 + $0x30] sm:$0xf]
      %v263 = vld [vmem:[%s253 + $0x34] sm:$0xf]
      %v264 = vld [vmem:[%s253 + $0x3c] sm:$0xf]
      %v265 = vld [vmem:[%s253 + $0x40] sm:$0xf]
      %v266 = vld [vmem:[%s253 + $0x48] sm:$0xf]
      %v267 = vld [vmem:[%s253 + $0x4c] sm:$0xf]
      %v268 = vld [vmem:[%s253 + $0x54] sm:$0xf]
      %v269 = vld [vmem:[%s253 + $0x58] sm:$0xf]
      %v270 = vld [vmem:[%s253 + $0x60] sm:$0xf]
      %v271 = vld [vmem:[%s253 + $0x64] sm:$0xf]
      %v272 = vld [vmem:[%s253 + $0x6c] sm:$0xf]
      %v273 = vld [vmem:[%s253 + $0x70] sm:$0xf]
      %v274 = vld [vmem:[%s253 + $0x78] sm:$0xf]
      %v275 = vld [vmem:[%s253 + $0x7c] sm:$0xf]
      %v276 = vld [vmem:[%s253 + $0x84] sm:$0xf]
      %v277 = vld [vmem:[%s253 + $0x88] sm:$0xf]
      %v278 = vld [vmem:[%s253 + $0x90] sm:$0xf]
      %v279 = vld [vmem:[%s253 + $0x94] sm:$0xf]
      %v280 = vld [vmem:[%s253 + $0x9c] sm:$0xf]
      %v281 = vld [vmem:[%s253 + $0xa0] sm:$0xf]
      %v282 = vld [vmem:[%s253 + $0xa8] sm:$0xf]
      %v283 = vld [vmem:[%s253 + $0xac] sm:$0xf]
      %v284 = vld [vmem:[%s253 + $0xb4] sm:$0xf]
      %v285 = vld [vmem:[%s253 + $0xb8] sm:$0xf]
      %v286 = vld [vmem:[%s253 + $0x8] sm:$0x1]
      %v287 = vld [vmem:[%s253 + $0x14] sm:$0x1]
      %v288 = vld [vmem:[%s253 + $0x20] sm:$0x1]
      %v289 = vld [vmem:[%s253 + $0x2c] sm:$0x1]
      %v290 = vld [vmem:[%s253 + $0x38] sm:$0x1]
      %v291 = vld [vmem:[%s253 + $0x44] sm:$0x1]
      %v292 = vld [vmem:[%s253 + $0x50] sm:$0x1]
      %v293 = vld [vmem:[%s253 + $0x5c] sm:$0x1]
      %v294 = vld [vmem:[%s253 + $0x68] sm:$0x1]
      %v295 = vld [vmem:[%s253 + $0x74] sm:$0x1]
      %v296 = vld [vmem:[%s253 + $0x80] sm:$0x1]
      %v297 = vld [vmem:[%s253 + $0x8c] sm:$0x1]
      %v298 = vld [vmem:[%s253 + $0x98] sm:$0x1]
      %v299 = vld [vmem:[%s253 + $0xa4] sm:$0x1]
      %v300 = vld [vmem:[%s253 + $0xb0] sm:$0x1]
      %v301 = vld [vmem:[%s253 + $0xbc] sm:$0x1]
      %v302 = vld [vmem:[%s253] sm:$0xe]
      %v303 = vld [vmem:[%s253 + $0xc] sm:$0xe]
      %v304 = vld [vmem:[%s253 + $0x18] sm:$0xe]
      %v305 = vld [vmem:[%s253 + $0x24] sm:$0xe]
      %v306 = vld [vmem:[%s253 + $0x30] sm:$0xe]
      %v307 = vld [vmem:[%s253 + $0x3c] sm:$0xe]
      %v308 = vld [vmem:[%s253 + $0x48] sm:$0xe]
      %v309 = vld [vmem:[%s253 + $0x54] sm:$0xe]
      %v310 = vld [vmem:[%s253 + $0x60] sm:$0xe]
      %v311 = vld [vmem:[%s253 + $0x6c] sm:$0xe]
      %v312 = vld [vmem:[%s253 + $0x78] sm:$0xe]
      %v313 = vld [vmem:[%s253 + $0x84] sm:$0xe]
      %v314 = vld [vmem:[%s253 + $0x90] sm:$0xe]
      %v315 = vld [vmem:[%s253 + $0x9c] sm:$0xe]
      %v316 = vld [vmem:[%s253 + $0xa8] sm:$0xe]
      %v317 = vld [vmem:[%s253 + $0xb4] sm:$0xe]
      %s318 = sadd.s32 %s250, 1
      %s319 = smul.u32 %s318, 3
      %s320 = smul.addr %s319, 4
      %s321 = scalar_lea.vmem %s228, %s320
      %v322 = vld [vmem:[%s321] sm:$0xf]
      %v323 = vld [vmem:[%s321 + $0x4] sm:$0xf]
      %v324 = vld [vmem:[%s321 + $0xc] sm:$0xf]
      %v325 = vld [vmem:[%s321 + $0x10] sm:$0xf]
      %v326 = vld [vmem:[%s321 + $0x18] sm:$0xf]
      %v327 = vld [vmem:[%s321 + $0x1c] sm:$0xf]
      %v328 = vld [vmem:[%s321 + $0x24] sm:$0xf]
      %v329 = vld [vmem:[%s321 + $0x28] sm:$0xf]
      %v330 = vld [vmem:[%s321 + $0x30] sm:$0xf]
      %v331 = vld [vmem:[%s321 + $0x34] sm:$0xf]
      %v332 = vld [vmem:[%s321 + $0x3c] sm:$0xf]
      %v333 = vld [vmem:[%s321 + $0x40] sm:$0xf]
      %v334 = vld [vmem:[%s321 + $0x48] sm:$0xf]
      %v335 = vld [vmem:[%s321 + $0x4c] sm:$0xf]
      %v336 = vld [vmem:[%s321 + $0x54] sm:$0xf]
      %v337 = vld [vmem:[%s321 + $0x58] sm:$0xf]
      %v338 = vld [vmem:[%s321 + $0x60] sm:$0xf]
      %v339 = vld [vmem:[%s321 + $0x64] sm:$0xf]
      %v340 = vld [vmem:[%s321 + $0x6c] sm:$0xf]
      %v341 = vld [vmem:[%s321 + $0x70] sm:$0xf]
      %v342 = vld [vmem:[%s321 + $0x78] sm:$0xf]
      %v343 = vld [vmem:[%s321 + $0x7c] sm:$0xf]
      %v344 = vld [vmem:[%s321 + $0x84] sm:$0xf]
      %v345 = vld [vmem:[%s321 + $0x88] sm:$0xf]
      %v346 = vld [vmem:[%s321 + $0x90] sm:$0xf]
      %v347 = vld [vmem:[%s321 + $0x94] sm:$0xf]
      %v348 = vld [vmem:[%s321 + $0x9c] sm:$0xf]
      %v349 = vld [vmem:[%s321 + $0xa0] sm:$0xf]
      %v350 = vld [vmem:[%s321 + $0xa8] sm:$0xf]
      %v351 = vld [vmem:[%s321 + $0xac] sm:$0xf]
      %v352 = vld [vmem:[%s321 + $0xb4] sm:$0xf]
      %v353 = vld [vmem:[%s321 + $0xb8] sm:$0xf]
      %v354 = vld [vmem:[%s321 + $0x8] sm:$0x1]
      %v355 = vld [vmem:[%s321 + $0x14] sm:$0x1]
      %v356 = vld [vmem:[%s321 + $0x20] sm:$0x1]
      %v357 = vld [vmem:[%s321 + $0x2c] sm:$0x1]
      %v358 = vld [vmem:[%s321 + $0x38] sm:$0x1]
      %v359 = vld [vmem:[%s321 + $0x44] sm:$0x1]
      %v360 = vld [vmem:[%s321 + $0x50] sm:$0x1]
      %v361 = vld [vmem:[%s321 + $0x5c] sm:$0x1]
      %v362 = vld [vmem:[%s321 + $0x68] sm:$0x1]
      %v363 = vld [vmem:[%s321 + $0x74] sm:$0x1]
      %v364 = vld [vmem:[%s321 + $0x80] sm:$0x1]
      %v365 = vld [vmem:[%s321 + $0x8c] sm:$0x1]
      %v366 = vld [vmem:[%s321 + $0x98] sm:$0x1]
      %v367 = vld [vmem:[%s321 + $0xa4] sm:$0x1]
      %v368 = vld [vmem:[%s321 + $0xb0] sm:$0x1]
      %v369 = vld [vmem:[%s321 + $0xbc] sm:$0x1]
      %v370 = vld [vmem:[%s321] sm:$0xe]
      %v371 = vld [vmem:[%s321 + $0xc] sm:$0xe]
      %v372 = vld [vmem:[%s321 + $0x18] sm:$0xe]
      %v373 = vld [vmem:[%s321 + $0x24] sm:$0xe]
      %v374 = vld [vmem:[%s321 + $0x30] sm:$0xe]
      %v375 = vld [vmem:[%s321 + $0x3c] sm:$0xe]
      %v376 = vld [vmem:[%s321 + $0x48] sm:$0xe]
      %v377 = vld [vmem:[%s321 + $0x54] sm:$0xe]
      %v378 = vld [vmem:[%s321 + $0x60] sm:$0xe]
      %v379 = vld [vmem:[%s321 + $0x6c] sm:$0xe]
      %v380 = vld [vmem:[%s321 + $0x78] sm:$0xe]
      %v381 = vld [vmem:[%s321 + $0x84] sm:$0xe]
      %v382 = vld [vmem:[%s321 + $0x90] sm:$0xe]
      %v383 = vld [vmem:[%s321 + $0x9c] sm:$0xe]
      %v384 = vld [vmem:[%s321 + $0xa8] sm:$0xe]
      %v385 = vld [vmem:[%s321 + $0xb4] sm:$0xe]
      %s386 = sadd.s32 %s250, 2
      %s387 = smul.u32 %s386, 3
      %s388 = smul.addr %s387, 4
      %s389 = scalar_lea.vmem %s228, %s388
      %v390 = vld [vmem:[%s389] sm:$0xf]
      %v391 = vld [vmem:[%s389 + $0x4] sm:$0xf]
      %v392 = vld [vmem:[%s389 + $0xc] sm:$0xf]
      %v393 = vld [vmem:[%s389 + $0x10] sm:$0xf]
      %v394 = vld [vmem:[%s389 + $0x18] sm:$0xf]
      %v395 = vld [vmem:[%s389 + $0x1c] sm:$0xf]
      %v396 = vld [vmem:[%s389 + $0x24] sm:$0xf]
      %v397 = vld [vmem:[%s389 + $0x28] sm:$0xf]
      %v398 = vld [vmem:[%s389 + $0x30] sm:$0xf]
      %v399 = vld [vmem:[%s389 + $0x34] sm:$0xf]
      %v400 = vld [vmem:[%s389 + $0x3c] sm:$0xf]
      %v401 = vld [vmem:[%s389 + $0x40] sm:$0xf]
      %v402 = vld [vmem:[%s389 + $0x48] sm:$0xf]
      %v403 = vld [vmem:[%s389 + $0x4c] sm:$0xf]
      %v404 = vld [vmem:[%s389 + $0x54] sm:$0xf]
      %v405 = vld [vmem:[%s389 + $0x58] sm:$0xf]
      %v406 = vld [vmem:[%s389 + $0x60] sm:$0xf]
      %v407 = vld [vmem:[%s389 + $0x64] sm:$0xf]
      %v408 = vld [vmem:[%s389 + $0x6c] sm:$0xf]
      %v409 = vld [vmem:[%s389 + $0x70] sm:$0xf]
      %v410 = vld [vmem:[%s389 + $0x78] sm:$0xf]
      %v411 = vld [vmem:[%s389 + $0x7c] sm:$0xf]
      %v412 = vld [vmem:[%s389 + $0x84] sm:$0xf]
      %v413 = vld [vmem:[%s389 + $0x88] sm:$0xf]
      %v414 = vld [vmem:[%s389 + $0x90] sm:$0xf]
      %v415 = vld [vmem:[%s389 + $0x94] sm:$0xf]
      %v416 = vld [vmem:[%s389 + $0x9c] sm:$0xf]
      %v417 = vld [vmem:[%s389 + $0xa0] sm:$0xf]
      %v418 = vld [vmem:[%s389 + $0xa8] sm:$0xf]
      %v419 = vld [vmem:[%s389 + $0xac] sm:$0xf]
      %v420 = vld [vmem:[%s389 + $0xb4] sm:$0xf]
      %v421 = vld [vmem:[%s389 + $0xb8] sm:$0xf]
      %v422 = vld [vmem:[%s389 + $0x8] sm:$0x1]
      %v423 = vld [vmem:[%s389 + $0x14] sm:$0x1]
      %v424 = vld [vmem:[%s389 + $0x20] sm:$0x1]
      %v425 = vld [vmem:[%s389 + $0x2c] sm:$0x1]
      %v426 = vld [vmem:[%s389 + $0x38] sm:$0x1]
      %v427 = vld [vmem:[%s389 + $0x44] sm:$0x1]
      %v428 = vld [vmem:[%s389 + $0x50] sm:$0x1]
      %v429 = vld [vmem:[%s389 + $0x5c] sm:$0x1]
      %v430 = vld [vmem:[%s389 + $0x68] sm:$0x1]
      %v431 = vld [vmem:[%s389 + $0x74] sm:$0x1]
      %v432 = vld [vmem:[%s389 + $0x80] sm:$0x1]
      %v433 = vld [vmem:[%s389 + $0x8c] sm:$0x1]
      %v434 = vld [vmem:[%s389 + $0x98] sm:$0x1]
      %v435 = vld [vmem:[%s389 + $0xa4] sm:$0x1]
      %v436 = vld [vmem:[%s389 + $0xb0] sm:$0x1]
      %v437 = vld [vmem:[%s389 + $0xbc] sm:$0x1]
      %v438 = vld [vmem:[%s389] sm:$0xe]
      %v439 = vld [vmem:[%s389 + $0xc] sm:$0xe]
      %v440 = vld [vmem:[%s389 + $0x18] sm:$0xe]
      %v441 = vld [vmem:[%s389 + $0x24] sm:$0xe]
      %v442 = vld [vmem:[%s389 + $0x30] sm:$0xe]
      %v443 = vld [vmem:[%s389 + $0x3c] sm:$0xe]
      %v444 = vld [vmem:[%s389 + $0x48] sm:$0xe]
      %v445 = vld [vmem:[%s389 + $0x54] sm:$0xe]
      %v446 = vld [vmem:[%s389 + $0x60] sm:$0xe]
      %v447 = vld [vmem:[%s389 + $0x6c] sm:$0xe]
      %v448 = vld [vmem:[%s389 + $0x78] sm:$0xe]
      %v449 = vld [vmem:[%s389 + $0x84] sm:$0xe]
      %v450 = vld [vmem:[%s389 + $0x90] sm:$0xe]
      %v451 = vld [vmem:[%s389 + $0x9c] sm:$0xe]
      %v452 = vld [vmem:[%s389 + $0xa8] sm:$0xe]
      %v453 = vld [vmem:[%s389 + $0xb4] sm:$0xe]
      %v486 = vunpack.c.l.b16 %v254
      %v487 = vunpack.c.l.b16 %v255
      %v488 = vunpack.c.l.b16 %v256
      %v489 = vunpack.c.l.b16 %v257
      %v490 = vunpack.c.l.b16 %v258
      %v491 = vunpack.c.l.b16 %v259
      %v492 = vunpack.c.l.b16 %v260
      %v493 = vunpack.c.l.b16 %v261
      %v494 = vunpack.c.l.b16 %v262
      %v495 = vunpack.c.l.b16 %v263
      %v496 = vunpack.c.l.b16 %v264
      %v497 = vunpack.c.l.b16 %v265
      %v498 = vunpack.c.l.b16 %v266
      %v499 = vunpack.c.l.b16 %v267
      %v500 = vunpack.c.l.b16 %v268
      %v501 = vunpack.c.l.b16 %v269
      %v502 = vunpack.c.l.b16 %v270
      %v503 = vunpack.c.l.b16 %v271
      %v504 = vunpack.c.l.b16 %v272
      %v505 = vunpack.c.l.b16 %v273
      %v506 = vunpack.c.l.b16 %v274
      %v507 = vunpack.c.l.b16 %v275
      %v508 = vunpack.c.l.b16 %v276
      %v509 = vunpack.c.l.b16 %v277
      %v510 = vunpack.c.l.b16 %v278
      %v511 = vunpack.c.l.b16 %v279
      %v512 = vunpack.c.l.b16 %v280
      %v513 = vunpack.c.l.b16 %v281
      %v514 = vunpack.c.l.b16 %v282
      %v515 = vunpack.c.l.b16 %v283
      %v516 = vunpack.c.l.b16 %v284
      %v517 = vunpack.c.l.b16 %v285
      %v518 = vpack.c.b16 %v487, %v486
      %v519 = vpack.c.b16 %v489, %v488
      %v520 = vpack.c.b16 %v491, %v490
      %v521 = vpack.c.b16 %v493, %v492
      %v522 = vpack.c.b16 %v495, %v494
      %v523 = vpack.c.b16 %v497, %v496
      %v524 = vpack.c.b16 %v499, %v498
      %v525 = vpack.c.b16 %v501, %v500
      %v526 = vpack.c.b16 %v503, %v502
      %v527 = vpack.c.b16 %v505, %v504
      %v528 = vpack.c.b16 %v507, %v506
      %v529 = vpack.c.b16 %v509, %v508
      %v530 = vpack.c.b16 %v511, %v510
      %v531 = vpack.c.b16 %v513, %v512
      %v532 = vpack.c.b16 %v515, %v514
      %v533 = vpack.c.b16 %v517, %v516
      %v566 = vunpack.c.l.b16 %v286
      %v567 = vunpack.c.l.b16 %v287
      %v568 = vunpack.c.l.b16 %v288
      %v569 = vunpack.c.l.b16 %v289
      %v570 = vunpack.c.l.b16 %v290
      %v571 = vunpack.c.l.b16 %v291
      %v572 = vunpack.c.l.b16 %v292
      %v573 = vunpack.c.l.b16 %v293
      %v574 = vunpack.c.l.b16 %v294
      %v575 = vunpack.c.l.b16 %v295
      %v576 = vunpack.c.l.b16 %v296
      %v577 = vunpack.c.l.b16 %v297
      %v578 = vunpack.c.l.b16 %v298
      %v579 = vunpack.c.l.b16 %v299
      %v580 = vunpack.c.l.b16 %v300
      %v581 = vunpack.c.l.b16 %v301
      %v582 = vpack.c.b16 %v566, %v566
      %v583 = vpack.c.b16 %v567, %v567
      %v584 = vpack.c.b16 %v568, %v568
      %v585 = vpack.c.b16 %v569, %v569
      %v586 = vpack.c.b16 %v570, %v570
      %v587 = vpack.c.b16 %v571, %v571
      %v588 = vpack.c.b16 %v572, %v572
      %v589 = vpack.c.b16 %v573, %v573
      %v590 = vpack.c.b16 %v574, %v574
      %v591 = vpack.c.b16 %v575, %v575
      %v592 = vpack.c.b16 %v576, %v576
      %v593 = vpack.c.b16 %v577, %v577
      %v594 = vpack.c.b16 %v578, %v578
      %v595 = vpack.c.b16 %v579, %v579
      %v596 = vpack.c.b16 %v580, %v580
      %v597 = vpack.c.b16 %v581, %v581
      %vm598 = vsmask.f32 7424
      %v600 = vshrl.u32 %v518, 16
      %v602 = vshll.u32 %v518, 16
      %v604 = vrot.slane %v602, 1
      %v605 = vor.u32 %v600, %v604
      %v607 = vshll.u32 %v582, 16
      %v609 = vrot.slane %v607, 1
      %v610 = vsel %vm598, %v605, %v609
      %v612 = vshrl.u32 %v519, 16
      %v614 = vshll.u32 %v519, 16
      %v616 = vrot.slane %v614, 1
      %v617 = vor.u32 %v612, %v616
      %v619 = vshll.u32 %v583, 16
      %v621 = vrot.slane %v619, 1
      %v622 = vsel %vm598, %v617, %v621
      %v624 = vshrl.u32 %v520, 16
      %v626 = vshll.u32 %v520, 16
      %v628 = vrot.slane %v626, 1
      %v629 = vor.u32 %v624, %v628
      %v631 = vshll.u32 %v584, 16
      %v633 = vrot.slane %v631, 1
      %v634 = vsel %vm598, %v629, %v633
      %v636 = vshrl.u32 %v521, 16
      %v638 = vshll.u32 %v521, 16
      %v640 = vrot.slane %v638, 1
      %v641 = vor.u32 %v636, %v640
      %v643 = vshll.u32 %v585, 16
      %v645 = vrot.slane %v643, 1
      %v646 = vsel %vm598, %v641, %v645
      %v648 = vshrl.u32 %v522, 16
      %v650 = vshll.u32 %v522, 16
      %v652 = vrot.slane %v650, 1
      %v653 = vor.u32 %v648, %v652
      %v655 = vshll.u32 %v586, 16
      %v657 = vrot.slane %v655, 1
      %v658 = vsel %vm598, %v653, %v657
      %v660 = vshrl.u32 %v523, 16
      %v662 = vshll.u32 %v523, 16
      %v664 = vrot.slane %v662, 1
      %v665 = vor.u32 %v660, %v664
      %v667 = vshll.u32 %v587, 16
      %v669 = vrot.slane %v667, 1
      %v670 = vsel %vm598, %v665, %v669
      %v672 = vshrl.u32 %v524, 16
      %v674 = vshll.u32 %v524, 16
      %v676 = vrot.slane %v674, 1
      %v677 = vor.u32 %v672, %v676
      %v679 = vshll.u32 %v588, 16
      %v681 = vrot.slane %v679, 1
      %v682 = vsel %vm598, %v677, %v681
      %v684 = vshrl.u32 %v525, 16
      %v686 = vshll.u32 %v525, 16
      %v688 = vrot.slane %v686, 1
      %v689 = vor.u32 %v684, %v688
      %v691 = vshll.u32 %v589, 16
      %v693 = vrot.slane %v691, 1
      %v694 = vsel %vm598, %v689, %v693
      %v696 = vshrl.u32 %v526, 16
      %v698 = vshll.u32 %v526, 16
      %v700 = vrot.slane %v698, 1
      %v701 = vor.u32 %v696, %v700
      %v703 = vshll.u32 %v590, 16
      %v705 = vrot.slane %v703, 1
      %v706 = vsel %vm598, %v701, %v705
      %v708 = vshrl.u32 %v527, 16
      %v710 = vshll.u32 %v527, 16
      %v712 = vrot.slane %v710, 1
      %v713 = vor.u32 %v708, %v712
      %v715 = vshll.u32 %v591, 16
      %v717 = vrot.slane %v715, 1
      %v718 = vsel %vm598, %v713, %v717
      %v720 = vshrl.u32 %v528, 16
      %v722 = vshll.u32 %v528, 16
      %v724 = vrot.slane %v722, 1
      %v725 = vor.u32 %v720, %v724
      %v727 = vshll.u32 %v592, 16
      %v729 = vrot.slane %v727, 1
      %v730 = vsel %vm598, %v725, %v729
      %v732 = vshrl.u32 %v529, 16
      %v734 = vshll.u32 %v529, 16
      %v736 = vrot.slane %v734, 1
      %v737 = vor.u32 %v732, %v736
      %v739 = vshll.u32 %v593, 16
      %v741 = vrot.slane %v739, 1
      %v742 = vsel %vm598, %v737, %v741
      %v744 = vshrl.u32 %v530, 16
      %v746 = vshll.u32 %v530, 16
      %v748 = vrot.slane %v746, 1
      %v749 = vor.u32 %v744, %v748
      %v751 = vshll.u32 %v594, 16
      %v753 = vrot.slane %v751, 1
      %v754 = vsel %vm598, %v749, %v753
      %v756 = vshrl.u32 %v531, 16
      %v758 = vshll.u32 %v531, 16
      %v760 = vrot.slane %v758, 1
      %v761 = vor.u32 %v756, %v760
      %v763 = vshll.u32 %v595, 16
      %v765 = vrot.slane %v763, 1
      %v766 = vsel %vm598, %v761, %v765
      %v768 = vshrl.u32 %v532, 16
      %v770 = vshll.u32 %v532, 16
      %v772 = vrot.slane %v770, 1
      %v773 = vor.u32 %v768, %v772
      %v775 = vshll.u32 %v596, 16
      %v777 = vrot.slane %v775, 1
      %v778 = vsel %vm598, %v773, %v777
      %v780 = vshrl.u32 %v533, 16
      %v782 = vshll.u32 %v533, 16
      %v784 = vrot.slane %v782, 1
      %v785 = vor.u32 %v780, %v784
      %v787 = vshll.u32 %v597, 16
      %v789 = vrot.slane %v787, 1
      %v790 = vsel %vm598, %v785, %v789
      %v823 = vunpack.c.l.b16 %v302
      %v824 = vunpack.c.l.b16 %v303
      %v825 = vunpack.c.l.b16 %v304
      %v826 = vunpack.c.l.b16 %v305
      %v827 = vunpack.c.l.b16 %v306
      %v828 = vunpack.c.l.b16 %v307
      %v829 = vunpack.c.l.b16 %v308
      %v830 = vunpack.c.l.b16 %v309
      %v831 = vunpack.c.l.b16 %v310
      %v832 = vunpack.c.l.b16 %v311
      %v833 = vunpack.c.l.b16 %v312
      %v834 = vunpack.c.l.b16 %v313
      %v835 = vunpack.c.l.b16 %v314
      %v836 = vunpack.c.l.b16 %v315
      %v837 = vunpack.c.l.b16 %v316
      %v838 = vunpack.c.l.b16 %v317
      %v839 = vpack.c.b16 %v487, %v823
      %v840 = vpack.c.b16 %v489, %v824
      %v841 = vpack.c.b16 %v491, %v825
      %v842 = vpack.c.b16 %v493, %v826
      %v843 = vpack.c.b16 %v495, %v827
      %v844 = vpack.c.b16 %v497, %v828
      %v845 = vpack.c.b16 %v499, %v829
      %v846 = vpack.c.b16 %v501, %v830
      %v847 = vpack.c.b16 %v503, %v831
      %v848 = vpack.c.b16 %v505, %v832
      %v849 = vpack.c.b16 %v507, %v833
      %v850 = vpack.c.b16 %v509, %v834
      %v851 = vpack.c.b16 %v511, %v835
      %v852 = vpack.c.b16 %v513, %v836
      %v853 = vpack.c.b16 %v515, %v837
      %v854 = vpack.c.b16 %v517, %v838
      %vm855 = vcmask 1046528
      %v856 = vrot.slane %v839, 1
      %v857 = vrot.slane %v582, 1
      %v858 = vsel %vm855, %v856, %v857
      %v859 = vrot.slane %v840, 1
      %v860 = vrot.slane %v583, 1
      %v861 = vsel %vm855, %v859, %v860
      %v862 = vrot.slane %v841, 1
      %v863 = vrot.slane %v584, 1
      %v864 = vsel %vm855, %v862, %v863
      %v865 = vrot.slane %v842, 1
      %v866 = vrot.slane %v585, 1
      %v867 = vsel %vm855, %v865, %v866
      %v868 = vrot.slane %v843, 1
      %v869 = vrot.slane %v586, 1
      %v870 = vsel %vm855, %v868, %v869
      %v871 = vrot.slane %v844, 1
      %v872 = vrot.slane %v587, 1
      %v873 = vsel %vm855, %v871, %v872
      %v874 = vrot.slane %v845, 1
      %v875 = vrot.slane %v588, 1
      %v876 = vsel %vm855, %v874, %v875
      %v877 = vrot.slane %v846, 1
      %v878 = vrot.slane %v589, 1
      %v879 = vsel %vm855, %v877, %v878
      %v880 = vrot.slane %v847, 1
      %v881 = vrot.slane %v590, 1
      %v882 = vsel %vm855, %v880, %v881
      %v883 = vrot.slane %v848, 1
      %v884 = vrot.slane %v591, 1
      %v885 = vsel %vm855, %v883, %v884
      %v886 = vrot.slane %v849, 1
      %v887 = vrot.slane %v592, 1
      %v888 = vsel %vm855, %v886, %v887
      %v889 = vrot.slane %v850, 1
      %v890 = vrot.slane %v593, 1
      %v891 = vsel %vm855, %v889, %v890
      %v892 = vrot.slane %v851, 1
      %v893 = vrot.slane %v594, 1
      %v894 = vsel %vm855, %v892, %v893
      %v895 = vrot.slane %v852, 1
      %v896 = vrot.slane %v595, 1
      %v897 = vsel %vm855, %v895, %v896
      %v898 = vrot.slane %v853, 1
      %v899 = vrot.slane %v596, 1
      %v900 = vsel %vm855, %v898, %v899
      %v901 = vrot.slane %v854, 1
      %v902 = vrot.slane %v597, 1
      %v903 = vsel %vm855, %v901, %v902
      %v952 = vunpack.c.l.b16 %v322
      %v953 = vunpack.c.l.b16 %v323
      %v954 = vunpack.c.l.b16 %v324
      %v955 = vunpack.c.l.b16 %v325
      %v956 = vunpack.c.l.b16 %v326
      %v957 = vunpack.c.l.b16 %v327
      %v958 = vunpack.c.l.b16 %v328
      %v959 = vunpack.c.l.b16 %v329
      %v960 = vunpack.c.l.b16 %v330
      %v961 = vunpack.c.l.b16 %v331
      %v962 = vunpack.c.l.b16 %v332
      %v963 = vunpack.c.l.b16 %v333
      %v964 = vunpack.c.l.b16 %v334
      %v965 = vunpack.c.l.b16 %v335
      %v966 = vunpack.c.l.b16 %v336
      %v967 = vunpack.c.l.b16 %v337
      %v968 = vunpack.c.l.b16 %v338
      %v969 = vunpack.c.l.b16 %v339
      %v970 = vunpack.c.l.b16 %v340
      %v971 = vunpack.c.l.b16 %v341
      %v972 = vunpack.c.l.b16 %v342
      %v973 = vunpack.c.l.b16 %v343
      %v974 = vunpack.c.l.b16 %v344
      %v975 = vunpack.c.l.b16 %v345
      %v976 = vunpack.c.l.b16 %v346
      %v977 = vunpack.c.l.b16 %v347
      %v978 = vunpack.c.l.b16 %v348
      %v979 = vunpack.c.l.b16 %v349
      %v980 = vunpack.c.l.b16 %v350
      %v981 = vunpack.c.l.b16 %v351
      %v982 = vunpack.c.l.b16 %v352
      %v983 = vunpack.c.l.b16 %v353
      %v984 = vpack.c.b16 %v953, %v952
      %v985 = vpack.c.b16 %v955, %v954
      %v986 = vpack.c.b16 %v957, %v956
      %v987 = vpack.c.b16 %v959, %v958
      %v988 = vpack.c.b16 %v961, %v960
      %v989 = vpack.c.b16 %v963, %v962
      %v990 = vpack.c.b16 %v965, %v964
      %v991 = vpack.c.b16 %v967, %v966
      %v992 = vpack.c.b16 %v969, %v968
      %v993 = vpack.c.b16 %v971, %v970
      %v994 = vpack.c.b16 %v973, %v972
      %v995 = vpack.c.b16 %v975, %v974
      %v996 = vpack.c.b16 %v977, %v976
      %v997 = vpack.c.b16 %v979, %v978
      %v998 = vpack.c.b16 %v981, %v980
      %v999 = vpack.c.b16 %v983, %v982
      %v1032 = vunpack.c.l.b16 %v354
      %v1033 = vunpack.c.l.b16 %v355
      %v1034 = vunpack.c.l.b16 %v356
      %v1035 = vunpack.c.l.b16 %v357
      %v1036 = vunpack.c.l.b16 %v358
      %v1037 = vunpack.c.l.b16 %v359
      %v1038 = vunpack.c.l.b16 %v360
      %v1039 = vunpack.c.l.b16 %v361
      %v1040 = vunpack.c.l.b16 %v362
      %v1041 = vunpack.c.l.b16 %v363
      %v1042 = vunpack.c.l.b16 %v364
      %v1043 = vunpack.c.l.b16 %v365
      %v1044 = vunpack.c.l.b16 %v366
      %v1045 = vunpack.c.l.b16 %v367
      %v1046 = vunpack.c.l.b16 %v368
      %v1047 = vunpack.c.l.b16 %v369
      %v1048 = vpack.c.b16 %v1032, %v1032
      %v1049 = vpack.c.b16 %v1033, %v1033
      %v1050 = vpack.c.b16 %v1034, %v1034
      %v1051 = vpack.c.b16 %v1035, %v1035
      %v1052 = vpack.c.b16 %v1036, %v1036
      %v1053 = vpack.c.b16 %v1037, %v1037
      %v1054 = vpack.c.b16 %v1038, %v1038
      %v1055 = vpack.c.b16 %v1039, %v1039
      %v1056 = vpack.c.b16 %v1040, %v1040
      %v1057 = vpack.c.b16 %v1041, %v1041
      %v1058 = vpack.c.b16 %v1042, %v1042
      %v1059 = vpack.c.b16 %v1043, %v1043
      %v1060 = vpack.c.b16 %v1044, %v1044
      %v1061 = vpack.c.b16 %v1045, %v1045
      %v1062 = vpack.c.b16 %v1046, %v1046
      %v1063 = vpack.c.b16 %v1047, %v1047
      %v1065 = vshrl.u32 %v984, 16
      %v1067 = vshll.u32 %v984, 16
      %v1069 = vrot.slane %v1067, 1
      %v1070 = vor.u32 %v1065, %v1069
      %v1072 = vshll.u32 %v1048, 16
      %v1074 = vrot.slane %v1072, 1
      %v1075 = vsel %vm598, %v1070, %v1074
      %v1077 = vshrl.u32 %v985, 16
      %v1079 = vshll.u32 %v985, 16
      %v1081 = vrot.slane %v1079, 1
      %v1082 = vor.u32 %v1077, %v1081
      %v1084 = vshll.u32 %v1049, 16
      %v1086 = vrot.slane %v1084, 1
      %v1087 = vsel %vm598, %v1082, %v1086
      %v1089 = vshrl.u32 %v986, 16
      %v1091 = vshll.u32 %v986, 16
      %v1093 = vrot.slane %v1091, 1
      %v1094 = vor.u32 %v1089, %v1093
      %v1096 = vshll.u32 %v1050, 16
      %v1098 = vrot.slane %v1096, 1
      %v1099 = vsel %vm598, %v1094, %v1098
      %v1101 = vshrl.u32 %v987, 16
      %v1103 = vshll.u32 %v987, 16
      %v1105 = vrot.slane %v1103, 1
      %v1106 = vor.u32 %v1101, %v1105
      %v1108 = vshll.u32 %v1051, 16
      %v1110 = vrot.slane %v1108, 1
      %v1111 = vsel %vm598, %v1106, %v1110
      %v1113 = vshrl.u32 %v988, 16
      %v1115 = vshll.u32 %v988, 16
      %v1117 = vrot.slane %v1115, 1
      %v1118 = vor.u32 %v1113, %v1117
      %v1120 = vshll.u32 %v1052, 16
      %v1122 = vrot.slane %v1120, 1
      %v1123 = vsel %vm598, %v1118, %v1122
      %v1125 = vshrl.u32 %v989, 16
      %v1127 = vshll.u32 %v989, 16
      %v1129 = vrot.slane %v1127, 1
      %v1130 = vor.u32 %v1125, %v1129
      %v1132 = vshll.u32 %v1053, 16
      %v1134 = vrot.slane %v1132, 1
      %v1135 = vsel %vm598, %v1130, %v1134
      %v1137 = vshrl.u32 %v990, 16
      %v1139 = vshll.u32 %v990, 16
      %v1141 = vrot.slane %v1139, 1
      %v1142 = vor.u32 %v1137, %v1141
      %v1144 = vshll.u32 %v1054, 16
      %v1146 = vrot.slane %v1144, 1
      %v1147 = vsel %vm598, %v1142, %v1146
      %v1149 = vshrl.u32 %v991, 16
      %v1151 = vshll.u32 %v991, 16
      %v1153 = vrot.slane %v1151, 1
      %v1154 = vor.u32 %v1149, %v1153
      %v1156 = vshll.u32 %v1055, 16
      %v1158 = vrot.slane %v1156, 1
      %v1159 = vsel %vm598, %v1154, %v1158
      %v1161 = vshrl.u32 %v992, 16
      %v1163 = vshll.u32 %v992, 16
      %v1165 = vrot.slane %v1163, 1
      %v1166 = vor.u32 %v1161, %v1165
      %v1168 = vshll.u32 %v1056, 16
      %v1170 = vrot.slane %v1168, 1
      %v1171 = vsel %vm598, %v1166, %v1170
      %v1173 = vshrl.u32 %v993, 16
      %v1175 = vshll.u32 %v993, 16
      %v1177 = vrot.slane %v1175, 1
      %v1178 = vor.u32 %v1173, %v1177
      %v1180 = vshll.u32 %v1057, 16
      %v1182 = vrot.slane %v1180, 1
      %v1183 = vsel %vm598, %v1178, %v1182
      %v1185 = vshrl.u32 %v994, 16
      %v1187 = vshll.u32 %v994, 16
      %v1189 = vrot.slane %v1187, 1
      %v1190 = vor.u32 %v1185, %v1189
      %v1192 = vshll.u32 %v1058, 16
      %v1194 = vrot.slane %v1192, 1
      %v1195 = vsel %vm598, %v1190, %v1194
      %v1197 = vshrl.u32 %v995, 16
      %v1199 = vshll.u32 %v995, 16
      %v1201 = vrot.slane %v1199, 1
      %v1202 = vor.u32 %v1197, %v1201
      %v1204 = vshll.u32 %v1059, 16
      %v1206 = vrot.slane %v1204, 1
      %v1207 = vsel %vm598, %v1202, %v1206
      %v1209 = vshrl.u32 %v996, 16
      %v1211 = vshll.u32 %v996, 16
      %v1213 = vrot.slane %v1211, 1
      %v1214 = vor.u32 %v1209, %v1213
      %v1216 = vshll.u32 %v1060, 16
      %v1218 = vrot.slane %v1216, 1
      %v1219 = vsel %vm598, %v1214, %v1218
      %v1221 = vshrl.u32 %v997, 16
      %v1223 = vshll.u32 %v997, 16
      %v1225 = vrot.slane %v1223, 1
      %v1226 = vor.u32 %v1221, %v1225
      %v1228 = vshll.u32 %v1061, 16
      %v1230 = vrot.slane %v1228, 1
      %v1231 = vsel %vm598, %v1226, %v1230
      %v1233 = vshrl.u32 %v998, 16
      %v1235 = vshll.u32 %v998, 16
      %v1237 = vrot.slane %v1235, 1
      %v1238 = vor.u32 %v1233, %v1237
      %v1240 = vshll.u32 %v1062, 16
      %v1242 = vrot.slane %v1240, 1
      %v1243 = vsel %vm598, %v1238, %v1242
      %v1245 = vshrl.u32 %v999, 16
      %v1247 = vshll.u32 %v999, 16
      %v1249 = vrot.slane %v1247, 1
      %v1250 = vor.u32 %v1245, %v1249
      %v1252 = vshll.u32 %v1063, 16
      %v1254 = vrot.slane %v1252, 1
      %v1255 = vsel %vm598, %v1250, %v1254
      %v1288 = vunpack.c.l.b16 %v370
      %v1289 = vunpack.c.l.b16 %v371
      %v1290 = vunpack.c.l.b16 %v372
      %v1291 = vunpack.c.l.b16 %v373
      %v1292 = vunpack.c.l.b16 %v374
      %v1293 = vunpack.c.l.b16 %v375
      %v1294 = vunpack.c.l.b16 %v376
      %v1295 = vunpack.c.l.b16 %v377
      %v1296 = vunpack.c.l.b16 %v378
      %v1297 = vunpack.c.l.b16 %v379
      %v1298 = vunpack.c.l.b16 %v380
      %v1299 = vunpack.c.l.b16 %v381
      %v1300 = vunpack.c.l.b16 %v382
      %v1301 = vunpack.c.l.b16 %v383
      %v1302 = vunpack.c.l.b16 %v384
      %v1303 = vunpack.c.l.b16 %v385
      %v1304 = vpack.c.b16 %v953, %v1288
      %v1305 = vpack.c.b16 %v955, %v1289
      %v1306 = vpack.c.b16 %v957, %v1290
      %v1307 = vpack.c.b16 %v959, %v1291
      %v1308 = vpack.c.b16 %v961, %v1292
      %v1309 = vpack.c.b16 %v963, %v1293
      %v1310 = vpack.c.b16 %v965, %v1294
      %v1311 = vpack.c.b16 %v967, %v1295
      %v1312 = vpack.c.b16 %v969, %v1296
      %v1313 = vpack.c.b16 %v971, %v1297
      %v1314 = vpack.c.b16 %v973, %v1298
      %v1315 = vpack.c.b16 %v975, %v1299
      %v1316 = vpack.c.b16 %v977, %v1300
      %v1317 = vpack.c.b16 %v979, %v1301
      %v1318 = vpack.c.b16 %v981, %v1302
      %v1319 = vpack.c.b16 %v983, %v1303
      %v1320 = vrot.slane %v1304, 1
      %v1321 = vrot.slane %v1048, 1
      %v1322 = vsel %vm855, %v1320, %v1321
      %v1323 = vrot.slane %v1305, 1
      %v1324 = vrot.slane %v1049, 1
      %v1325 = vsel %vm855, %v1323, %v1324
      %v1326 = vrot.slane %v1306, 1
      %v1327 = vrot.slane %v1050, 1
      %v1328 = vsel %vm855, %v1326, %v1327
      %v1329 = vrot.slane %v1307, 1
      %v1330 = vrot.slane %v1051, 1
      %v1331 = vsel %vm855, %v1329, %v1330
      %v1332 = vrot.slane %v1308, 1
      %v1333 = vrot.slane %v1052, 1
      %v1334 = vsel %vm855, %v1332, %v1333
      %v1335 = vrot.slane %v1309, 1
      %v1336 = vrot.slane %v1053, 1
      %v1337 = vsel %vm855, %v1335, %v1336
      %v1338 = vrot.slane %v1310, 1
      %v1339 = vrot.slane %v1054, 1
      %v1340 = vsel %vm855, %v1338, %v1339
      %v1341 = vrot.slane %v1311, 1
      %v1342 = vrot.slane %v1055, 1
      %v1343 = vsel %vm855, %v1341, %v1342
      %v1344 = vrot.slane %v1312, 1
      %v1345 = vrot.slane %v1056, 1
      %v1346 = vsel %vm855, %v1344, %v1345
      %v1347 = vrot.slane %v1313, 1
      %v1348 = vrot.slane %v1057, 1
      %v1349 = vsel %vm855, %v1347, %v1348
      %v1350 = vrot.slane %v1314, 1
      %v1351 = vrot.slane %v1058, 1
      %v1352 = vsel %vm855, %v1350, %v1351
      %v1353 = vrot.slane %v1315, 1
      %v1354 = vrot.slane %v1059, 1
      %v1355 = vsel %vm855, %v1353, %v1354
      %v1356 = vrot.slane %v1316, 1
      %v1357 = vrot.slane %v1060, 1
      %v1358 = vsel %vm855, %v1356, %v1357
      %v1359 = vrot.slane %v1317, 1
      %v1360 = vrot.slane %v1061, 1
      %v1361 = vsel %vm855, %v1359, %v1360
      %v1362 = vrot.slane %v1318, 1
      %v1363 = vrot.slane %v1062, 1
      %v1364 = vsel %vm855, %v1362, %v1363
      %v1365 = vrot.slane %v1319, 1
      %v1366 = vrot.slane %v1063, 1
      %v1367 = vsel %vm855, %v1365, %v1366
      %v1416 = vunpack.c.l.b16 %v390
      %v1417 = vunpack.c.l.b16 %v391
      %v1418 = vunpack.c.l.b16 %v392
      %v1419 = vunpack.c.l.b16 %v393
      %v1420 = vunpack.c.l.b16 %v394
      %v1421 = vunpack.c.l.b16 %v395
      %v1422 = vunpack.c.l.b16 %v396
      %v1423 = vunpack.c.l.b16 %v397
      %v1424 = vunpack.c.l.b16 %v398
      %v1425 = vunpack.c.l.b16 %v399
      %v1426 = vunpack.c.l.b16 %v400
      %v1427 = vunpack.c.l.b16 %v401
      %v1428 = vunpack.c.l.b16 %v402
      %v1429 = vunpack.c.l.b16 %v403
      %v1430 = vunpack.c.l.b16 %v404
      %v1431 = vunpack.c.l.b16 %v405
      %v1432 = vunpack.c.l.b16 %v406
      %v1433 = vunpack.c.l.b16 %v407
      %v1434 = vunpack.c.l.b16 %v408
      %v1435 = vunpack.c.l.b16 %v409
      %v1436 = vunpack.c.l.b16 %v410
      %v1437 = vunpack.c.l.b16 %v411
      %v1438 = vunpack.c.l.b16 %v412
      %v1439 = vunpack.c.l.b16 %v413
      %v1440 = vunpack.c.l.b16 %v414
      %v1441 = vunpack.c.l.b16 %v415
      %v1442 = vunpack.c.l.b16 %v416
      %v1443 = vunpack.c.l.b16 %v417
      %v1444 = vunpack.c.l.b16 %v418
      %v1445 = vunpack.c.l.b16 %v419
      %v1446 = vunpack.c.l.b16 %v420
      %v1447 = vunpack.c.l.b16 %v421
      %v1448 = vpack.c.b16 %v1417, %v1416
      %v1449 = vpack.c.b16 %v1419, %v1418
      %v1450 = vpack.c.b16 %v1421, %v1420
      %v1451 = vpack.c.b16 %v1423, %v1422
      %v1452 = vpack.c.b16 %v1425, %v1424
      %v1453 = vpack.c.b16 %v1427, %v1426
      %v1454 = vpack.c.b16 %v1429, %v1428
      %v1455 = vpack.c.b16 %v1431, %v1430
      %v1456 = vpack.c.b16 %v1433, %v1432
      %v1457 = vpack.c.b16 %v1435, %v1434
      %v1458 = vpack.c.b16 %v1437, %v1436
      %v1459 = vpack.c.b16 %v1439, %v1438
      %v1460 = vpack.c.b16 %v1441, %v1440
      %v1461 = vpack.c.b16 %v1443, %v1442
      %v1462 = vpack.c.b16 %v1445, %v1444
      %v1463 = vpack.c.b16 %v1447, %v1446
      %v1496 = vunpack.c.l.b16 %v422
      %v1497 = vunpack.c.l.b16 %v423
      %v1498 = vunpack.c.l.b16 %v424
      %v1499 = vunpack.c.l.b16 %v425
      %v1500 = vunpack.c.l.b16 %v426
      %v1501 = vunpack.c.l.b16 %v427
      %v1502 = vunpack.c.l.b16 %v428
      %v1503 = vunpack.c.l.b16 %v429
      %v1504 = vunpack.c.l.b16 %v430
      %v1505 = vunpack.c.l.b16 %v431
      %v1506 = vunpack.c.l.b16 %v432
      %v1507 = vunpack.c.l.b16 %v433
      %v1508 = vunpack.c.l.b16 %v434
      %v1509 = vunpack.c.l.b16 %v435
      %v1510 = vunpack.c.l.b16 %v436
      %v1511 = vunpack.c.l.b16 %v437
      %v1512 = vpack.c.b16 %v1496, %v1496
      %v1513 = vpack.c.b16 %v1497, %v1497
      %v1514 = vpack.c.b16 %v1498, %v1498
      %v1515 = vpack.c.b16 %v1499, %v1499
      %v1516 = vpack.c.b16 %v1500, %v1500
      %v1517 = vpack.c.b16 %v1501, %v1501
      %v1518 = vpack.c.b16 %v1502, %v1502
      %v1519 = vpack.c.b16 %v1503, %v1503
      %v1520 = vpack.c.b16 %v1504, %v1504
      %v1521 = vpack.c.b16 %v1505, %v1505
      %v1522 = vpack.c.b16 %v1506, %v1506
      %v1523 = vpack.c.b16 %v1507, %v1507
      %v1524 = vpack.c.b16 %v1508, %v1508
      %v1525 = vpack.c.b16 %v1509, %v1509
      %v1526 = vpack.c.b16 %v1510, %v1510
      %v1527 = vpack.c.b16 %v1511, %v1511
      %v1529 = vshrl.u32 %v1448, 16
      %v1531 = vshll.u32 %v1448, 16
      %v1533 = vrot.slane %v1531, 1
      %v1534 = vor.u32 %v1529, %v1533
      %v1536 = vshll.u32 %v1512, 16
      %v1538 = vrot.slane %v1536, 1
      %v1539 = vsel %vm598, %v1534, %v1538
      %v1541 = vshrl.u32 %v1449, 16
      %v1543 = vshll.u32 %v1449, 16
      %v1545 = vrot.slane %v1543, 1
      %v1546 = vor.u32 %v1541, %v1545
      %v1548 = vshll.u32 %v1513, 16
      %v1550 = vrot.slane %v1548, 1
      %v1551 = vsel %vm598, %v1546, %v1550
      %v1553 = vshrl.u32 %v1450, 16
      %v1555 = vshll.u32 %v1450, 16
      %v1557 = vrot.slane %v1555, 1
      %v1558 = vor.u32 %v1553, %v1557
      %v1560 = vshll.u32 %v1514, 16
      %v1562 = vrot.slane %v1560, 1
      %v1563 = vsel %vm598, %v1558, %v1562
      %v1565 = vshrl.u32 %v1451, 16
      %v1567 = vshll.u32 %v1451, 16
      %v1569 = vrot.slane %v1567, 1
      %v1570 = vor.u32 %v1565, %v1569
      %v1572 = vshll.u32 %v1515, 16
      %v1574 = vrot.slane %v1572, 1
      %v1575 = vsel %vm598, %v1570, %v1574
      %v1577 = vshrl.u32 %v1452, 16
      %v1579 = vshll.u32 %v1452, 16
      %v1581 = vrot.slane %v1579, 1
      %v1582 = vor.u32 %v1577, %v1581
      %v1584 = vshll.u32 %v1516, 16
      %v1586 = vrot.slane %v1584, 1
      %v1587 = vsel %vm598, %v1582, %v1586
      %v1589 = vshrl.u32 %v1453, 16
      %v1591 = vshll.u32 %v1453, 16
      %v1593 = vrot.slane %v1591, 1
      %v1594 = vor.u32 %v1589, %v1593
      %v1596 = vshll.u32 %v1517, 16
      %v1598 = vrot.slane %v1596, 1
      %v1599 = vsel %vm598, %v1594, %v1598
      %v1601 = vshrl.u32 %v1454, 16
      %v1603 = vshll.u32 %v1454, 16
      %v1605 = vrot.slane %v1603, 1
      %v1606 = vor.u32 %v1601, %v1605
      %v1608 = vshll.u32 %v1518, 16
      %v1610 = vrot.slane %v1608, 1
      %v1611 = vsel %vm598, %v1606, %v1610
      %v1613 = vshrl.u32 %v1455, 16
      %v1615 = vshll.u32 %v1455, 16
      %v1617 = vrot.slane %v1615, 1
      %v1618 = vor.u32 %v1613, %v1617
      %v1620 = vshll.u32 %v1519, 16
      %v1622 = vrot.slane %v1620, 1
      %v1623 = vsel %vm598, %v1618, %v1622
      %v1625 = vshrl.u32 %v1456, 16
      %v1627 = vshll.u32 %v1456, 16
      %v1629 = vrot.slane %v1627, 1
      %v1630 = vor.u32 %v1625, %v1629
      %v1632 = vshll.u32 %v1520, 16
      %v1634 = vrot.slane %v1632, 1
      %v1635 = vsel %vm598, %v1630, %v1634
      %v1637 = vshrl.u32 %v1457, 16
      %v1639 = vshll.u32 %v1457, 16
      %v1641 = vrot.slane %v1639, 1
      %v1642 = vor.u32 %v1637, %v1641
      %v1644 = vshll.u32 %v1521, 16
      %v1646 = vrot.slane %v1644, 1
      %v1647 = vsel %vm598, %v1642, %v1646
      %v1649 = vshrl.u32 %v1458, 16
      %v1651 = vshll.u32 %v1458, 16
      %v1653 = vrot.slane %v1651, 1
      %v1654 = vor.u32 %v1649, %v1653
      %v1656 = vshll.u32 %v1522, 16
      %v1658 = vrot.slane %v1656, 1
      %v1659 = vsel %vm598, %v1654, %v1658
      %v1661 = vshrl.u32 %v1459, 16
      %v1663 = vshll.u32 %v1459, 16
      %v1665 = vrot.slane %v1663, 1
      %v1666 = vor.u32 %v1661, %v1665
      %v1668 = vshll.u32 %v1523, 16
      %v1670 = vrot.slane %v1668, 1
      %v1671 = vsel %vm598, %v1666, %v1670
      %v1673 = vshrl.u32 %v1460, 16
      %v1675 = vshll.u32 %v1460, 16
      %v1677 = vrot.slane %v1675, 1
      %v1678 = vor.u32 %v1673, %v1677
      %v1680 = vshll.u32 %v1524, 16
      %v1682 = vrot.slane %v1680, 1
      %v1683 = vsel %vm598, %v1678, %v1682
      %v1685 = vshrl.u32 %v1461, 16
      %v1687 = vshll.u32 %v1461, 16
      %v1689 = vrot.slane %v1687, 1
      %v1690 = vor.u32 %v1685, %v1689
      %v1692 = vshll.u32 %v1525, 16
      %v1694 = vrot.slane %v1692, 1
      %v1695 = vsel %vm598, %v1690, %v1694
      %v1697 = vshrl.u32 %v1462, 16
      %v1699 = vshll.u32 %v1462, 16
      %v1701 = vrot.slane %v1699, 1
      %v1702 = vor.u32 %v1697, %v1701
      %v1704 = vshll.u32 %v1526, 16
      %v1706 = vrot.slane %v1704, 1
      %v1707 = vsel %vm598, %v1702, %v1706
      %v1709 = vshrl.u32 %v1463, 16
      %v1711 = vshll.u32 %v1463, 16
      %v1713 = vrot.slane %v1711, 1
      %v1714 = vor.u32 %v1709, %v1713
      %v1716 = vshll.u32 %v1527, 16
      %v1718 = vrot.slane %v1716, 1
      %v1719 = vsel %vm598, %v1714, %v1718
      %v1752 = vunpack.c.l.b16 %v438
      %v1753 = vunpack.c.l.b16 %v439
      %v1754 = vunpack.c.l.b16 %v440
      %v1755 = vunpack.c.l.b16 %v441
      %v1756 = vunpack.c.l.b16 %v442
      %v1757 = vunpack.c.l.b16 %v443
      %v1758 = vunpack.c.l.b16 %v444
      %v1759 = vunpack.c.l.b16 %v445
      %v1760 = vunpack.c.l.b16 %v446
      %v1761 = vunpack.c.l.b16 %v447
      %v1762 = vunpack.c.l.b16 %v448
      %v1763 = vunpack.c.l.b16 %v449
      %v1764 = vunpack.c.l.b16 %v450
      %v1765 = vunpack.c.l.b16 %v451
      %v1766 = vunpack.c.l.b16 %v452
      %v1767 = vunpack.c.l.b16 %v453
      %v1768 = vpack.c.b16 %v1417, %v1752
      %v1769 = vpack.c.b16 %v1419, %v1753
      %v1770 = vpack.c.b16 %v1421, %v1754
      %v1771 = vpack.c.b16 %v1423, %v1755
      %v1772 = vpack.c.b16 %v1425, %v1756
      %v1773 = vpack.c.b16 %v1427, %v1757
      %v1774 = vpack.c.b16 %v1429, %v1758
      %v1775 = vpack.c.b16 %v1431, %v1759
      %v1776 = vpack.c.b16 %v1433, %v1760
      %v1777 = vpack.c.b16 %v1435, %v1761
      %v1778 = vpack.c.b16 %v1437, %v1762
      %v1779 = vpack.c.b16 %v1439, %v1763
      %v1780 = vpack.c.b16 %v1441, %v1764
      %v1781 = vpack.c.b16 %v1443, %v1765
      %v1782 = vpack.c.b16 %v1445, %v1766
      %v1783 = vpack.c.b16 %v1447, %v1767
      %v1784 = vrot.slane %v1768, 1
      %v1785 = vrot.slane %v1512, 1
      %v1786 = vsel %vm855, %v1784, %v1785
      %v1787 = vrot.slane %v1769, 1
      %v1788 = vrot.slane %v1513, 1
      %v1789 = vsel %vm855, %v1787, %v1788
      %v1790 = vrot.slane %v1770, 1
      %v1791 = vrot.slane %v1514, 1
      %v1792 = vsel %vm855, %v1790, %v1791
      %v1793 = vrot.slane %v1771, 1
      %v1794 = vrot.slane %v1515, 1
      %v1795 = vsel %vm855, %v1793, %v1794
      %v1796 = vrot.slane %v1772, 1
      %v1797 = vrot.slane %v1516, 1
      %v1798 = vsel %vm855, %v1796, %v1797
      %v1799 = vrot.slane %v1773, 1
      %v1800 = vrot.slane %v1517, 1
      %v1801 = vsel %vm855, %v1799, %v1800
      %v1802 = vrot.slane %v1774, 1
      %v1803 = vrot.slane %v1518, 1
      %v1804 = vsel %vm855, %v1802, %v1803
      %v1805 = vrot.slane %v1775, 1
      %v1806 = vrot.slane %v1519, 1
      %v1807 = vsel %vm855, %v1805, %v1806
      %v1808 = vrot.slane %v1776, 1
      %v1809 = vrot.slane %v1520, 1
      %v1810 = vsel %vm855, %v1808, %v1809
      %v1811 = vrot.slane %v1777, 1
      %v1812 = vrot.slane %v1521, 1
      %v1813 = vsel %vm855, %v1811, %v1812
      %v1814 = vrot.slane %v1778, 1
      %v1815 = vrot.slane %v1522, 1
      %v1816 = vsel %vm855, %v1814, %v1815
      %v1817 = vrot.slane %v1779, 1
      %v1818 = vrot.slane %v1523, 1
      %v1819 = vsel %vm855, %v1817, %v1818
      %v1820 = vrot.slane %v1780, 1
      %v1821 = vrot.slane %v1524, 1
      %v1822 = vsel %vm855, %v1820, %v1821
      %v1823 = vrot.slane %v1781, 1
      %v1824 = vrot.slane %v1525, 1
      %v1825 = vsel %vm855, %v1823, %v1824
      %v1826 = vrot.slane %v1782, 1
      %v1827 = vrot.slane %v1526, 1
      %v1828 = vsel %vm855, %v1826, %v1827
      %v1829 = vrot.slane %v1783, 1
      %v1830 = vrot.slane %v1527, 1
      %v1831 = vsel %vm855, %v1829, %v1830
      %v1848 = vld [vmem:[%s1] sm:$0xf]
      %v1849 = vld [vmem:[%s1 + $0x4] sm:$0xf]
      %v1850 = vld [vmem:[%s1 + $0x8] sm:$0xf]
      %v1851 = vld [vmem:[%s1 + $0xc] sm:$0xf]
      %v1852 = vld [vmem:[%s1 + $0x10] sm:$0xf]
      %v1853 = vld [vmem:[%s1 + $0x14] sm:$0xf]
      %v1854 = vld [vmem:[%s1 + $0x18] sm:$0xf]
      %v1855 = vld [vmem:[%s1 + $0x1c] sm:$0xf]
      %v1856 = vld [vmem:[%s1 + $0x20] sm:$0xf]
      %v1857 = vld [vmem:[%s1 + $0x24] sm:$0xf]
      %v1858 = vld [vmem:[%s1 + $0x28] sm:$0xf]
      %v1859 = vld [vmem:[%s1 + $0x2c] sm:$0xf]
      %v1860 = vld [vmem:[%s1 + $0x30] sm:$0xf]
      %v1861 = vld [vmem:[%s1 + $0x34] sm:$0xf]
      %v1862 = vld [vmem:[%s1 + $0x38] sm:$0xf]
      %v1863 = vld [vmem:[%s1 + $0x3c] sm:$0xf]
      %v1864 = vld [vmem:[%s1 + $0x40] sm:$0xf]
      %v1865 = vld [vmem:[%s1 + $0x44] sm:$0xf]
      %v1866 = vld [vmem:[%s1 + $0x48] sm:$0xf]
      %v1867 = vld [vmem:[%s1 + $0x4c] sm:$0xf]
      %v1868 = vld [vmem:[%s1 + $0x50] sm:$0xf]
      %v1869 = vld [vmem:[%s1 + $0x54] sm:$0xf]
      %v1870 = vld [vmem:[%s1 + $0x58] sm:$0xf]
      %v1871 = vld [vmem:[%s1 + $0x5c] sm:$0xf]
      %v1872 = vld [vmem:[%s1 + $0x60] sm:$0xf]
      %v1873 = vld [vmem:[%s1 + $0x64] sm:$0xf]
      %v1874 = vld [vmem:[%s1 + $0x68] sm:$0xf]
      %v1875 = vld [vmem:[%s1 + $0x6c] sm:$0xf]
      %v1876 = vld [vmem:[%s1 + $0x70] sm:$0xf]
      %v1877 = vld [vmem:[%s1 + $0x74] sm:$0xf]
      %v1878 = vld [vmem:[%s1 + $0x78] sm:$0xf]
      %v1879 = vld [vmem:[%s1 + $0x7c] sm:$0xf]
      %v1880 = vld [vmem:[%s1 + $0x80] sm:$0xf]
      %v1881 = vld [vmem:[%s1 + $0x84] sm:$0xf]
      %v1882 = vld [vmem:[%s1 + $0x88] sm:$0xf]
      %v1883 = vld [vmem:[%s1 + $0x8c] sm:$0xf]
      %v1884 = vld [vmem:[%s1 + $0x90] sm:$0xf]
      %v1885 = vld [vmem:[%s1 + $0x94] sm:$0xf]
      %v1886 = vld [vmem:[%s1 + $0x98] sm:$0xf]
      %v1887 = vld [vmem:[%s1 + $0x9c] sm:$0xf]
      %v1888 = vld [vmem:[%s1 + $0xa0] sm:$0xf]
      %v1889 = vld [vmem:[%s1 + $0xa4] sm:$0xf]
      %v1890 = vld [vmem:[%s1 + $0xa8] sm:$0xf]
      %v1891 = vld [vmem:[%s1 + $0xac] sm:$0xf]
      %v1892 = vld [vmem:[%s1 + $0xb0] sm:$0xf]
      %v1893 = vld [vmem:[%s1 + $0xb4] sm:$0xf]
      %v1894 = vld [vmem:[%s1 + $0xb8] sm:$0xf]
      %v1895 = vld [vmem:[%s1 + $0xbc] sm:$0xf]
      %v1896 = vld [vmem:[%s1 + $0xc0] sm:$0xf]
      %v1897 = vld [vmem:[%s1 + $0xc4] sm:$0xf]
      %v1898 = vld [vmem:[%s1 + $0xc8] sm:$0xf]
      %v1899 = vld [vmem:[%s1 + $0xcc] sm:$0xf]
      %v1900 = vld [vmem:[%s1 + $0xd0] sm:$0xf]
      %v1901 = vld [vmem:[%s1 + $0xd4] sm:$0xf]
      %v1902 = vld [vmem:[%s1 + $0xd8] sm:$0xf]
      %v1903 = vld [vmem:[%s1 + $0xdc] sm:$0xf]
      %v1904 = vld [vmem:[%s1 + $0xe0] sm:$0xf]
      %v1905 = vld [vmem:[%s1 + $0xe4] sm:$0xf]
      %v1906 = vld [vmem:[%s1 + $0xe8] sm:$0xf]
      %v1907 = vld [vmem:[%s1 + $0xec] sm:$0xf]
      %v1908 = vld [vmem:[%s1 + $0xf0] sm:$0xf]
      %v1909 = vld [vmem:[%s1 + $0xf4] sm:$0xf]
      %v1910 = vld [vmem:[%s1 + $0xf8] sm:$0xf]
      %v1911 = vld [vmem:[%s1 + $0xfc] sm:$0xf]
      %v1912 = vld [vmem:[%s1 + $0x100] sm:$0xf]
      %v1913 = vld [vmem:[%s1 + $0x104] sm:$0xf]
      %v1914 = vld [vmem:[%s1 + $0x108] sm:$0xf]
      %v1915 = vld [vmem:[%s1 + $0x10c] sm:$0xf]
      %v1916 = vld [vmem:[%s1 + $0x110] sm:$0xf]
      %v1917 = vld [vmem:[%s1 + $0x114] sm:$0xf]
      %v1918 = vld [vmem:[%s1 + $0x118] sm:$0xf]
      %v1919 = vld [vmem:[%s1 + $0x11c] sm:$0xf]
      %v1920 = vld [vmem:[%s1 + $0x120] sm:$0xf]
      %v1921 = vld [vmem:[%s1 + $0x124] sm:$0xf]
      %v1922 = vld [vmem:[%s1 + $0x128] sm:$0xf]
      %v1923 = vld [vmem:[%s1 + $0x12c] sm:$0xf]
      %v1924 = vld [vmem:[%s1 + $0x130] sm:$0xf]
      %v1925 = vld [vmem:[%s1 + $0x134] sm:$0xf]
      %v1926 = vld [vmem:[%s1 + $0x138] sm:$0xf]
      %v1927 = vld [vmem:[%s1 + $0x13c] sm:$0xf]
      %v1928 = vld [vmem:[%s1 + $0x140] sm:$0xf]
      %v1929 = vld [vmem:[%s1 + $0x144] sm:$0xf]
      %v1930 = vld [vmem:[%s1 + $0x148] sm:$0xf]
      %v1931 = vld [vmem:[%s1 + $0x14c] sm:$0xf]
      %v1932 = vld [vmem:[%s1 + $0x150] sm:$0xf]
      %v1933 = vld [vmem:[%s1 + $0x154] sm:$0xf]
      %v1934 = vld [vmem:[%s1 + $0x158] sm:$0xf]
      %v1935 = vld [vmem:[%s1 + $0x15c] sm:$0xf]
      %v1936 = vld [vmem:[%s1 + $0x160] sm:$0xf]
      %v1937 = vld [vmem:[%s1 + $0x164] sm:$0xf]
      %v1938 = vld [vmem:[%s1 + $0x168] sm:$0xf]
      %v1939 = vld [vmem:[%s1 + $0x16c] sm:$0xf]
      %v1940 = vld [vmem:[%s1 + $0x170] sm:$0xf]
      %v1941 = vld [vmem:[%s1 + $0x174] sm:$0xf]
      %v1942 = vld [vmem:[%s1 + $0x178] sm:$0xf]
      %v1943 = vld [vmem:[%s1 + $0x17c] sm:$0xf]
      %v1944 = vld [vmem:[%s1 + $0x180] sm:$0xf]
      %v1945 = vld [vmem:[%s1 + $0x184] sm:$0xf]
      %v1946 = vld [vmem:[%s1 + $0x188] sm:$0xf]
      %v1947 = vld [vmem:[%s1 + $0x18c] sm:$0xf]
      %v1948 = vld [vmem:[%s1 + $0x190] sm:$0xf]
      %v1949 = vld [vmem:[%s1 + $0x194] sm:$0xf]
      %v1950 = vld [vmem:[%s1 + $0x198] sm:$0xf]
      %v1951 = vld [vmem:[%s1 + $0x19c] sm:$0xf]
      %v1952 = vld [vmem:[%s1 + $0x1a0] sm:$0xf]
      %v1953 = vld [vmem:[%s1 + $0x1a4] sm:$0xf]
      %v1954 = vld [vmem:[%s1 + $0x1a8] sm:$0xf]
      %v1955 = vld [vmem:[%s1 + $0x1ac] sm:$0xf]
      %v1956 = vld [vmem:[%s1 + $0x1b0] sm:$0xf]
      %v1957 = vld [vmem:[%s1 + $0x1b4] sm:$0xf]
      %v1958 = vld [vmem:[%s1 + $0x1b8] sm:$0xf]
      %v1959 = vld [vmem:[%s1 + $0x1bc] sm:$0xf]
      %v1960 = vld [vmem:[%s1 + $0x1c0] sm:$0xf]
      %v1961 = vld [vmem:[%s1 + $0x1c4] sm:$0xf]
      %v1962 = vld [vmem:[%s1 + $0x1c8] sm:$0xf]
      %v1963 = vld [vmem:[%s1 + $0x1cc] sm:$0xf]
      %v1964 = vld [vmem:[%s1 + $0x1d0] sm:$0xf]
      %v1965 = vld [vmem:[%s1 + $0x1d4] sm:$0xf]
      %v1966 = vld [vmem:[%s1 + $0x1d8] sm:$0xf]
      %v1967 = vld [vmem:[%s1 + $0x1dc] sm:$0xf]
      %v1968 = vld [vmem:[%s1 + $0x1e0] sm:$0xf]
      %v1969 = vld [vmem:[%s1 + $0x1e4] sm:$0xf]
      %v1970 = vld [vmem:[%s1 + $0x1e8] sm:$0xf]
      %v1971 = vld [vmem:[%s1 + $0x1ec] sm:$0xf]
      %v1972 = vld [vmem:[%s1 + $0x1f0] sm:$0xf]
      %v1973 = vld [vmem:[%s1 + $0x1f4] sm:$0xf]
      %v1974 = vld [vmem:[%s1 + $0x1f8] sm:$0xf]
      %v1975 = vld [vmem:[%s1 + $0x1fc] sm:$0xf]
      %v1976 = vld [vmem:[%s1 + $0x200] sm:$0xf]
      %v1977 = vld [vmem:[%s1 + $0x204] sm:$0xf]
      %v1978 = vld [vmem:[%s1 + $0x208] sm:$0xf]
      %v1979 = vld [vmem:[%s1 + $0x20c] sm:$0xf]
      %v1980 = vld [vmem:[%s1 + $0x210] sm:$0xf]
      %v1981 = vld [vmem:[%s1 + $0x214] sm:$0xf]
      %v1982 = vld [vmem:[%s1 + $0x218] sm:$0xf]
      %v1983 = vld [vmem:[%s1 + $0x21c] sm:$0xf]
      %v1984 = vld [vmem:[%s1 + $0x220] sm:$0xf]
      %v1985 = vld [vmem:[%s1 + $0x224] sm:$0xf]
      %v1986 = vld [vmem:[%s1 + $0x228] sm:$0xf]
      %v1987 = vld [vmem:[%s1 + $0x22c] sm:$0xf]
      %v1988 = vld [vmem:[%s1 + $0x230] sm:$0xf]
      %v1989 = vld [vmem:[%s1 + $0x234] sm:$0xf]
      %v1990 = vld [vmem:[%s1 + $0x238] sm:$0xf]
      %v1991 = vld [vmem:[%s1 + $0x23c] sm:$0xf]
      %v2136 = vunpack.c.l.b16 %v1848
      %v2137 = vunpack.c.l.b16 %v1849
      %v2138 = vunpack.c.l.b16 %v1850
      %v2139 = vunpack.c.l.b16 %v1851
      %v2140 = vunpack.c.l.b16 %v1852
      %v2141 = vunpack.c.l.b16 %v1853
      %v2142 = vunpack.c.l.b16 %v1854
      %v2143 = vunpack.c.l.b16 %v1855
      %v2144 = vunpack.c.l.b16 %v1856
      %v2145 = vunpack.c.l.b16 %v1857
      %v2146 = vunpack.c.l.b16 %v1858
      %v2147 = vunpack.c.l.b16 %v1859
      %v2148 = vunpack.c.l.b16 %v1860
      %v2149 = vunpack.c.l.b16 %v1861
      %v2150 = vunpack.c.l.b16 %v1862
      %v2151 = vunpack.c.l.b16 %v1863
      %v2152 = vunpack.c.l.b16 %v1864
      %v2153 = vunpack.c.l.b16 %v1865
      %v2154 = vunpack.c.l.b16 %v1866
      %v2155 = vunpack.c.l.b16 %v1867
      %v2156 = vunpack.c.l.b16 %v1868
      %v2157 = vunpack.c.l.b16 %v1869
      %v2158 = vunpack.c.l.b16 %v1870
      %v2159 = vunpack.c.l.b16 %v1871
      %v2160 = vunpack.c.l.b16 %v1872
      %v2161 = vunpack.c.l.b16 %v1873
      %v2162 = vunpack.c.l.b16 %v1874
      %v2163 = vunpack.c.l.b16 %v1875
      %v2164 = vunpack.c.l.b16 %v1876
      %v2165 = vunpack.c.l.b16 %v1877
      %v2166 = vunpack.c.l.b16 %v1878
      %v2167 = vunpack.c.l.b16 %v1879
      %v2168 = vunpack.c.l.b16 %v1880
      %v2169 = vunpack.c.l.b16 %v1881
      %v2170 = vunpack.c.l.b16 %v1882
      %v2171 = vunpack.c.l.b16 %v1883
      %v2172 = vunpack.c.l.b16 %v1884
      %v2173 = vunpack.c.l.b16 %v1885
      %v2174 = vunpack.c.l.b16 %v1886
      %v2175 = vunpack.c.l.b16 %v1887
      %v2176 = vunpack.c.l.b16 %v1888
      %v2177 = vunpack.c.l.b16 %v1889
      %v2178 = vunpack.c.l.b16 %v1890
      %v2179 = vunpack.c.l.b16 %v1891
      %v2180 = vunpack.c.l.b16 %v1892
      %v2181 = vunpack.c.l.b16 %v1893
      %v2182 = vunpack.c.l.b16 %v1894
      %v2183 = vunpack.c.l.b16 %v1895
      %v2184 = vunpack.c.l.b16 %v1896
      %v2185 = vunpack.c.l.b16 %v1897
      %v2186 = vunpack.c.l.b16 %v1898
      %v2187 = vunpack.c.l.b16 %v1899
      %v2188 = vunpack.c.l.b16 %v1900
      %v2189 = vunpack.c.l.b16 %v1901
      %v2190 = vunpack.c.l.b16 %v1902
      %v2191 = vunpack.c.l.b16 %v1903
      %v2192 = vunpack.c.l.b16 %v1904
      %v2193 = vunpack.c.l.b16 %v1905
      %v2194 = vunpack.c.l.b16 %v1906
      %v2195 = vunpack.c.l.b16 %v1907
      %v2196 = vunpack.c.l.b16 %v1908
      %v2197 = vunpack.c.l.b16 %v1909
      %v2198 = vunpack.c.l.b16 %v1910
      %v2199 = vunpack.c.l.b16 %v1911
      %v2200 = vunpack.c.l.b16 %v1912
      %v2201 = vunpack.c.l.b16 %v1913
      %v2202 = vunpack.c.l.b16 %v1914
      %v2203 = vunpack.c.l.b16 %v1915
      %v2204 = vunpack.c.l.b16 %v1916
      %v2205 = vunpack.c.l.b16 %v1917
      %v2206 = vunpack.c.l.b16 %v1918
      %v2207 = vunpack.c.l.b16 %v1919
      %v2208 = vunpack.c.l.b16 %v1920
      %v2209 = vunpack.c.l.b16 %v1921
      %v2210 = vunpack.c.l.b16 %v1922
      %v2211 = vunpack.c.l.b16 %v1923
      %v2212 = vunpack.c.l.b16 %v1924
      %v2213 = vunpack.c.l.b16 %v1925
      %v2214 = vunpack.c.l.b16 %v1926
      %v2215 = vunpack.c.l.b16 %v1927
      %v2216 = vunpack.c.l.b16 %v1928
      %v2217 = vunpack.c.l.b16 %v1929
      %v2218 = vunpack.c.l.b16 %v1930
      %v2219 = vunpack.c.l.b16 %v1931
      %v2220 = vunpack.c.l.b16 %v1932
      %v2221 = vunpack.c.l.b16 %v1933
      %v2222 = vunpack.c.l.b16 %v1934
      %v2223 = vunpack.c.l.b16 %v1935
      %v2224 = vunpack.c.l.b16 %v1936
      %v2225 = vunpack.c.l.b16 %v1937
      %v2226 = vunpack.c.l.b16 %v1938
      %v2227 = vunpack.c.l.b16 %v1939
      %v2228 = vunpack.c.l.b16 %v1940
      %v2229 = vunpack.c.l.b16 %v1941
      %v2230 = vunpack.c.l.b16 %v1942
      %v2231 = vunpack.c.l.b16 %v1943
      %v2232 = vunpack.c.l.b16 %v1944
      %v2233 = vunpack.c.l.b16 %v1945
      %v2234 = vunpack.c.l.b16 %v1946
      %v2235 = vunpack.c.l.b16 %v1947
      %v2236 = vunpack.c.l.b16 %v1948
      %v2237 = vunpack.c.l.b16 %v1949
      %v2238 = vunpack.c.l.b16 %v1950
      %v2239 = vunpack.c.l.b16 %v1951
      %v2240 = vunpack.c.l.b16 %v1952
      %v2241 = vunpack.c.l.b16 %v1953
      %v2242 = vunpack.c.l.b16 %v1954
      %v2243 = vunpack.c.l.b16 %v1955
      %v2244 = vunpack.c.l.b16 %v1956
      %v2245 = vunpack.c.l.b16 %v1957
      %v2246 = vunpack.c.l.b16 %v1958
      %v2247 = vunpack.c.l.b16 %v1959
      %v2248 = vunpack.c.l.b16 %v1960
      %v2249 = vunpack.c.l.b16 %v1961
      %v2250 = vunpack.c.l.b16 %v1962
      %v2251 = vunpack.c.l.b16 %v1963
      %v2252 = vunpack.c.l.b16 %v1964
      %v2253 = vunpack.c.l.b16 %v1965
      %v2254 = vunpack.c.l.b16 %v1966
      %v2255 = vunpack.c.l.b16 %v1967
      %v2256 = vunpack.c.l.b16 %v1968
      %v2257 = vunpack.c.l.b16 %v1969
      %v2258 = vunpack.c.l.b16 %v1970
      %v2259 = vunpack.c.l.b16 %v1971
      %v2260 = vunpack.c.l.b16 %v1972
      %v2261 = vunpack.c.l.b16 %v1973
      %v2262 = vunpack.c.l.b16 %v1974
      %v2263 = vunpack.c.l.b16 %v1975
      %v2264 = vunpack.c.l.b16 %v1976
      %v2265 = vunpack.c.l.b16 %v1977
      %v2266 = vunpack.c.l.b16 %v1978
      %v2267 = vunpack.c.l.b16 %v1979
      %v2268 = vunpack.c.l.b16 %v1980
      %v2269 = vunpack.c.l.b16 %v1981
      %v2270 = vunpack.c.l.b16 %v1982
      %v2271 = vunpack.c.l.b16 %v1983
      %v2272 = vunpack.c.l.b16 %v1984
      %v2273 = vunpack.c.l.b16 %v1985
      %v2274 = vunpack.c.l.b16 %v1986
      %v2275 = vunpack.c.l.b16 %v1987
      %v2276 = vunpack.c.l.b16 %v1988
      %v2277 = vunpack.c.l.b16 %v1989
      %v2278 = vunpack.c.l.b16 %v1990
      %v2279 = vunpack.c.l.b16 %v1991
      %v2280 = vpack.c.b16 %v2137, %v2136
      %v2281 = vpack.c.b16 %v2139, %v2138
      %v2282 = vpack.c.b16 %v2141, %v2140
      %v2283 = vpack.c.b16 %v2143, %v2142
      %v2284 = vpack.c.b16 %v2145, %v2144
      %v2285 = vpack.c.b16 %v2147, %v2146
      %v2286 = vpack.c.b16 %v2149, %v2148
      %v2287 = vpack.c.b16 %v2151, %v2150
      %v2288 = vpack.c.b16 %v2153, %v2152
      %v2289 = vpack.c.b16 %v2155, %v2154
      %v2290 = vpack.c.b16 %v2157, %v2156
      %v2291 = vpack.c.b16 %v2159, %v2158
      %v2292 = vpack.c.b16 %v2161, %v2160
      %v2293 = vpack.c.b16 %v2163, %v2162
      %v2294 = vpack.c.b16 %v2165, %v2164
      %v2295 = vpack.c.b16 %v2167, %v2166
      %v2296 = vpack.c.b16 %v2169, %v2168
      %v2297 = vpack.c.b16 %v2171, %v2170
      %v2298 = vpack.c.b16 %v2173, %v2172
      %v2299 = vpack.c.b16 %v2175, %v2174
      %v2300 = vpack.c.b16 %v2177, %v2176
      %v2301 = vpack.c.b16 %v2179, %v2178
      %v2302 = vpack.c.b16 %v2181, %v2180
      %v2303 = vpack.c.b16 %v2183, %v2182
      %v2304 = vpack.c.b16 %v2185, %v2184
      %v2305 = vpack.c.b16 %v2187, %v2186
      %v2306 = vpack.c.b16 %v2189, %v2188
      %v2307 = vpack.c.b16 %v2191, %v2190
      %v2308 = vpack.c.b16 %v2193, %v2192
      %v2309 = vpack.c.b16 %v2195, %v2194
      %v2310 = vpack.c.b16 %v2197, %v2196
      %v2311 = vpack.c.b16 %v2199, %v2198
      %v2312 = vpack.c.b16 %v2201, %v2200
      %v2313 = vpack.c.b16 %v2203, %v2202
      %v2314 = vpack.c.b16 %v2205, %v2204
      %v2315 = vpack.c.b16 %v2207, %v2206
      %v2316 = vpack.c.b16 %v2209, %v2208
      %v2317 = vpack.c.b16 %v2211, %v2210
      %v2318 = vpack.c.b16 %v2213, %v2212
      %v2319 = vpack.c.b16 %v2215, %v2214
      %v2320 = vpack.c.b16 %v2217, %v2216
      %v2321 = vpack.c.b16 %v2219, %v2218
      %v2322 = vpack.c.b16 %v2221, %v2220
      %v2323 = vpack.c.b16 %v2223, %v2222
      %v2324 = vpack.c.b16 %v2225, %v2224
      %v2325 = vpack.c.b16 %v2227, %v2226
      %v2326 = vpack.c.b16 %v2229, %v2228
      %v2327 = vpack.c.b16 %v2231, %v2230
      %v2328 = vpack.c.b16 %v2233, %v2232
      %v2329 = vpack.c.b16 %v2235, %v2234
      %v2330 = vpack.c.b16 %v2237, %v2236
      %v2331 = vpack.c.b16 %v2239, %v2238
      %v2332 = vpack.c.b16 %v2241, %v2240
      %v2333 = vpack.c.b16 %v2243, %v2242
      %v2334 = vpack.c.b16 %v2245, %v2244
      %v2335 = vpack.c.b16 %v2247, %v2246
      %v2336 = vpack.c.b16 %v2249, %v2248
      %v2337 = vpack.c.b16 %v2251, %v2250
      %v2338 = vpack.c.b16 %v2253, %v2252
      %v2339 = vpack.c.b16 %v2255, %v2254
      %v2340 = vpack.c.b16 %v2257, %v2256
      %v2341 = vpack.c.b16 %v2259, %v2258
      %v2342 = vpack.c.b16 %v2261, %v2260
      %v2343 = vpack.c.b16 %v2263, %v2262
      %v2344 = vpack.c.b16 %v2265, %v2264
      %v2345 = vpack.c.b16 %v2267, %v2266
      %v2346 = vpack.c.b16 %v2269, %v2268
      %v2347 = vpack.c.b16 %v2271, %v2270
      %v2348 = vpack.c.b16 %v2273, %v2272
      %v2349 = vpack.c.b16 %v2275, %v2274
      %v2350 = vpack.c.b16 %v2277, %v2276
      %v2351 = vpack.c.b16 %v2279, %v2278
      %2424 = vmatpush.bf16.msra.mxu0 %v2287
      %2425 = vmatpush.bf16.msra.mxu0 %v2286
      %2426 = vmatpush.bf16.msra.mxu0 %v2285
      %2427 = vmatpush.bf16.msra.mxu0 %v2284
      %2428 = vmatpush.bf16.msra.mxu0 %v2283
      %2429 = vmatpush.bf16.msra.mxu0 %v2282
      %2430 = vmatpush.bf16.msra.mxu0 %v2281
      %2431 = vmatpush.bf16.msra.mxu0 %v2280
      %2432 = vmatmul.bf16.gmra.mxu0 %v518
      %v2433 = vpop.f32.mrf.mxu0
      %v2434 = vadd.f32 0.0, %v2433
      %v2435 = vpop.f32.mrf.mxu0
      %v2436 = vadd.f32 0.0, %v2435
      %2437 = vmatmul.bf16.gmra.mxu0 %v519
      %v2438 = vpop.f32.mrf.mxu0
      %v2439 = vadd.f32 0.0, %v2438
      %v2440 = vpop.f32.mrf.mxu0
      %v2441 = vadd.f32 0.0, %v2440
      %2442 = vmatmul.bf16.gmra.mxu0 %v520
      %v2443 = vpop.f32.mrf.mxu0
      %v2444 = vadd.f32 0.0, %v2443
      %v2445 = vpop.f32.mrf.mxu0
      %v2446 = vadd.f32 0.0, %v2445
      %2447 = vmatmul.bf16.gmra.mxu0 %v521
      %v2448 = vpop.f32.mrf.mxu0
      %v2449 = vadd.f32 0.0, %v2448
      %v2450 = vpop.f32.mrf.mxu0
      %v2451 = vadd.f32 0.0, %v2450
      %2452 = vmatmul.bf16.gmra.mxu0 %v522
      %v2453 = vpop.f32.mrf.mxu0
      %v2454 = vadd.f32 0.0, %v2453
      %v2455 = vpop.f32.mrf.mxu0
      %v2456 = vadd.f32 0.0, %v2455
      %2457 = vmatmul.bf16.gmra.mxu0 %v523
      %v2458 = vpop.f32.mrf.mxu0
      %v2459 = vadd.f32 0.0, %v2458
      %v2460 = vpop.f32.mrf.mxu0
      %v2461 = vadd.f32 0.0, %v2460
      %2462 = vmatmul.bf16.gmra.mxu0 %v524
      %v2463 = vpop.f32.mrf.mxu0
      %v2464 = vadd.f32 0.0, %v2463
      %v2465 = vpop.f32.mrf.mxu0
      %v2466 = vadd.f32 0.0, %v2465
      %2467 = vmatmul.bf16.gmra.mxu0 %v525
      %v2468 = vpop.f32.mrf.mxu0
      %v2469 = vadd.f32 0.0, %v2468
      %v2470 = vpop.f32.mrf.mxu0
      %v2471 = vadd.f32 0.0, %v2470
      %2472 = vmatmul.bf16.gmra.mxu0 %v526
      %v2473 = vpop.f32.mrf.mxu0
      %v2474 = vadd.f32 0.0, %v2473
      %v2475 = vpop.f32.mrf.mxu0
      %v2476 = vadd.f32 0.0, %v2475
      %2477 = vmatmul.bf16.gmra.mxu0 %v527
      %v2478 = vpop.f32.mrf.mxu0
      %v2479 = vadd.f32 0.0, %v2478
      %v2480 = vpop.f32.mrf.mxu0
      %v2481 = vadd.f32 0.0, %v2480
      %2482 = vmatmul.bf16.gmra.mxu0 %v528
      %v2483 = vpop.f32.mrf.mxu0
      %v2484 = vadd.f32 0.0, %v2483
      %v2485 = vpop.f32.mrf.mxu0
      %v2486 = vadd.f32 0.0, %v2485
      %2487 = vmatmul.bf16.gmra.mxu0 %v529
      %v2488 = vpop.f32.mrf.mxu0
      %v2489 = vadd.f32 0.0, %v2488
      %v2490 = vpop.f32.mrf.mxu0
      %v2491 = vadd.f32 0.0, %v2490
      %2492 = vmatmul.bf16.gmra.mxu0 %v530
      %v2493 = vpop.f32.mrf.mxu0
      %v2494 = vadd.f32 0.0, %v2493
      %v2495 = vpop.f32.mrf.mxu0
      %v2496 = vadd.f32 0.0, %v2495
      %2497 = vmatmul.bf16.gmra.mxu0 %v531
      %v2498 = vpop.f32.mrf.mxu0
      %v2499 = vadd.f32 0.0, %v2498
      %v2500 = vpop.f32.mrf.mxu0
      %v2501 = vadd.f32 0.0, %v2500
      %2502 = vmatmul.bf16.gmra.mxu0 %v532
      %v2503 = vpop.f32.mrf.mxu0
      %v2504 = vadd.f32 0.0, %v2503
      %v2505 = vpop.f32.mrf.mxu0
      %v2506 = vadd.f32 0.0, %v2505
      %2507 = vmatmul.bf16.gmra.mxu0 %v533
      %v2508 = vpop.f32.mrf.mxu0
      %v2509 = vadd.f32 0.0, %v2508
      %v2510 = vpop.f32.mrf.mxu0
      %v2511 = vadd.f32 0.0, %v2510
      %2512 = vdwg.mxu0
      %2513 = vmatpush.bf16.msra.mxu0 %v2295
      %2514 = vmatpush.bf16.msra.mxu0 %v2294
      %2515 = vmatpush.bf16.msra.mxu0 %v2293
      %2516 = vmatpush.bf16.msra.mxu0 %v2292
      %2517 = vmatpush.bf16.msra.mxu0 %v2291
      %2518 = vmatpush.bf16.msra.mxu0 %v2290
      %2519 = vmatpush.bf16.msra.mxu0 %v2289
      %2520 = vmatpush.bf16.msra.mxu0 %v2288
      %2521 = vmatmul.bf16.gmra.mxu0 %v610
      %v2522 = vpop.f32.mrf.mxu0
      %v2523 = vadd.f32 %v2434, %v2522
      %v2524 = vpop.f32.mrf.mxu0
      %v2525 = vadd.f32 %v2436, %v2524
      %2526 = vmatmul.bf16.gmra.mxu0 %v622
      %v2527 = vpop.f32.mrf.mxu0
      %v2528 = vadd.f32 %v2439, %v2527
      %v2529 = vpop.f32.mrf.mxu0
      %v2530 = vadd.f32 %v2441, %v2529
      %2531 = vmatmul.bf16.gmra.mxu0 %v634
      %v2532 = vpop.f32.mrf.mxu0
      %v2533 = vadd.f32 %v2444, %v2532
      %v2534 = vpop.f32.mrf.mxu0
      %v2535 = vadd.f32 %v2446, %v2534
      %2536 = vmatmul.bf16.gmra.mxu0 %v646
      %v2537 = vpop.f32.mrf.mxu0
      %v2538 = vadd.f32 %v2449, %v2537
      %v2539 = vpop.f32.mrf.mxu0
      %v2540 = vadd.f32 %v2451, %v2539
      %2541 = vmatmul.bf16.gmra.mxu0 %v658
      %v2542 = vpop.f32.mrf.mxu0
      %v2543 = vadd.f32 %v2454, %v2542
      %v2544 = vpop.f32.mrf.mxu0
      %v2545 = vadd.f32 %v2456, %v2544
      %2546 = vmatmul.bf16.gmra.mxu0 %v670
      %v2547 = vpop.f32.mrf.mxu0
      %v2548 = vadd.f32 %v2459, %v2547
      %v2549 = vpop.f32.mrf.mxu0
      %v2550 = vadd.f32 %v2461, %v2549
      %2551 = vmatmul.bf16.gmra.mxu0 %v682
      %v2552 = vpop.f32.mrf.mxu0
      %v2553 = vadd.f32 %v2464, %v2552
      %v2554 = vpop.f32.mrf.mxu0
      %v2555 = vadd.f32 %v2466, %v2554
      %2556 = vmatmul.bf16.gmra.mxu0 %v694
      %v2557 = vpop.f32.mrf.mxu0
      %v2558 = vadd.f32 %v2469, %v2557
      %v2559 = vpop.f32.mrf.mxu0
      %v2560 = vadd.f32 %v2471, %v2559
      %2561 = vmatmul.bf16.gmra.mxu0 %v706
      %v2562 = vpop.f32.mrf.mxu0
      %v2563 = vadd.f32 %v2474, %v2562
      %v2564 = vpop.f32.mrf.mxu0
      %v2565 = vadd.f32 %v2476, %v2564
      %2566 = vmatmul.bf16.gmra.mxu0 %v718
      %v2567 = vpop.f32.mrf.mxu0
      %v2568 = vadd.f32 %v2479, %v2567
      %v2569 = vpop.f32.mrf.mxu0
      %v2570 = vadd.f32 %v2481, %v2569
      %2571 = vmatmul.bf16.gmra.mxu0 %v730
      %v2572 = vpop.f32.mrf.mxu0
      %v2573 = vadd.f32 %v2484, %v2572
      %v2574 = vpop.f32.mrf.mxu0
      %v2575 = vadd.f32 %v2486, %v2574
      %2576 = vmatmul.bf16.gmra.mxu0 %v742
      %v2577 = vpop.f32.mrf.mxu0
      %v2578 = vadd.f32 %v2489, %v2577
      %v2579 = vpop.f32.mrf.mxu0
      %v2580 = vadd.f32 %v2491, %v2579
      %2581 = vmatmul.bf16.gmra.mxu0 %v754
      %v2582 = vpop.f32.mrf.mxu0
      %v2583 = vadd.f32 %v2494, %v2582
      %v2584 = vpop.f32.mrf.mxu0
      %v2585 = vadd.f32 %v2496, %v2584
      %2586 = vmatmul.bf16.gmra.mxu0 %v766
      %v2587 = vpop.f32.mrf.mxu0
      %v2588 = vadd.f32 %v2499, %v2587
      %v2589 = vpop.f32.mrf.mxu0
      %v2590 = vadd.f32 %v2501, %v2589
      %2591 = vmatmul.bf16.gmra.mxu0 %v778
      %v2592 = vpop.f32.mrf.mxu0
      %v2593 = vadd.f32 %v2504, %v2592
      %v2594 = vpop.f32.mrf.mxu0
      %v2595 = vadd.f32 %v2506, %v2594
      %2596 = vmatmul.bf16.gmra.mxu0 %v790
      %v2597 = vpop.f32.mrf.mxu0
      %v2598 = vadd.f32 %v2509, %v2597
      %v2599 = vpop.f32.mrf.mxu0
      %v2600 = vadd.f32 %v2511, %v2599
      %2601 = vdwg.mxu0
      %2602 = vmatpush.bf16.msra.mxu0 %v2303
      %2603 = vmatpush.bf16.msra.mxu0 %v2302
      %2604 = vmatpush.bf16.msra.mxu0 %v2301
      %2605 = vmatpush.bf16.msra.mxu0 %v2300
      %2606 = vmatpush.bf16.msra.mxu0 %v2299
      %2607 = vmatpush.bf16.msra.mxu0 %v2298
      %2608 = vmatpush.bf16.msra.mxu0 %v2297
      %2609 = vmatpush.bf16.msra.mxu0 %v2296
      %2610 = vmatmul.bf16.gmra.mxu0 %v858
      %v2611 = vpop.f32.mrf.mxu0
      %v2612 = vadd.f32 %v2523, %v2611
      %v2613 = vpop.f32.mrf.mxu0
      %v2614 = vadd.f32 %v2525, %v2613
      %2615 = vmatmul.bf16.gmra.mxu0 %v861
      %v2616 = vpop.f32.mrf.mxu0
      %v2617 = vadd.f32 %v2528, %v2616
      %v2618 = vpop.f32.mrf.mxu0
      %v2619 = vadd.f32 %v2530, %v2618
      %2620 = vmatmul.bf16.gmra.mxu0 %v864
      %v2621 = vpop.f32.mrf.mxu0
      %v2622 = vadd.f32 %v2533, %v2621
      %v2623 = vpop.f32.mrf.mxu0
      %v2624 = vadd.f32 %v2535, %v2623
      %2625 = vmatmul.bf16.gmra.mxu0 %v867
      %v2626 = vpop.f32.mrf.mxu0
      %v2627 = vadd.f32 %v2538, %v2626
      %v2628 = vpop.f32.mrf.mxu0
      %v2629 = vadd.f32 %v2540, %v2628
      %2630 = vmatmul.bf16.gmra.mxu0 %v870
      %v2631 = vpop.f32.mrf.mxu0
      %v2632 = vadd.f32 %v2543, %v2631
      %v2633 = vpop.f32.mrf.mxu0
      %v2634 = vadd.f32 %v2545, %v2633
      %2635 = vmatmul.bf16.gmra.mxu0 %v873
      %v2636 = vpop.f32.mrf.mxu0
      %v2637 = vadd.f32 %v2548, %v2636
      %v2638 = vpop.f32.mrf.mxu0
      %v2639 = vadd.f32 %v2550, %v2638
      %2640 = vmatmul.bf16.gmra.mxu0 %v876
      %v2641 = vpop.f32.mrf.mxu0
      %v2642 = vadd.f32 %v2553, %v2641
      %v2643 = vpop.f32.mrf.mxu0
      %v2644 = vadd.f32 %v2555, %v2643
      %2645 = vmatmul.bf16.gmra.mxu0 %v879
      %v2646 = vpop.f32.mrf.mxu0
      %v2647 = vadd.f32 %v2558, %v2646
      %v2648 = vpop.f32.mrf.mxu0
      %v2649 = vadd.f32 %v2560, %v2648
      %2650 = vmatmul.bf16.gmra.mxu0 %v882
      %v2651 = vpop.f32.mrf.mxu0
      %v2652 = vadd.f32 %v2563, %v2651
      %v2653 = vpop.f32.mrf.mxu0
      %v2654 = vadd.f32 %v2565, %v2653
      %2655 = vmatmul.bf16.gmra.mxu0 %v885
      %v2656 = vpop.f32.mrf.mxu0
      %v2657 = vadd.f32 %v2568, %v2656
      %v2658 = vpop.f32.mrf.mxu0
      %v2659 = vadd.f32 %v2570, %v2658
      %2660 = vmatmul.bf16.gmra.mxu0 %v888
      %v2661 = vpop.f32.mrf.mxu0
      %v2662 = vadd.f32 %v2573, %v2661
      %v2663 = vpop.f32.mrf.mxu0
      %v2664 = vadd.f32 %v2575, %v2663
      %2665 = vmatmul.bf16.gmra.mxu0 %v891
      %v2666 = vpop.f32.mrf.mxu0
      %v2667 = vadd.f32 %v2578, %v2666
      %v2668 = vpop.f32.mrf.mxu0
      %v2669 = vadd.f32 %v2580, %v2668
      %2670 = vmatmul.bf16.gmra.mxu0 %v894
      %v2671 = vpop.f32.mrf.mxu0
      %v2672 = vadd.f32 %v2583, %v2671
      %v2673 = vpop.f32.mrf.mxu0
      %v2674 = vadd.f32 %v2585, %v2673
      %2675 = vmatmul.bf16.gmra.mxu0 %v897
      %v2676 = vpop.f32.mrf.mxu0
      %v2677 = vadd.f32 %v2588, %v2676
      %v2678 = vpop.f32.mrf.mxu0
      %v2679 = vadd.f32 %v2590, %v2678
      %2680 = vmatmul.bf16.gmra.mxu0 %v900
      %v2681 = vpop.f32.mrf.mxu0
      %v2682 = vadd.f32 %v2593, %v2681
      %v2683 = vpop.f32.mrf.mxu0
      %v2684 = vadd.f32 %v2595, %v2683
      %2685 = vmatmul.bf16.gmra.mxu0 %v903
      %v2686 = vpop.f32.mrf.mxu0
      %v2687 = vadd.f32 %v2598, %v2686
      %v2688 = vpop.f32.mrf.mxu0
      %v2689 = vadd.f32 %v2600, %v2688
      %2690 = vdwg.mxu0
      %2691 = vmatpush.bf16.msra.mxu0 %v2311
      %2692 = vmatpush.bf16.msra.mxu0 %v2310
      %2693 = vmatpush.bf16.msra.mxu0 %v2309
      %2694 = vmatpush.bf16.msra.mxu0 %v2308
      %2695 = vmatpush.bf16.msra.mxu0 %v2307
      %2696 = vmatpush.bf16.msra.mxu0 %v2306
      %2697 = vmatpush.bf16.msra.mxu0 %v2305
      %2698 = vmatpush.bf16.msra.mxu0 %v2304
      %2699 = vmatmul.bf16.gmra.mxu0 %v984
      %v2700 = vpop.f32.mrf.mxu0
      %v2701 = vadd.f32 %v2612, %v2700
      %v2702 = vpop.f32.mrf.mxu0
      %v2703 = vadd.f32 %v2614, %v2702
      %2704 = vmatmul.bf16.gmra.mxu0 %v985
      %v2705 = vpop.f32.mrf.mxu0
      %v2706 = vadd.f32 %v2617, %v2705
      %v2707 = vpop.f32.mrf.mxu0
      %v2708 = vadd.f32 %v2619, %v2707
      %2709 = vmatmul.bf16.gmra.mxu0 %v986
      %v2710 = vpop.f32.mrf.mxu0
      %v2711 = vadd.f32 %v2622, %v2710
      %v2712 = vpop.f32.mrf.mxu0
      %v2713 = vadd.f32 %v2624, %v2712
      %2714 = vmatmul.bf16.gmra.mxu0 %v987
      %v2715 = vpop.f32.mrf.mxu0
      %v2716 = vadd.f32 %v2627, %v2715
      %v2717 = vpop.f32.mrf.mxu0
      %v2718 = vadd.f32 %v2629, %v2717
      %2719 = vmatmul.bf16.gmra.mxu0 %v988
      %v2720 = vpop.f32.mrf.mxu0
      %v2721 = vadd.f32 %v2632, %v2720
      %v2722 = vpop.f32.mrf.mxu0
      %v2723 = vadd.f32 %v2634, %v2722
      %2724 = vmatmul.bf16.gmra.mxu0 %v989
      %v2725 = vpop.f32.mrf.mxu0
      %v2726 = vadd.f32 %v2637, %v2725
      %v2727 = vpop.f32.mrf.mxu0
      %v2728 = vadd.f32 %v2639, %v2727
      %2729 = vmatmul.bf16.gmra.mxu0 %v990
      %v2730 = vpop.f32.mrf.mxu0
      %v2731 = vadd.f32 %v2642, %v2730
      %v2732 = vpop.f32.mrf.mxu0
      %v2733 = vadd.f32 %v2644, %v2732
      %2734 = vmatmul.bf16.gmra.mxu0 %v991
      %v2735 = vpop.f32.mrf.mxu0
      %v2736 = vadd.f32 %v2647, %v2735
      %v2737 = vpop.f32.mrf.mxu0
      %v2738 = vadd.f32 %v2649, %v2737
      %2739 = vmatmul.bf16.gmra.mxu0 %v992
      %v2740 = vpop.f32.mrf.mxu0
      %v2741 = vadd.f32 %v2652, %v2740
      %v2742 = vpop.f32.mrf.mxu0
      %v2743 = vadd.f32 %v2654, %v2742
      %2744 = vmatmul.bf16.gmra.mxu0 %v993
      %v2745 = vpop.f32.mrf.mxu0
      %v2746 = vadd.f32 %v2657, %v2745
      %v2747 = vpop.f32.mrf.mxu0
      %v2748 = vadd.f32 %v2659, %v2747
      %2749 = vmatmul.bf16.gmra.mxu0 %v994
      %v2750 = vpop.f32.mrf.mxu0
      %v2751 = vadd.f32 %v2662, %v2750
      %v2752 = vpop.f32.mrf.mxu0
      %v2753 = vadd.f32 %v2664, %v2752
      %2754 = vmatmul.bf16.gmra.mxu0 %v995
      %v2755 = vpop.f32.mrf.mxu0
      %v2756 = vadd.f32 %v2667, %v2755
      %v2757 = vpop.f32.mrf.mxu0
      %v2758 = vadd.f32 %v2669, %v2757
      %2759 = vmatmul.bf16.gmra.mxu0 %v996
      %v2760 = vpop.f32.mrf.mxu0
      %v2761 = vadd.f32 %v2672, %v2760
      %v2762 = vpop.f32.mrf.mxu0
      %v2763 = vadd.f32 %v2674, %v2762
      %2764 = vmatmul.bf16.gmra.mxu0 %v997
      %v2765 = vpop.f32.mrf.mxu0
      %v2766 = vadd.f32 %v2677, %v2765
      %v2767 = vpop.f32.mrf.mxu0
      %v2768 = vadd.f32 %v2679, %v2767
      %2769 = vmatmul.bf16.gmra.mxu0 %v998
      %v2770 = vpop.f32.mrf.mxu0
      %v2771 = vadd.f32 %v2682, %v2770
      %v2772 = vpop.f32.mrf.mxu0
      %v2773 = vadd.f32 %v2684, %v2772
      %2774 = vmatmul.bf16.gmra.mxu0 %v999
      %v2775 = vpop.f32.mrf.mxu0
      %v2776 = vadd.f32 %v2687, %v2775
      %v2777 = vpop.f32.mrf.mxu0
      %v2778 = vadd.f32 %v2689, %v2777
      %2779 = vdwg.mxu0
      %2780 = vmatpush.bf16.msra.mxu0 %v2319
      %2781 = vmatpush.bf16.msra.mxu0 %v2318
      %2782 = vmatpush.bf16.msra.mxu0 %v2317
      %2783 = vmatpush.bf16.msra.mxu0 %v2316
      %2784 = vmatpush.bf16.msra.mxu0 %v2315
      %2785 = vmatpush.bf16.msra.mxu0 %v2314
      %2786 = vmatpush.bf16.msra.mxu0 %v2313
      %2787 = vmatpush.bf16.msra.mxu0 %v2312
      %2788 = vmatmul.bf16.gmra.mxu0 %v1075
      %v2789 = vpop.f32.mrf.mxu0
      %v2790 = vadd.f32 %v2701, %v2789
      %v2791 = vpop.f32.mrf.mxu0
      %v2792 = vadd.f32 %v2703, %v2791
      %2793 = vmatmul.bf16.gmra.mxu0 %v1087
      %v2794 = vpop.f32.mrf.mxu0
      %v2795 = vadd.f32 %v2706, %v2794
      %v2796 = vpop.f32.mrf.mxu0
      %v2797 = vadd.f32 %v2708, %v2796
      %2798 = vmatmul.bf16.gmra.mxu0 %v1099
      %v2799 = vpop.f32.mrf.mxu0
      %v2800 = vadd.f32 %v2711, %v2799
      %v2801 = vpop.f32.mrf.mxu0
      %v2802 = vadd.f32 %v2713, %v2801
      %2803 = vmatmul.bf16.gmra.mxu0 %v1111
      %v2804 = vpop.f32.mrf.mxu0
      %v2805 = vadd.f32 %v2716, %v2804
      %v2806 = vpop.f32.mrf.mxu0
      %v2807 = vadd.f32 %v2718, %v2806
      %2808 = vmatmul.bf16.gmra.mxu0 %v1123
      %v2809 = vpop.f32.mrf.mxu0
      %v2810 = vadd.f32 %v2721, %v2809
      %v2811 = vpop.f32.mrf.mxu0
      %v2812 = vadd.f32 %v2723, %v2811
      %2813 = vmatmul.bf16.gmra.mxu0 %v1135
      %v2814 = vpop.f32.mrf.mxu0
      %v2815 = vadd.f32 %v2726, %v2814
      %v2816 = vpop.f32.mrf.mxu0
      %v2817 = vadd.f32 %v2728, %v2816
      %2818 = vmatmul.bf16.gmra.mxu0 %v1147
      %v2819 = vpop.f32.mrf.mxu0
      %v2820 = vadd.f32 %v2731, %v2819
      %v2821 = vpop.f32.mrf.mxu0
      %v2822 = vadd.f32 %v2733, %v2821
      %2823 = vmatmul.bf16.gmra.mxu0 %v1159
      %v2824 = vpop.f32.mrf.mxu0
      %v2825 = vadd.f32 %v2736, %v2824
      %v2826 = vpop.f32.mrf.mxu0
      %v2827 = vadd.f32 %v2738, %v2826
      %2828 = vmatmul.bf16.gmra.mxu0 %v1171
      %v2829 = vpop.f32.mrf.mxu0
      %v2830 = vadd.f32 %v2741, %v2829
      %v2831 = vpop.f32.mrf.mxu0
      %v2832 = vadd.f32 %v2743, %v2831
      %2833 = vmatmul.bf16.gmra.mxu0 %v1183
      %v2834 = vpop.f32.mrf.mxu0
      %v2835 = vadd.f32 %v2746, %v2834
      %v2836 = vpop.f32.mrf.mxu0
      %v2837 = vadd.f32 %v2748, %v2836
      %2838 = vmatmul.bf16.gmra.mxu0 %v1195
      %v2839 = vpop.f32.mrf.mxu0
      %v2840 = vadd.f32 %v2751, %v2839
      %v2841 = vpop.f32.mrf.mxu0
      %v2842 = vadd.f32 %v2753, %v2841
      %2843 = vmatmul.bf16.gmra.mxu0 %v1207
      %v2844 = vpop.f32.mrf.mxu0
      %v2845 = vadd.f32 %v2756, %v2844
      %v2846 = vpop.f32.mrf.mxu0
      %v2847 = vadd.f32 %v2758, %v2846
      %2848 = vmatmul.bf16.gmra.mxu0 %v1219
      %v2849 = vpop.f32.mrf.mxu0
      %v2850 = vadd.f32 %v2761, %v2849
      %v2851 = vpop.f32.mrf.mxu0
      %v2852 = vadd.f32 %v2763, %v2851
      %2853 = vmatmul.bf16.gmra.mxu0 %v1231
      %v2854 = vpop.f32.mrf.mxu0
      %v2855 = vadd.f32 %v2766, %v2854
      %v2856 = vpop.f32.mrf.mxu0
      %v2857 = vadd.f32 %v2768, %v2856
      %2858 = vmatmul.bf16.gmra.mxu0 %v1243
      %v2859 = vpop.f32.mrf.mxu0
      %v2860 = vadd.f32 %v2771, %v2859
      %v2861 = vpop.f32.mrf.mxu0
      %v2862 = vadd.f32 %v2773, %v2861
      %2863 = vmatmul.bf16.gmra.mxu0 %v1255
      %v2864 = vpop.f32.mrf.mxu0
      %v2865 = vadd.f32 %v2776, %v2864
      %v2866 = vpop.f32.mrf.mxu0
      %v2867 = vadd.f32 %v2778, %v2866
      %2868 = vdwg.mxu0
      %2869 = vmatpush.bf16.msra.mxu0 %v2327
      %2870 = vmatpush.bf16.msra.mxu0 %v2326
      %2871 = vmatpush.bf16.msra.mxu0 %v2325
      %2872 = vmatpush.bf16.msra.mxu0 %v2324
      %2873 = vmatpush.bf16.msra.mxu0 %v2323
      %2874 = vmatpush.bf16.msra.mxu0 %v2322
      %2875 = vmatpush.bf16.msra.mxu0 %v2321
      %2876 = vmatpush.bf16.msra.mxu0 %v2320
      %2877 = vmatmul.bf16.gmra.mxu0 %v1322
      %v2878 = vpop.f32.mrf.mxu0
      %v2879 = vadd.f32 %v2790, %v2878
      %v2880 = vpop.f32.mrf.mxu0
      %v2881 = vadd.f32 %v2792, %v2880
      %2882 = vmatmul.bf16.gmra.mxu0 %v1325
      %v2883 = vpop.f32.mrf.mxu0
      %v2884 = vadd.f32 %v2795, %v2883
      %v2885 = vpop.f32.mrf.mxu0
      %v2886 = vadd.f32 %v2797, %v2885
      %2887 = vmatmul.bf16.gmra.mxu0 %v1328
      %v2888 = vpop.f32.mrf.mxu0
      %v2889 = vadd.f32 %v2800, %v2888
      %v2890 = vpop.f32.mrf.mxu0
      %v2891 = vadd.f32 %v2802, %v2890
      %2892 = vmatmul.bf16.gmra.mxu0 %v1331
      %v2893 = vpop.f32.mrf.mxu0
      %v2894 = vadd.f32 %v2805, %v2893
      %v2895 = vpop.f32.mrf.mxu0
      %v2896 = vadd.f32 %v2807, %v2895
      %2897 = vmatmul.bf16.gmra.mxu0 %v1334
      %v2898 = vpop.f32.mrf.mxu0
      %v2899 = vadd.f32 %v2810, %v2898
      %v2900 = vpop.f32.mrf.mxu0
      %v2901 = vadd.f32 %v2812, %v2900
      %2902 = vmatmul.bf16.gmra.mxu0 %v1337
      %v2903 = vpop.f32.mrf.mxu0
      %v2904 = vadd.f32 %v2815, %v2903
      %v2905 = vpop.f32.mrf.mxu0
      %v2906 = vadd.f32 %v2817, %v2905
      %2907 = vmatmul.bf16.gmra.mxu0 %v1340
      %v2908 = vpop.f32.mrf.mxu0
      %v2909 = vadd.f32 %v2820, %v2908
      %v2910 = vpop.f32.mrf.mxu0
      %v2911 = vadd.f32 %v2822, %v2910
      %2912 = vmatmul.bf16.gmra.mxu0 %v1343
      %v2913 = vpop.f32.mrf.mxu0
      %v2914 = vadd.f32 %v2825, %v2913
      %v2915 = vpop.f32.mrf.mxu0
      %v2916 = vadd.f32 %v2827, %v2915
      %2917 = vmatmul.bf16.gmra.mxu0 %v1346
      %v2918 = vpop.f32.mrf.mxu0
      %v2919 = vadd.f32 %v2830, %v2918
      %v2920 = vpop.f32.mrf.mxu0
      %v2921 = vadd.f32 %v2832, %v2920
      %2922 = vmatmul.bf16.gmra.mxu0 %v1349
      %v2923 = vpop.f32.mrf.mxu0
      %v2924 = vadd.f32 %v2835, %v2923
      %v2925 = vpop.f32.mrf.mxu0
      %v2926 = vadd.f32 %v2837, %v2925
      %2927 = vmatmul.bf16.gmra.mxu0 %v1352
      %v2928 = vpop.f32.mrf.mxu0
      %v2929 = vadd.f32 %v2840, %v2928
      %v2930 = vpop.f32.mrf.mxu0
      %v2931 = vadd.f32 %v2842, %v2930
      %2932 = vmatmul.bf16.gmra.mxu0 %v1355
      %v2933 = vpop.f32.mrf.mxu0
      %v2934 = vadd.f32 %v2845, %v2933
      %v2935 = vpop.f32.mrf.mxu0
      %v2936 = vadd.f32 %v2847, %v2935
      %2937 = vmatmul.bf16.gmra.mxu0 %v1358
      %v2938 = vpop.f32.mrf.mxu0
      %v2939 = vadd.f32 %v2850, %v2938
      %v2940 = vpop.f32.mrf.mxu0
      %v2941 = vadd.f32 %v2852, %v2940
      %2942 = vmatmul.bf16.gmra.mxu0 %v1361
      %v2943 = vpop.f32.mrf.mxu0
      %v2944 = vadd.f32 %v2855, %v2943
      %v2945 = vpop.f32.mrf.mxu0
      %v2946 = vadd.f32 %v2857, %v2945
      %2947 = vmatmul.bf16.gmra.mxu0 %v1364
      %v2948 = vpop.f32.mrf.mxu0
      %v2949 = vadd.f32 %v2860, %v2948
      %v2950 = vpop.f32.mrf.mxu0
      %v2951 = vadd.f32 %v2862, %v2950
      %2952 = vmatmul.bf16.gmra.mxu0 %v1367
      %v2953 = vpop.f32.mrf.mxu0
      %v2954 = vadd.f32 %v2865, %v2953
      %v2955 = vpop.f32.mrf.mxu0
      %v2956 = vadd.f32 %v2867, %v2955
      %2957 = vdwg.mxu0
      %2958 = vmatpush.bf16.msra.mxu0 %v2335
      %2959 = vmatpush.bf16.msra.mxu0 %v2334
      %2960 = vmatpush.bf16.msra.mxu0 %v2333
      %2961 = vmatpush.bf16.msra.mxu0 %v2332
      %2962 = vmatpush.bf16.msra.mxu0 %v2331
      %2963 = vmatpush.bf16.msra.mxu0 %v2330
      %2964 = vmatpush.bf16.msra.mxu0 %v2329
      %2965 = vmatpush.bf16.msra.mxu0 %v2328
      %2966 = vmatmul.bf16.gmra.mxu0 %v1448
      %v2967 = vpop.f32.mrf.mxu0
      %v2968 = vadd.f32 %v2879, %v2967
      %v2969 = vpop.f32.mrf.mxu0
      %v2970 = vadd.f32 %v2881, %v2969
      %2971 = vmatmul.bf16.gmra.mxu0 %v1449
      %v2972 = vpop.f32.mrf.mxu0
      %v2973 = vadd.f32 %v2884, %v2972
      %v2974 = vpop.f32.mrf.mxu0
      %v2975 = vadd.f32 %v2886, %v2974
      %2976 = vmatmul.bf16.gmra.mxu0 %v1450
      %v2977 = vpop.f32.mrf.mxu0
      %v2978 = vadd.f32 %v2889, %v2977
      %v2979 = vpop.f32.mrf.mxu0
      %v2980 = vadd.f32 %v2891, %v2979
      %2981 = vmatmul.bf16.gmra.mxu0 %v1451
      %v2982 = vpop.f32.mrf.mxu0
      %v2983 = vadd.f32 %v2894, %v2982
      %v2984 = vpop.f32.mrf.mxu0
      %v2985 = vadd.f32 %v2896, %v2984
      %2986 = vmatmul.bf16.gmra.mxu0 %v1452
      %v2987 = vpop.f32.mrf.mxu0
      %v2988 = vadd.f32 %v2899, %v2987
      %v2989 = vpop.f32.mrf.mxu0
      %v2990 = vadd.f32 %v2901, %v2989
      %2991 = vmatmul.bf16.gmra.mxu0 %v1453
      %v2992 = vpop.f32.mrf.mxu0
      %v2993 = vadd.f32 %v2904, %v2992
      %v2994 = vpop.f32.mrf.mxu0
      %v2995 = vadd.f32 %v2906, %v2994
      %2996 = vmatmul.bf16.gmra.mxu0 %v1454
      %v2997 = vpop.f32.mrf.mxu0
      %v2998 = vadd.f32 %v2909, %v2997
      %v2999 = vpop.f32.mrf.mxu0
      %v3000 = vadd.f32 %v2911, %v2999
      %3001 = vmatmul.bf16.gmra.mxu0 %v1455
      %v3002 = vpop.f32.mrf.mxu0
      %v3003 = vadd.f32 %v2914, %v3002
      %v3004 = vpop.f32.mrf.mxu0
      %v3005 = vadd.f32 %v2916, %v3004
      %3006 = vmatmul.bf16.gmra.mxu0 %v1456
      %v3007 = vpop.f32.mrf.mxu0
      %v3008 = vadd.f32 %v2919, %v3007
      %v3009 = vpop.f32.mrf.mxu0
      %v3010 = vadd.f32 %v2921, %v3009
      %3011 = vmatmul.bf16.gmra.mxu0 %v1457
      %v3012 = vpop.f32.mrf.mxu0
      %v3013 = vadd.f32 %v2924, %v3012
      %v3014 = vpop.f32.mrf.mxu0
      %v3015 = vadd.f32 %v2926, %v3014
      %3016 = vmatmul.bf16.gmra.mxu0 %v1458
      %v3017 = vpop.f32.mrf.mxu0
      %v3018 = vadd.f32 %v2929, %v3017
      %v3019 = vpop.f32.mrf.mxu0
      %v3020 = vadd.f32 %v2931, %v3019
      %3021 = vmatmul.bf16.gmra.mxu0 %v1459
      %v3022 = vpop.f32.mrf.mxu0
      %v3023 = vadd.f32 %v2934, %v3022
      %v3024 = vpop.f32.mrf.mxu0
      %v3025 = vadd.f32 %v2936, %v3024
      %3026 = vmatmul.bf16.gmra.mxu0 %v1460
      %v3027 = vpop.f32.mrf.mxu0
      %v3028 = vadd.f32 %v2939, %v3027
      %v3029 = vpop.f32.mrf.mxu0
      %v3030 = vadd.f32 %v2941, %v3029
      %3031 = vmatmul.bf16.gmra.mxu0 %v1461
      %v3032 = vpop.f32.mrf.mxu0
      %v3033 = vadd.f32 %v2944, %v3032
      %v3034 = vpop.f32.mrf.mxu0
      %v3035 = vadd.f32 %v2946, %v3034
      %3036 = vmatmul.bf16.gmra.mxu0 %v1462
      %v3037 = vpop.f32.mrf.mxu0
      %v3038 = vadd.f32 %v2949, %v3037
      %v3039 = vpop.f32.mrf.mxu0
      %v3040 = vadd.f32 %v2951, %v3039
      %3041 = vmatmul.bf16.gmra.mxu0 %v1463
      %v3042 = vpop.f32.mrf.mxu0
      %v3043 = vadd.f32 %v2954, %v3042
      %v3044 = vpop.f32.mrf.mxu0
      %v3045 = vadd.f32 %v2956, %v3044
      %3046 = vdwg.mxu0
      %3047 = vmatpush.bf16.msra.mxu0 %v2343
      %3048 = vmatpush.bf16.msra.mxu0 %v2342
      %3049 = vmatpush.bf16.msra.mxu0 %v2341
      %3050 = vmatpush.bf16.msra.mxu0 %v2340
      %3051 = vmatpush.bf16.msra.mxu0 %v2339
      %3052 = vmatpush.bf16.msra.mxu0 %v2338
      %3053 = vmatpush.bf16.msra.mxu0 %v2337
      %3054 = vmatpush.bf16.msra.mxu0 %v2336
      %3055 = vmatmul.bf16.gmra.mxu0 %v1539
      %v3056 = vpop.f32.mrf.mxu0
      %v3057 = vadd.f32 %v2968, %v3056
      %v3058 = vpop.f32.mrf.mxu0
      %v3059 = vadd.f32 %v2970, %v3058
      %3060 = vmatmul.bf16.gmra.mxu0 %v1551
      %v3061 = vpop.f32.mrf.mxu0
      %v3062 = vadd.f32 %v2973, %v3061
      %v3063 = vpop.f32.mrf.mxu0
      %v3064 = vadd.f32 %v2975, %v3063
      %3065 = vmatmul.bf16.gmra.mxu0 %v1563
      %v3066 = vpop.f32.mrf.mxu0
      %v3067 = vadd.f32 %v2978, %v3066
      %v3068 = vpop.f32.mrf.mxu0
      %v3069 = vadd.f32 %v2980, %v3068
      %3070 = vmatmul.bf16.gmra.mxu0 %v1575
      %v3071 = vpop.f32.mrf.mxu0
      %v3072 = vadd.f32 %v2983, %v3071
      %v3073 = vpop.f32.mrf.mxu0
      %v3074 = vadd.f32 %v2985, %v3073
      %3075 = vmatmul.bf16.gmra.mxu0 %v1587
      %v3076 = vpop.f32.mrf.mxu0
      %v3077 = vadd.f32 %v2988, %v3076
      %v3078 = vpop.f32.mrf.mxu0
      %v3079 = vadd.f32 %v2990, %v3078
      %3080 = vmatmul.bf16.gmra.mxu0 %v1599
      %v3081 = vpop.f32.mrf.mxu0
      %v3082 = vadd.f32 %v2993, %v3081
      %v3083 = vpop.f32.mrf.mxu0
      %v3084 = vadd.f32 %v2995, %v3083
      %3085 = vmatmul.bf16.gmra.mxu0 %v1611
      %v3086 = vpop.f32.mrf.mxu0
      %v3087 = vadd.f32 %v2998, %v3086
      %v3088 = vpop.f32.mrf.mxu0
      %v3089 = vadd.f32 %v3000, %v3088
      %3090 = vmatmul.bf16.gmra.mxu0 %v1623
      %v3091 = vpop.f32.mrf.mxu0
      %v3092 = vadd.f32 %v3003, %v3091
      %v3093 = vpop.f32.mrf.mxu0
      %v3094 = vadd.f32 %v3005, %v3093
      %3095 = vmatmul.bf16.gmra.mxu0 %v1635
      %v3096 = vpop.f32.mrf.mxu0
      %v3097 = vadd.f32 %v3008, %v3096
      %v3098 = vpop.f32.mrf.mxu0
      %v3099 = vadd.f32 %v3010, %v3098
      %3100 = vmatmul.bf16.gmra.mxu0 %v1647
      %v3101 = vpop.f32.mrf.mxu0
      %v3102 = vadd.f32 %v3013, %v3101
      %v3103 = vpop.f32.mrf.mxu0
      %v3104 = vadd.f32 %v3015, %v3103
      %3105 = vmatmul.bf16.gmra.mxu0 %v1659
      %v3106 = vpop.f32.mrf.mxu0
      %v3107 = vadd.f32 %v3018, %v3106
      %v3108 = vpop.f32.mrf.mxu0
      %v3109 = vadd.f32 %v3020, %v3108
      %3110 = vmatmul.bf16.gmra.mxu0 %v1671
      %v3111 = vpop.f32.mrf.mxu0
      %v3112 = vadd.f32 %v3023, %v3111
      %v3113 = vpop.f32.mrf.mxu0
      %v3114 = vadd.f32 %v3025, %v3113
      %3115 = vmatmul.bf16.gmra.mxu0 %v1683
      %v3116 = vpop.f32.mrf.mxu0
      %v3117 = vadd.f32 %v3028, %v3116
      %v3118 = vpop.f32.mrf.mxu0
      %v3119 = vadd.f32 %v3030, %v3118
      %3120 = vmatmul.bf16.gmra.mxu0 %v1695
      %v3121 = vpop.f32.mrf.mxu0
      %v3122 = vadd.f32 %v3033, %v3121
      %v3123 = vpop.f32.mrf.mxu0
      %v3124 = vadd.f32 %v3035, %v3123
      %3125 = vmatmul.bf16.gmra.mxu0 %v1707
      %v3126 = vpop.f32.mrf.mxu0
      %v3127 = vadd.f32 %v3038, %v3126
      %v3128 = vpop.f32.mrf.mxu0
      %v3129 = vadd.f32 %v3040, %v3128
      %3130 = vmatmul.bf16.gmra.mxu0 %v1719
      %v3131 = vpop.f32.mrf.mxu0
      %v3132 = vadd.f32 %v3043, %v3131
      %v3133 = vpop.f32.mrf.mxu0
      %v3134 = vadd.f32 %v3045, %v3133
      %3135 = vdwg.mxu0
      %3136 = vmatpush.bf16.msra.mxu0 %v2351
      %3137 = vmatpush.bf16.msra.mxu0 %v2350
      %3138 = vmatpush.bf16.msra.mxu0 %v2349
      %3139 = vmatpush.bf16.msra.mxu0 %v2348
      %3140 = vmatpush.bf16.msra.mxu0 %v2347
      %3141 = vmatpush.bf16.msra.mxu0 %v2346
      %3142 = vmatpush.bf16.msra.mxu0 %v2345
      %3143 = vmatpush.bf16.msra.mxu0 %v2344
      %3144 = vmatmul.bf16.gmra.mxu0 %v1786
      %v3145 = vpop.f32.mrf.mxu0
      %v3146 = vadd.f32 %v3057, %v3145
      %v3147 = vpop.f32.mrf.mxu0
      %v3148 = vadd.f32 %v3059, %v3147
      %3149 = vmatmul.bf16.gmra.mxu0 %v1789
      %v3150 = vpop.f32.mrf.mxu0
      %v3151 = vadd.f32 %v3062, %v3150
      %v3152 = vpop.f32.mrf.mxu0
      %v3153 = vadd.f32 %v3064, %v3152
      %3154 = vmatmul.bf16.gmra.mxu0 %v1792
      %v3155 = vpop.f32.mrf.mxu0
      %v3156 = vadd.f32 %v3067, %v3155
      %v3157 = vpop.f32.mrf.mxu0
      %v3158 = vadd.f32 %v3069, %v3157
      %3159 = vmatmul.bf16.gmra.mxu0 %v1795
      %v3160 = vpop.f32.mrf.mxu0
      %v3161 = vadd.f32 %v3072, %v3160
      %v3162 = vpop.f32.mrf.mxu0
      %v3163 = vadd.f32 %v3074, %v3162
      %3164 = vmatmul.bf16.gmra.mxu0 %v1798
      %v3165 = vpop.f32.mrf.mxu0
      %v3166 = vadd.f32 %v3077, %v3165
      %v3167 = vpop.f32.mrf.mxu0
      %v3168 = vadd.f32 %v3079, %v3167
      %3169 = vmatmul.bf16.gmra.mxu0 %v1801
      %v3170 = vpop.f32.mrf.mxu0
      %v3171 = vadd.f32 %v3082, %v3170
      %v3172 = vpop.f32.mrf.mxu0
      %v3173 = vadd.f32 %v3084, %v3172
      %3174 = vmatmul.bf16.gmra.mxu0 %v1804
      %v3175 = vpop.f32.mrf.mxu0
      %v3176 = vadd.f32 %v3087, %v3175
      %v3177 = vpop.f32.mrf.mxu0
      %v3178 = vadd.f32 %v3089, %v3177
      %3179 = vmatmul.bf16.gmra.mxu0 %v1807
      %v3180 = vpop.f32.mrf.mxu0
      %v3181 = vadd.f32 %v3092, %v3180
      %v3182 = vpop.f32.mrf.mxu0
      %v3183 = vadd.f32 %v3094, %v3182
      %3184 = vmatmul.bf16.gmra.mxu0 %v1810
      %v3185 = vpop.f32.mrf.mxu0
      %v3186 = vadd.f32 %v3097, %v3185
      %v3187 = vpop.f32.mrf.mxu0
      %v3188 = vadd.f32 %v3099, %v3187
      %3189 = vmatmul.bf16.gmra.mxu0 %v1813
      %v3190 = vpop.f32.mrf.mxu0
      %v3191 = vadd.f32 %v3102, %v3190
      %v3192 = vpop.f32.mrf.mxu0
      %v3193 = vadd.f32 %v3104, %v3192
      %3194 = vmatmul.bf16.gmra.mxu0 %v1816
      %v3195 = vpop.f32.mrf.mxu0
      %v3196 = vadd.f32 %v3107, %v3195
      %v3197 = vpop.f32.mrf.mxu0
      %v3198 = vadd.f32 %v3109, %v3197
      %3199 = vmatmul.bf16.gmra.mxu0 %v1819
      %v3200 = vpop.f32.mrf.mxu0
      %v3201 = vadd.f32 %v3112, %v3200
      %v3202 = vpop.f32.mrf.mxu0
      %v3203 = vadd.f32 %v3114, %v3202
      %3204 = vmatmul.bf16.gmra.mxu0 %v1822
      %v3205 = vpop.f32.mrf.mxu0
      %v3206 = vadd.f32 %v3117, %v3205
      %v3207 = vpop.f32.mrf.mxu0
      %v3208 = vadd.f32 %v3119, %v3207
      %3209 = vmatmul.bf16.gmra.mxu0 %v1825
      %v3210 = vpop.f32.mrf.mxu0
      %v3211 = vadd.f32 %v3122, %v3210
      %v3212 = vpop.f32.mrf.mxu0
      %v3213 = vadd.f32 %v3124, %v3212
      %3214 = vmatmul.bf16.gmra.mxu0 %v1828
      %v3215 = vpop.f32.mrf.mxu0
      %v3216 = vadd.f32 %v3127, %v3215
      %v3217 = vpop.f32.mrf.mxu0
      %v3218 = vadd.f32 %v3129, %v3217
      %3219 = vmatmul.bf16.gmra.mxu0 %v1831
      %v3220 = vpop.f32.mrf.mxu0
      %v3221 = vadd.f32 %v3132, %v3220
      %v3222 = vpop.f32.mrf.mxu0
      %v3223 = vadd.f32 %v3134, %v3222
      %3224 = vdwg.mxu0
      %v3225 = vpack.c.bf16 %v3146, %v3146
      %v3226 = vpack.c.bf16 %v3148, %v3148
      %v3227 = vpack.c.bf16 %v3151, %v3151
      %v3228 = vpack.c.bf16 %v3153, %v3153
      %v3229 = vpack.c.bf16 %v3156, %v3156
      %v3230 = vpack.c.bf16 %v3158, %v3158
      %v3231 = vpack.c.bf16 %v3161, %v3161
      %v3232 = vpack.c.bf16 %v3163, %v3163
      %v3233 = vpack.c.bf16 %v3166, %v3166
      %v3234 = vpack.c.bf16 %v3168, %v3168
      %v3235 = vpack.c.bf16 %v3171, %v3171
      %v3236 = vpack.c.bf16 %v3173, %v3173
      %v3237 = vpack.c.bf16 %v3176, %v3176
      %v3238 = vpack.c.bf16 %v3178, %v3178
      %v3239 = vpack.c.bf16 %v3181, %v3181
      %v3240 = vpack.c.bf16 %v3183, %v3183
      %v3241 = vpack.c.bf16 %v3186, %v3186
      %v3242 = vpack.c.bf16 %v3188, %v3188
      %v3243 = vpack.c.bf16 %v3191, %v3191
      %v3244 = vpack.c.bf16 %v3193, %v3193
      %v3245 = vpack.c.bf16 %v3196, %v3196
      %v3246 = vpack.c.bf16 %v3198, %v3198
      %v3247 = vpack.c.bf16 %v3201, %v3201
      %v3248 = vpack.c.bf16 %v3203, %v3203
      %v3249 = vpack.c.bf16 %v3206, %v3206
      %v3250 = vpack.c.bf16 %v3208, %v3208
      %v3251 = vpack.c.bf16 %v3211, %v3211
      %v3252 = vpack.c.bf16 %v3213, %v3213
      %v3253 = vpack.c.bf16 %v3216, %v3216
      %v3254 = vpack.c.bf16 %v3218, %v3218
      %v3255 = vpack.c.bf16 %v3221, %v3221
      %v3256 = vpack.c.bf16 %v3223, %v3223
      %3257 = vst [vmem:[%s238] sm:$0xf] %v3225
      %3258 = vst [vmem:[%s238 + $0x4] sm:$0xf] %v3226
      %3259 = vst [vmem:[%s238 + $0x8] sm:$0xf] %v3227
      %3260 = vst [vmem:[%s238 + $0xc] sm:$0xf] %v3228
      %3261 = vst [vmem:[%s238 + $0x10] sm:$0xf] %v3229
      %3262 = vst [vmem:[%s238 + $0x14] sm:$0xf] %v3230
      %3263 = vst [vmem:[%s238 + $0x18] sm:$0xf] %v3231
      %3264 = vst [vmem:[%s238 + $0x1c] sm:$0xf] %v3232
      %3265 = vst [vmem:[%s238 + $0x20] sm:$0xf] %v3233
      %3266 = vst [vmem:[%s238 + $0x24] sm:$0xf] %v3234
      %3267 = vst [vmem:[%s238 + $0x28] sm:$0xf] %v3235
      %3268 = vst [vmem:[%s238 + $0x2c] sm:$0xf] %v3236
      %3269 = vst [vmem:[%s238 + $0x30] sm:$0xf] %v3237
      %3270 = vst [vmem:[%s238 + $0x34] sm:$0xf] %v3238
      %3271 = vst [vmem:[%s238 + $0x38] sm:$0xf] %v3239
      %3272 = vst [vmem:[%s238 + $0x3c] sm:$0xf] %v3240
      %3273 = vst [vmem:[%s238 + $0x40] sm:$0xf] %v3241
      %3274 = vst [vmem:[%s238 + $0x44] sm:$0xf] %v3242
      %3275 = vst [vmem:[%s238 + $0x48] sm:$0xf] %v3243
      %3276 = vst [vmem:[%s238 + $0x4c] sm:$0xf] %v3244
      %3277 = vst [vmem:[%s238 + $0x50] sm:$0xf] %v3245
      %3278 = vst [vmem:[%s238 + $0x54] sm:$0xf] %v3246
      %3279 = vst [vmem:[%s238 + $0x58] sm:$0xf] %v3247
      %3280 = vst [vmem:[%s238 + $0x5c] sm:$0xf] %v3248
      %3281 = vst [vmem:[%s238 + $0x60] sm:$0xf] %v3249
      %3282 = vst [vmem:[%s238 + $0x64] sm:$0xf] %v3250
      %3283 = vst [vmem:[%s238 + $0x68] sm:$0xf] %v3251
      %3284 = vst [vmem:[%s238 + $0x6c] sm:$0xf] %v3252
      %3285 = vst [vmem:[%s238 + $0x70] sm:$0xf] %v3253
      %3286 = vst [vmem:[%s238 + $0x74] sm:$0xf] %v3254
      %3287 = vst [vmem:[%s238 + $0x78] sm:$0xf] %v3255
      %3288 = vst [vmem:[%s238 + $0x7c] sm:$0xf] %v3256
      %v3289 = vadd.f32 %v3146, %v3148
      %v3290 = vadd.f32 %v3289, %v3151
      %v3291 = vadd.f32 %v3290, %v3153
      %v3292 = vadd.f32 %v3291, %v3156
      %v3293 = vadd.f32 %v3292, %v3158
      %v3294 = vadd.f32 %v3293, %v3161
      %v3295 = vadd.f32 %v3294, %v3163
      %v3296 = vadd.f32 %v3295, %v3166
      %v3297 = vadd.f32 %v3296, %v3168
      %v3298 = vadd.f32 %v3297, %v3171
      %v3299 = vadd.f32 %v3298, %v3173
      %v3300 = vadd.f32 %v3299, %v3176
      %v3301 = vadd.f32 %v3300, %v3178
      %v3302 = vadd.f32 %v3301, %v3181
      %v3303 = vadd.f32 %v3302, %v3183
      %v3304 = vadd.f32 %v3303, %v3186
      %v3305 = vadd.f32 %v3304, %v3188
      %v3306 = vadd.f32 %v3305, %v3191
      %v3307 = vadd.f32 %v3306, %v3193
      %v3308 = vadd.f32 %v3307, %v3196
      %v3309 = vadd.f32 %v3308, %v3198
      %v3310 = vadd.f32 %v3309, %v3201
      %v3311 = vadd.f32 %v3310, %v3203
      %v3312 = vadd.f32 %v3311, %v3206
      %v3313 = vadd.f32 %v3312, %v3208
      %v3314 = vadd.f32 %v3313, %v3211
      %v3315 = vadd.f32 %v3314, %v3213
      %v3316 = vadd.f32 %v3315, %v3216
      %v3317 = vadd.f32 %v3316, %v3218
      %v3318 = vadd.f32 %v3317, %v3221
      %v3319 = vadd.f32 %v3318, %v3223
      %v3320 = vrot.slane %v3319, 4
      %v3321 = vadd.f32 %v3319, %v3320
      %v3322 = vrot.slane %v3321, 2
      %v3323 = vadd.f32 %v3321, %v3322
      %v3324 = vrot.slane %v3323, 1
      %v3325 = vadd.f32 %v3323, %v3324
      %3326 = vst [vmem:[%s243] sm:$0x1] %v3325
      %v3327 = vmul.f32 %v3146, %v3146
      %v3328 = vmul.f32 %v3148, %v3148
      %v3329 = vmul.f32 %v3151, %v3151
      %v3330 = vmul.f32 %v3153, %v3153
      %v3331 = vmul.f32 %v3156, %v3156
      %v3332 = vmul.f32 %v3158, %v3158
      %v3333 = vmul.f32 %v3161, %v3161
      %v3334 = vmul.f32 %v3163, %v3163
      %v3335 = vmul.f32 %v3166, %v3166
      %v3336 = vmul.f32 %v3168, %v3168
      %v3337 = vmul.f32 %v3171, %v3171
      %v3338 = vmul.f32 %v3173, %v3173
      %v3339 = vmul.f32 %v3176, %v3176
      %v3340 = vmul.f32 %v3178, %v3178
      %v3341 = vmul.f32 %v3181, %v3181
      %v3342 = vmul.f32 %v3183, %v3183
      %v3343 = vmul.f32 %v3186, %v3186
      %v3344 = vmul.f32 %v3188, %v3188
      %v3345 = vmul.f32 %v3191, %v3191
      %v3346 = vmul.f32 %v3193, %v3193
      %v3347 = vmul.f32 %v3196, %v3196
      %v3348 = vmul.f32 %v3198, %v3198
      %v3349 = vmul.f32 %v3201, %v3201
      %v3350 = vmul.f32 %v3203, %v3203
      %v3351 = vmul.f32 %v3206, %v3206
      %v3352 = vmul.f32 %v3208, %v3208
      %v3353 = vmul.f32 %v3211, %v3211
      %v3354 = vmul.f32 %v3213, %v3213
      %v3355 = vmul.f32 %v3216, %v3216
      %v3356 = vmul.f32 %v3218, %v3218
      %v3357 = vmul.f32 %v3221, %v3221
      %v3358 = vmul.f32 %v3223, %v3223
      %v3359 = vadd.f32 %v3327, %v3328
      %v3360 = vadd.f32 %v3359, %v3329
      %v3361 = vadd.f32 %v3360, %v3330
      %v3362 = vadd.f32 %v3361, %v3331
      %v3363 = vadd.f32 %v3362, %v3332
      %v3364 = vadd.f32 %v3363, %v3333
      %v3365 = vadd.f32 %v3364, %v3334
      %v3366 = vadd.f32 %v3365, %v3335
      %v3367 = vadd.f32 %v3366, %v3336
      %v3368 = vadd.f32 %v3367, %v3337
      %v3369 = vadd.f32 %v3368, %v3338
      %v3370 = vadd.f32 %v3369, %v3339
      %v3371 = vadd.f32 %v3370, %v3340
      %v3372 = vadd.f32 %v3371, %v3341
      %v3373 = vadd.f32 %v3372, %v3342
      %v3374 = vadd.f32 %v3373, %v3343
      %v3375 = vadd.f32 %v3374, %v3344
      %v3376 = vadd.f32 %v3375, %v3345
      %v3377 = vadd.f32 %v3376, %v3346
      %v3378 = vadd.f32 %v3377, %v3347
      %v3379 = vadd.f32 %v3378, %v3348
      %v3380 = vadd.f32 %v3379, %v3349
      %v3381 = vadd.f32 %v3380, %v3350
      %v3382 = vadd.f32 %v3381, %v3351
      %v3383 = vadd.f32 %v3382, %v3352
      %v3384 = vadd.f32 %v3383, %v3353
      %v3385 = vadd.f32 %v3384, %v3354
      %v3386 = vadd.f32 %v3385, %v3355
      %v3387 = vadd.f32 %v3386, %v3356
      %v3388 = vadd.f32 %v3387, %v3357
      %v3389 = vadd.f32 %v3388, %v3358
      %v3390 = vrot.slane %v3389, 4
      %v3391 = vadd.f32 %v3389, %v3390
      %v3392 = vrot.slane %v3391, 2
      %v3393 = vadd.f32 %v3391, %v3392
      %v3394 = vrot.slane %v3393, 1
      %v3395 = vadd.f32 %v3393, %v3394
      %3396 = vst [vmem:[%s248] sm:$0x1] %v3395
      %s3397 = smul.u32 16, %s21
      %p3398 = scmp.lt.s32.totalorder %s20, 1
      %s3399 = scalar_select %p3398, %s20, 1
      %p3400 = scmp.lt.s32.totalorder %s3397, 15
      %s3401 = scalar_select %p3400, %s3397, 15
      %s3402 = smul.addr %s3401, 2
      %s3403 = smul.addr %s3399, 32
      %s3404 = sadd.s32 %s3402, %s3403
      %s3405 = smul.addr %s3404, 4
      %s3406 = scalar_lea.vmem %s2, %s3405
      %s3407 = sadd.s32 %s20, %s21
      %p3408 = scmp.lt.s32.totalorder %s3407, 1
      %s3409 = scalar_select %p3408, %s3407, 1
      %s3410 = scalar_lea.vmem %s3, %s3409
      %s3411 = sadd.s32 %s20, %s21
      %p3412 = scmp.lt.s32.totalorder %s3411, 1
      %s3413 = scalar_select %p3412, %s3411, 1
      %s3414 = scalar_lea.vmem %s4, %s3413
      // Predicated region
      $region29: #{basic_block_forward.4} parent=27 // pred_check
        %p3415 = pneg %p95
      $region30: #{basic_block_forward.4} parent=27 // pred_check_branch
        %3417 = sbr.rel (%p3415) target = $region32
      $region31: #{basic_block_forward.4} parent=27 // pred_region
        %s3418 = smul.u32 16, %s21
      $region32: #{basic_block_forward.4} parent=27 // pred_fallthru
        _
      // Predicated region
      $region33: #{basic_block_forward.4} parent=27 // pred_check
        %p3419 = pneg %p123
      $region34: #{basic_block_forward.4} parent=27 // pred_check_branch
        %3421 = sbr.rel (%p3419) target = $region36
      $region35: #{basic_block_forward.4} parent=27 // pred_region
        %s3422 = sadd.s32 %s20, %s21
      $region36: #{basic_block_forward.4} parent=27 // pred_fallthru
        _
      // Predicated region
      $region37: #{basic_block_forward.4} parent=27 // pred_check
        %p3423 = pneg %p151
      $region38: #{basic_block_forward.4} parent=27 // pred_check_branch
        %3425 = sbr.rel (%p3423) target = $region40
      $region39: #{basic_block_forward.4} parent=27 // pred_region
        %s3426 = sadd.s32 %s20, %s21
      $region40: #{basic_block_forward.4} parent=27 // pred_fallthru
        _
    $region28: #{basic_block_forward.4} parent=5 // pred_fallthru
      _
    %p3427 = scmp.le.s32.totalorder 2, %s11
    // Predicated region
    $region41: #{basic_block_forward.4} parent=5 // pred_check
      %p3428 = pneg %p3427
    $region42: #{basic_block_forward.4} parent=5 // pred_check_branch
      %3430 = sbr.rel (%p3428) target = $region44
    $region43: #{basic_block_forward.4} parent=5 // pred_region
      %s3431 = ssub.s32 %s11, 2
      // Predicated region
      $region45: #{basic_block_forward.4} parent=43 // pred_check
        %p3432 = pneg %p101
      $region46: #{basic_block_forward.4} parent=43 // pred_check_branch
        %3434 = sbr.rel (%p3432) target = $region48
      $region47: #{basic_block_forward.4} parent=43 // pred_region
        %s3435 = smul.u32 16, %s23
        %p3436 = scmp.lt.s32.totalorder %s22, 1
        %s3437 = scalar_select %p3436, %s22, 1
        %p3438 = scmp.lt.s32.totalorder %s3435, 15
        %s3439 = scalar_select %p3438, %s3435, 15
        %s3440 = smul.addr %s3439, 2
        %s3441 = smul.addr %s3437, 32
        %s3442 = sadd.s32 %s3440, %s3441
        %s3443 = smul.addr %s3442, 4
        %s3444 = scalar_lea.vmem %s2, %s3443
      $region48: #{basic_block_forward.4} parent=43 // pred_fallthru
        _
      // Predicated region
      $region49: #{basic_block_forward.4} parent=43 // pred_check
        %p3445 = pneg %p129
      $region50: #{basic_block_forward.4} parent=43 // pred_check_branch
        %3447 = sbr.rel (%p3445) target = $region52
      $region51: #{basic_block_forward.4} parent=43 // pred_region
        %s3448 = sadd.s32 %s22, %s23
        %p3449 = scmp.lt.s32.totalorder %s3448, 1
        %s3450 = scalar_select %p3449, %s3448, 1
        %s3451 = scalar_lea.vmem %s3, %s3450
      $region52: #{basic_block_forward.4} parent=43 // pred_fallthru
        _
      // Predicated region
      $region53: #{basic_block_forward.4} parent=43 // pred_check
        %p3452 = pneg %p157
      $region54: #{basic_block_forward.4} parent=43 // pred_check_branch
        %3454 = sbr.rel (%p3452) target = $region56
      $region55: #{basic_block_forward.4} parent=43 // pred_region
        %s3455 = sadd.s32 %s22, %s23
        %p3456 = scmp.lt.s32.totalorder %s3455, 1
        %s3457 = scalar_select %p3456, %s3455, 1
        %s3458 = scalar_lea.vmem %s4, %s3457
      $region56: #{basic_block_forward.4} parent=43 // pred_fallthru
        _
    $region44: #{basic_block_forward.4} parent=5 // pred_fallthru
      _
  $region6: #{basic_block_forward.4} parent=0 // loop_footer
    %s15 = sadd.s32 1, %s11
  $region7: #{basic_block_forward.4} parent=0 // loop_footer_branch
    %10 = sbr.rel target = $region3
  $region8: #{basic_block_forward.4} parent=0 // loop_exit
    _

</llo_original>
